<compile_context>
chip_gen: v7x
topology: tpu7x:2x2x1
jax: 0.10.0
libtpu: 0.0.40
codegen_flags: <defaults>
</compile_context>

<pallas_src>
import functools

import jax
import jax.numpy as jnp
from jax.experimental import pallas as pl
from jax.experimental.pallas import tpu as pltpu

D_MODEL = 32
NHEAD = 4
NUM_LAYERS = 2
DIM_FF = 2048          # nn.TransformerEncoderLayer default dim_feedforward
EPS = 1e-5
SEQ = 8
BATCH = 2
FF_CHUNK = 512         # FFN hidden-dim chunk (lane-aligned, 4 chunks of 2048)

# Row layout of the packed "small" parameter slab (per layer, shape (8, 128)).
ROW_BQKV, ROW_BO, ROW_B2, ROW_G1, ROW_BE1, ROW_G2, ROW_BE2 = range(7)


def _layer_norm(x, gamma, beta):
    mu = jnp.mean(x, axis=-1, keepdims=True)
    var = jnp.mean(jnp.square(x - mu), axis=-1, keepdims=True)
    return (x - mu) * jax.lax.rsqrt(var + EPS) * gamma + beta


def encoder_layer_kernel(x_ref, wqkv_ref, wo_ref, w1_ref, b1_ref, w2_ref,
                         small_ref, y_ref, x_sc, *, nhead, batch, ff_chunk):
    """One encoder layer per grid step; activation carried in VMEM scratch.

    x_ref : (B*S, D) f32, flattened (S, B, D) -> token t has batch index t % B.
    Weight refs carry a leading (squeezable) layer-block dim of size 1.
    """
    l = pl.program_id(0)

    @pl.when(l == 0)
    def _():
        x_sc[...] = x_ref[...]

    x = x_sc[...]                                   # (BS, D) f32
    bs, d = x.shape
    dh = d // nhead
    scale = 1.0 / float(dh) ** 0.5

    # ---- unpack the small f32 parameter slab (one DMA per layer) ----
    small = small_ref[0]                            # (8, 128) f32
    bqkv = small[ROW_BQKV:ROW_BQKV + 1, :3 * d]     # (1, 3D)
    bo   = small[ROW_BO:ROW_BO + 1, :d]             # (1, D)
    b2   = small[ROW_B2:ROW_B2 + 1, :d]
    g1   = small[ROW_G1:ROW_G1 + 1, :d]
    be1  = small[ROW_BE1:ROW_BE1 + 1, :d]
    g2   = small[ROW_G2:ROW_G2 + 1, :d]
    be2  = small[ROW_BE2:ROW_BE2 + 1, :d]

    # ---- packed QKV projection for all B*S tokens at once ----
    qkv = jnp.dot(x.astype(jnp.bfloat16), wqkv_ref[0],
                  preferred_element_type=jnp.float32) + bqkv       # (BS, 3D) f32
    q = qkv[:, :d]
    k = qkv[:, d:2 * d]
    v = qkv[:, 2 * d:]

    # ---- constant same-batch mask on the interleaved (S*B) token layout ----
    # token row t belongs to batch t % batch; cross-batch scores get -1e9
    # (large negative finite -> exp underflows to exactly 0, no NaNs).
    row = jax.lax.broadcasted_iota(jnp.int32, (bs, bs), 0)
    col = jax.lax.broadcasted_iota(jnp.int32, (bs, bs), 1)
    mask = jnp.where((row % batch) == (col % batch), 0.0, -1e9).astype(jnp.float32)

    # ---- multi-head self attention, all batches at once per head ----
    # Head concat is folded into the out-projection: sum_h head_out_h @ Wo[h].
    attn = None
    for h in range(nhead):                          # static unroll over heads
        c0 = h * dh
        qh = q[:, c0:c0 + dh].astype(jnp.bfloat16)  # (BS, dh)
        kh = k[:, c0:c0 + dh].astype(jnp.bfloat16)
        vh = v[:, c0:c0 + dh].astype(jnp.bfloat16)
        s = jax.lax.dot_general(qh, kh, (((1,), (1,)), ((), ())),
                                preferred_element_type=jnp.float32)   # (BS, BS)
        s = s * scale + mask
        s = s - jnp.max(s, axis=-1, keepdims=True)
        p = jnp.exp(s)
        p = p * pl.reciprocal(jnp.sum(p, axis=-1, keepdims=True), approx=True)
        oh = jnp.dot(p.astype(jnp.bfloat16), vh,
                     preferred_element_type=jnp.float32)              # (BS, dh)
        contrib = jnp.dot(oh.astype(jnp.bfloat16), wo_ref[0, h],
                          preferred_element_type=jnp.float32)         # (BS, D)
        attn = contrib if attn is None else attn + contrib
    attn = attn + bo

    # ---- residual + LayerNorm1 (post-norm); f32 elementwise ----
    x1 = _layer_norm(x + attn, g1, be1)

    # ---- feed forward, chunked over the hidden dim ----
    x1b = x1.astype(jnp.bfloat16)
    ff = jnp.zeros_like(x1)                         # (BS, D) f32
    n_ff = w1_ref.shape[-1]
    for c in range(0, n_ff, ff_chunk):              # static unroll (4 chunks)
        h1 = jnp.dot(x1b, w1_ref[0, :, c:c + ff_chunk],
                     preferred_element_type=jnp.float32)
        h1 = jnp.maximum(h1 + b1_ref[0, :, c:c + ff_chunk], 0.0)      # (BS, chunk)
        ff = ff + jnp.dot(h1.astype(jnp.bfloat16), w2_ref[0, c:c + ff_chunk, :],
                          preferred_element_type=jnp.float32)
    ff = ff + b2

    # ---- residual + LayerNorm2; carry to next layer ----
    x2 = _layer_norm(x1 + ff, g2, be2)
    x_sc[...] = x2

    @pl.when(l == pl.num_programs(0) - 1)
    def _():
        y_ref[...] = x2


@jax.jit
def transformer_encoder_pallas(x_sbd, params):
    """x_sbd: (S, B, D) float32 (PyTorch batch_first=False). Returns (S, B, D)."""
    S, B, D = x_sbd.shape
    dh = D // NHEAD
    x2d = x_sbd.reshape(S * B, D)       # free reshape, no transpose / extra launch

    kernel = functools.partial(encoder_layer_kernel,
                               nhead=NHEAD, batch=B, ff_chunk=FF_CHUNK)

    y2d = pl.pallas_call(
        kernel,
        out_shape=jax.ShapeDtypeStruct((S * B, D), jnp.float32),
        grid_spec=pltpu.PrefetchScalarGridSpec(
            num_scalar_prefetch=0,
            grid=(NUM_LAYERS,),
            in_specs=[
                pl.BlockSpec((S * B, D), lambda l: (0, 0)),                    # x
                pl.BlockSpec((1, D, 3 * D), lambda l: (l, 0, 0)),              # wqkv
                pl.BlockSpec((1, NHEAD, dh, D), lambda l: (l, 0, 0, 0)),       # wo
                pl.BlockSpec((1, D, DIM_FF), lambda l: (l, 0, 0)),             # w1
                pl.BlockSpec((1, 1, DIM_FF), lambda l: (l, 0, 0)),             # b1
                pl.BlockSpec((1, DIM_FF, D), lambda l: (l, 0, 0)),             # w2
                pl.BlockSpec((1, 8, 128), lambda l: (l, 0, 0)),                # small
            ],
            out_specs=pl.BlockSpec((S * B, D), lambda l: (0, 0)),
            scratch_shapes=[pltpu.VMEM((S * B, D), jnp.float32)],
        ),
        compiler_params=pltpu.CompilerParams(
            dimension_semantics=("arbitrary",)),
    )(x2d, params["wqkv"], params["wo"], params["w1"], params["b1"],
      params["w2"], params["small"])

    return y2d.reshape(S, B, D)


# ----------------------------------------------------------------------------
# Deterministic parameter init (shapes follow nn.TransformerEncoderLayer).
# Weights stored pre-transposed (in_features, out_features); Wo per-head
# (L, H, dh, D).  Matmul weights are bf16; small f32 params are packed into a
# single (L, 8, 128) slab; b1 (1, 2048) stays separate (lane-dense).
# ----------------------------------------------------------------------------
def init_params(key):
    L, D, FF, H = NUM_LAYERS, D_MODEL, DIM_FF, NHEAD
    dh = D // H

    def rnd(k, shape, s=0.05):
        return jax.random.normal(k, shape, jnp.float32) * s

    wqkv, wo, w1, w2, b1, small = [], [], [], [], [], []
    for _ in range(L):
        key, *ks = jax.random.split(key, 10)
        wqkv.append(rnd(ks[0], (D, 3 * D)))
        wo.append(rnd(ks[1], (H, dh, D)))      # == (D, D) row-blocked per head
        w1.append(rnd(ks[2], (D, FF)))
        w2.append(rnd(ks[3], (FF, D)))
        b1.append(rnd(ks[4], (1, FF)))
        s_l = jnp.zeros((8, 128), jnp.float32)
        s_l = s_l.at[ROW_BQKV, :3 * D].set(rnd(ks[5], (3 * D,)))
        s_l = s_l.at[ROW_BO, :D].set(rnd(ks[6], (D,)))
        s_l = s_l.at[ROW_B2, :D].set(rnd(ks[7], (D,)))
        s_l = s_l.at[ROW_G1, :D].set(1.0 + rnd(ks[8], (D,), 0.1))
        s_l = s_l.at[ROW_BE1, :D].set(jnp.zeros((D,), jnp.float32))
        s_l = s_l.at[ROW_G2, :D].set(jnp.ones((D,), jnp.float32))
        s_l = s_l.at[ROW_BE2, :D].set(jnp.zeros((D,), jnp.float32))
        small.append(s_l)

    return {
        "wqkv": jnp.stack(wqkv).astype(jnp.bfloat16),   # (L, D, 3D)
        "wo": jnp.stack(wo).astype(jnp.bfloat16),       # (L, H, dh, D)
        "w1": jnp.stack(w1).astype(jnp.bfloat16),       # (L, D, FF)
        "w2": jnp.stack(w2).astype(jnp.bfloat16),       # (L, FF, D)
        "b1": jnp.stack(b1),                            # (L, 1, FF) f32
        "small": jnp.stack(small),                      # (L, 8, 128) f32
    }


# ----------------------------------------------------------------------------
# Pure-JAX reference (same math as nn.TransformerEncoderLayer, eval mode, with
# the same bf16 matmul operands / f32 accumulation) to validate the kernel.
# ----------------------------------------------------------------------------
def ref_layer(x_bsd, params, l):
    B, S, D = x_bsd.shape
    H, dh = NHEAD, D // NHEAD
    small = params["small"][l]
    wqkv = params["wqkv"][l]
    wo = params["wo"][l].reshape(D, D)
    w1, w2, b1 = params["w1"][l], params["w2"][l], params["b1"][l]
    bqkv = small[ROW_BQKV, :3 * D]
    bo, b2 = small[ROW_BO, :D], small[ROW_B2, :D]
    g1, be1 = small[ROW_G1, :D], small[ROW_BE1, :D]
    g2, be2 = small[ROW_G2, :D], small[ROW_BE2, :D]

    qkv = jnp.dot(x_bsd.astype(jnp.bfloat16), wqkv,
                  preferred_element_type=jnp.float32) + bqkv
    q, k, v = jnp.split(qkv, 3, axis=-1)
    q = q.reshape(B, S, H, dh).transpose(0, 2, 1, 3)
    k = k.reshape(B, S, H, dh).transpose(0, 2, 1, 3)
    v = v.reshape(B, S, H, dh).transpose(0, 2, 1, 3)
    s = jnp.einsum("bhqd,bhkd->bhqk", q.astype(jnp.bfloat16), k.astype(jnp.bfloat16),
                   preferred_element_type=jnp.float32) / jnp.sqrt(float(dh))
    p = jax.nn.softmax(s, axis=-1)
    o = jnp.einsum("bhqk,bhkd->bhqd", p.astype(jnp.bfloat16), v.astype(jnp.bfloat16),
                   preferred_element_type=jnp.float32)
    o = o.transpose(0, 2, 1, 3).reshape(B, S, D)
    attn = jnp.dot(o.astype(jnp.bfloat16), wo,
                   preferred_element_type=jnp.float32) + bo
    x1 = _layer_norm(x_bsd + attn, g1, be1)
    h1 = jnp.maximum(jnp.dot(x1.astype(jnp.bfloat16), w1,
                             preferred_element_type=jnp.float32) + b1, 0.0)
    ff = jnp.dot(h1.astype(jnp.bfloat16), w2,
                 preferred_element_type=jnp.float32) + b2
    return _layer_norm(x1 + ff, g2, be2)


def transformer_encoder_ref(x_sbd, params):
    x = jnp.transpose(x_sbd, (1, 0, 2))
    for l in range(NUM_LAYERS):
        x = ref_layer(x, params, l)
    return jnp.transpose(x, (1, 0, 2))


if __name__ == "__main__":
    key = jax.random.PRNGKey(0)
    key_x, key_p = jax.random.split(key)

    # PyTorch batch_first=False input: (seq, batch, d_model)
    x = jax.random.normal(key_x, (SEQ, BATCH, D_MODEL), jnp.float32)
    params = init_params(key_p)

    out = jax.block_until_ready(transformer_encoder_pallas(x, params))
    ref = jax.block_until_ready(transformer_encoder_ref(x, params))

    assert out.shape == (SEQ, BATCH, D_MODEL)
    # Tolerance accounts for the approximate EUP reciprocal in the kernel
    # softmax, bf16 matmul operands and accumulation-order differences;
    # structural errors would be O(1), far above this threshold.
    assert jnp.allclose(out, ref, atol=1e-2, rtol=1e-2), "mismatch vs JAX reference"

    print("KERNEL_OK")
</pallas_src>

<mosaic_0001>
module attributes {stable_mosaic.version = 11 : i64} {
  func.func @encoder_layer_kernel(%arg0: i32, %arg1: memref<16x32xf32, #tpu.memory_space<vmem>>, %arg2: memref<1x32x96xbf16, #tpu.memory_space<vmem>>, %arg3: memref<1x4x8x32xbf16, #tpu.memory_space<vmem>>, %arg4: memref<1x32x2048xbf16, #tpu.memory_space<vmem>>, %arg5: memref<1x1x2048xf32, #tpu.memory_space<vmem>>, %arg6: memref<1x2048x32xbf16, #tpu.memory_space<vmem>>, %arg7: memref<1x8x128xf32, #tpu.memory_space<vmem>>, %arg8: memref<16x32xf32, #tpu.memory_space<vmem>>, %arg9: memref<16x32xf32, #tpu.memory_space<vmem>>) attributes {dimension_semantics = [#tpu.dimension_semantics<arbitrary>], iteration_bounds = array<i64: 2>, scalar_prefetch = 0 : i64, scratch_operands = 1 : i64, tpu.core_type = #tpu.core_type<tc>, window_params = [{pipeline_mode = #tpu.pipeline_mode<synchronous>, transform_indices = @transform_0, window_bounds = array<i64: 16, 32>}, {transform_indices = @transform_1, window_bounds = array<i64: 1, 32, 96>}, {transform_indices = @transform_2, window_bounds = array<i64: 1, 4, 8, 32>}, {transform_indices = @transform_3, window_bounds = array<i64: 1, 32, 2048>}, {transform_indices = @transform_4, window_bounds = array<i64: 1, 1, 2048>}, {transform_indices = @transform_5, window_bounds = array<i64: 1, 2048, 32>}, {transform_indices = @transform_6, window_bounds = array<i64: 1, 8, 128>}, {pipeline_mode = #tpu.pipeline_mode<synchronous>, transform_indices = @transform_7, window_bounds = array<i64: 16, 32>}]} {
    %c0_i32 = arith.constant 0 : i32
    %0 = arith.cmpi eq, %arg0, %c0_i32 : i32
    %1 = arith.extui %0 : i1 to i32
    %c0_i32_0 = arith.constant 0 : i32
    %2 = arith.cmpi ne, %1, %c0_i32_0 : i32
    scf.if %2 {
      %c0_117 = arith.constant 0 : index
      %c0_118 = arith.constant 0 : index
      %279 = vector.load %arg1[%c0_117, %c0_118] : memref<16x32xf32, #tpu.memory_space<vmem>>, vector<16x32xf32>
      %c0_119 = arith.constant 0 : index
      %c0_120 = arith.constant 0 : index
      %280 = vector.load %arg9[%c0_119, %c0_120] : memref<16x32xf32, #tpu.memory_space<vmem>>, vector<16x32xf32>
      tpu.vector_store %arg9[%c0_119, %c0_120], %279 {strides = array<i32>} : memref<16x32xf32, #tpu.memory_space<vmem>>, vector<16x32xf32>,
    } else {
    }
    %c0 = arith.constant 0 : index
    %c0_1 = arith.constant 0 : index
    %3 = vector.load %arg9[%c0, %c0_1] : memref<16x32xf32, #tpu.memory_space<vmem>>, vector<16x32xf32>
    %c0_2 = arith.constant 0 : index
    %c0_3 = arith.constant 0 : index
    %c0_4 = arith.constant 0 : index
    %4 = vector.load %arg7[%c0_2, %c0_3, %c0_4] : memref<1x8x128xf32, #tpu.memory_space<vmem>>, vector<1x8x128xf32>
    %5 = vector.shape_cast %4 : vector<1x8x128xf32> to vector<8x128xf32>
    %6 = vector.extract_strided_slice %5 {offsets = [0, 0], sizes = [1, 96], strides = [1, 1]} : vector<8x128xf32> to vector<1x96xf32>
    %7 = vector.extract_strided_slice %5 {offsets = [1, 0], sizes = [1, 32], strides = [1, 1]} : vector<8x128xf32> to vector<1x32xf32>
    %8 = vector.extract_strided_slice %5 {offsets = [2, 0], sizes = [1, 32], strides = [1, 1]} : vector<8x128xf32> to vector<1x32xf32>
    %9 = vector.extract_strided_slice %5 {offsets = [3, 0], sizes = [1, 32], strides = [1, 1]} : vector<8x128xf32> to vector<1x32xf32>
    %10 = vector.extract_strided_slice %5 {offsets = [4, 0], sizes = [1, 32], strides = [1, 1]} : vector<8x128xf32> to vector<1x32xf32>
    %11 = vector.extract_strided_slice %5 {offsets = [5, 0], sizes = [1, 32], strides = [1, 1]} : vector<8x128xf32> to vector<1x32xf32>
    %12 = vector.extract_strided_slice %5 {offsets = [6, 0], sizes = [1, 32], strides = [1, 1]} : vector<8x128xf32> to vector<1x32xf32>
    %13 = arith.truncf %3 : vector<16x32xf32> to vector<16x32xbf16>
    %c0_5 = arith.constant 0 : index
    %c0_6 = arith.constant 0 : index
    %c0_7 = arith.constant 0 : index
    %14 = vector.load %arg2[%c0_5, %c0_6, %c0_7] : memref<1x32x96xbf16, #tpu.memory_space<vmem>>, vector<1x32x96xbf16>
    %15 = vector.shape_cast %14 : vector<1x32x96xbf16> to vector<32x96xbf16>
    %cst = arith.constant dense<0.000000e+00> : vector<16x96xf32>
    %16 = tpu.matmul %13, %15, %cst {dimension_numbers = #tpu.dot_dimension_numbers<[1], [0], [0], [1], [0, 0, 1, 1], [], []>} : vector<16x32xbf16>, vector<32x96xbf16>, vector<16x96xf32> -> vector<16x96xf32>
    %17 = vector.broadcast %6 : vector<1x96xf32> to vector<16x96xf32>
    %18 = arith.addf %16, %17 : vector<16x96xf32>
    %19 = vector.extract_strided_slice %18 {offsets = [0, 0], sizes = [16, 32], strides = [1, 1]} : vector<16x96xf32> to vector<16x32xf32>
    %20 = vector.extract_strided_slice %18 {offsets = [0, 32], sizes = [16, 32], strides = [1, 1]} : vector<16x96xf32> to vector<16x32xf32>
    %21 = vector.extract_strided_slice %18 {offsets = [0, 64], sizes = [16, 32], strides = [1, 1]} : vector<16x96xf32> to vector<16x32xf32>
    %22 = tpu.iota {dimensions = array<i32: 0>} : vector<16x16xi32>
    %23 = tpu.iota {dimensions = array<i32: 1>} : vector<16x16xi32>
    %c2_i32 = arith.constant 2 : i32
    %c0_i32_8 = arith.constant 0 : i32
    %24 = arith.cmpi eq, %c2_i32, %c0_i32_8 : i32
    %c1_i32 = arith.constant 1 : i32
    %25 = arith.select %24, %c1_i32, %c2_i32 : i32
    %26 = vector.broadcast %25 : i32 to vector<16x16xi32>
    %27 = arith.remsi %22, %26 : vector<16x16xi32>
    %c0_i32_9 = arith.constant 0 : i32
    %28 = vector.broadcast %c0_i32_9 : i32 to vector<16x16xi32>
    %29 = arith.cmpi ne, %27, %28 : vector<16x16xi32>
    %c0_i32_10 = arith.constant 0 : i32
    %30 = vector.broadcast %c0_i32_10 : i32 to vector<16x16xi32>
    %31 = arith.cmpi slt, %27, %30 : vector<16x16xi32>
    %c0_i32_11 = arith.constant 0 : i32
    %32 = arith.cmpi slt, %25, %c0_i32_11 : i32
    %33 = vector.broadcast %32 : i1 to vector<16x16xi1>
    %34 = vector.broadcast %33 : vector<16x16xi1> to vector<16x16xi1>
    %35 = arith.xori %31, %34 : vector<16x16xi1>
    %36 = arith.andi %35, %29 : vector<16x16xi1>
    %37 = vector.broadcast %25 : i32 to vector<16x16xi32>
    %38 = arith.addi %27, %37 : vector<16x16xi32>
    %39 = arith.select %36, %38, %27 : vector<16x16xi1>, vector<16x16xi32>
    %c2_i32_12 = arith.constant 2 : i32
    %c0_i32_13 = arith.constant 0 : i32
    %40 = arith.cmpi eq, %c2_i32_12, %c0_i32_13 : i32
    %c1_i32_14 = arith.constant 1 : i32
    %41 = arith.select %40, %c1_i32_14, %c2_i32_12 : i32
    %42 = vector.broadcast %41 : i32 to vector<16x16xi32>
    %43 = arith.remsi %23, %42 : vector<16x16xi32>
    %c0_i32_15 = arith.constant 0 : i32
    %44 = vector.broadcast %c0_i32_15 : i32 to vector<16x16xi32>
    %45 = arith.cmpi ne, %43, %44 : vector<16x16xi32>
    %c0_i32_16 = arith.constant 0 : i32
    %46 = vector.broadcast %c0_i32_16 : i32 to vector<16x16xi32>
    %47 = arith.cmpi slt, %43, %46 : vector<16x16xi32>
    %c0_i32_17 = arith.constant 0 : i32
    %48 = arith.cmpi slt, %41, %c0_i32_17 : i32
    %49 = vector.broadcast %48 : i1 to vector<16x16xi1>
    %50 = vector.broadcast %49 : vector<16x16xi1> to vector<16x16xi1>
    %51 = arith.xori %47, %50 : vector<16x16xi1>
    %52 = arith.andi %51, %45 : vector<16x16xi1>
    %53 = vector.broadcast %41 : i32 to vector<16x16xi32>
    %54 = arith.addi %43, %53 : vector<16x16xi32>
    %55 = arith.select %52, %54, %43 : vector<16x16xi1>, vector<16x16xi32>
    %56 = arith.cmpi eq, %39, %55 : vector<16x16xi32>
    %cst_18 = arith.constant 0.000000e+00 : f32
    %cst_19 = arith.constant -1.000000e+09 : f32
    %57 = vector.broadcast %cst_18 : f32 to vector<16x16xf32>
    %58 = vector.broadcast %cst_19 : f32 to vector<16x16xf32>
    %59 = arith.select %56, %57, %58 : vector<16x16xi1>, vector<16x16xf32>
    %60 = vector.extract_strided_slice %19 {offsets = [0, 0], sizes = [16, 8], strides = [1, 1]} : vector<16x32xf32> to vector<16x8xf32>
    %61 = arith.truncf %60 : vector<16x8xf32> to vector<16x8xbf16>
    %62 = vector.extract_strided_slice %20 {offsets = [0, 0], sizes = [16, 8], strides = [1, 1]} : vector<16x32xf32> to vector<16x8xf32>
    %63 = arith.truncf %62 : vector<16x8xf32> to vector<16x8xbf16>
    %64 = vector.extract_strided_slice %21 {offsets = [0, 0], sizes = [16, 8], strides = [1, 1]} : vector<16x32xf32> to vector<16x8xf32>
    %65 = arith.truncf %64 : vector<16x8xf32> to vector<16x8xbf16>
    %cst_20 = arith.constant dense<0.000000e+00> : vector<16x16xf32>
    %66 = tpu.matmul %61, %63, %cst_20 {dimension_numbers = #tpu.dot_dimension_numbers<[1], [1], [0], [0], [0, 0, 1, 0], [], []>} : vector<16x8xbf16>, vector<16x8xbf16>, vector<16x16xf32> -> vector<16x16xf32>
    %cst_21 = arith.constant 0.353553385 : f32
    %67 = vector.broadcast %cst_21 : f32 to vector<16x16xf32>
    %68 = arith.mulf %66, %67 : vector<16x16xf32>
    %69 = arith.addf %68, %59 : vector<16x16xf32>
    %cst_22 = arith.constant dense<0xFF800000> : vector<16xf32>
    %70 = vector.multi_reduction <maximumf>, %69, %cst_22 [1] : vector<16x16xf32> to vector<16xf32>
    %71 = vector.shape_cast %70 : vector<16xf32> to vector<16x1xf32>
    %72 = vector.broadcast %71 : vector<16x1xf32> to vector<16x16xf32>
    %73 = arith.subf %69, %72 : vector<16x16xf32>
    %74 = math.exp %73 : vector<16x16xf32>
    %cst_23 = arith.constant dense<0.000000e+00> : vector<16xf32>
    %75 = vector.multi_reduction <add>, %74, %cst_23 [1] : vector<16x16xf32> to vector<16xf32>
    %76 = vector.shape_cast %75 : vector<16xf32> to vector<16x1xf32>
    %77 = tpu.reciprocal %76 {approx = true} : vector<16x1xf32> -> vector<16x1xf32>
    %78 = vector.broadcast %77 : vector<16x1xf32> to vector<16x16xf32>
    %79 = arith.mulf %74, %78 : vector<16x16xf32>
    %80 = arith.truncf %79 : vector<16x16xf32> to vector<16x16xbf16>
    %cst_24 = arith.constant dense<0.000000e+00> : vector<16x8xf32>
    %81 = tpu.matmul %80, %65, %cst_24 {dimension_numbers = #tpu.dot_dimension_numbers<[1], [0], [0], [1], [0, 0, 1, 1], [], []>} : vector<16x16xbf16>, vector<16x8xbf16>, vector<16x8xf32> -> vector<16x8xf32>
    %82 = arith.truncf %81 : vector<16x8xf32> to vector<16x8xbf16>
    %c0_25 = arith.constant 0 : index
    %c0_26 = arith.constant 0 : index
    %c0_27 = arith.constant 0 : index
    %c0_28 = arith.constant 0 : index
    %83 = vector.load %arg3[%c0_25, %c0_26, %c0_27, %c0_28] : memref<1x4x8x32xbf16, #tpu.memory_space<vmem>>, vector<1x1x8x32xbf16>
    %84 = vector.shape_cast %83 : vector<1x1x8x32xbf16> to vector<8x32xbf16>
    %cst_29 = arith.constant dense<0.000000e+00> : vector<16x32xf32>
    %85 = tpu.matmul %82, %84, %cst_29 {dimension_numbers = #tpu.dot_dimension_numbers<[1], [0], [0], [1], [0, 0, 1, 1], [], []>} : vector<16x8xbf16>, vector<8x32xbf16>, vector<16x32xf32> -> vector<16x32xf32>
    %86 = vector.extract_strided_slice %19 {offsets = [0, 8], sizes = [16, 8], strides = [1, 1]} : vector<16x32xf32> to vector<16x8xf32>
    %87 = arith.truncf %86 : vector<16x8xf32> to vector<16x8xbf16>
    %88 = vector.extract_strided_slice %20 {offsets = [0, 8], sizes = [16, 8], strides = [1, 1]} : vector<16x32xf32> to vector<16x8xf32>
    %89 = arith.truncf %88 : vector<16x8xf32> to vector<16x8xbf16>
    %90 = vector.extract_strided_slice %21 {offsets = [0, 8], sizes = [16, 8], strides = [1, 1]} : vector<16x32xf32> to vector<16x8xf32>
    %91 = arith.truncf %90 : vector<16x8xf32> to vector<16x8xbf16>
    %cst_30 = arith.constant dense<0.000000e+00> : vector<16x16xf32>
    %92 = tpu.matmul %87, %89, %cst_30 {dimension_numbers = #tpu.dot_dimension_numbers<[1], [1], [0], [0], [0, 0, 1, 0], [], []>} : vector<16x8xbf16>, vector<16x8xbf16>, vector<16x16xf32> -> vector<16x16xf32>
    %cst_31 = arith.constant 0.353553385 : f32
    %93 = vector.broadcast %cst_31 : f32 to vector<16x16xf32>
    %94 = arith.mulf %92, %93 : vector<16x16xf32>
    %95 = arith.addf %94, %59 : vector<16x16xf32>
    %cst_32 = arith.constant dense<0xFF800000> : vector<16xf32>
    %96 = vector.multi_reduction <maximumf>, %95, %cst_32 [1] : vector<16x16xf32> to vector<16xf32>
    %97 = vector.shape_cast %96 : vector<16xf32> to vector<16x1xf32>
    %98 = vector.broadcast %97 : vector<16x1xf32> to vector<16x16xf32>
    %99 = arith.subf %95, %98 : vector<16x16xf32>
    %100 = math.exp %99 : vector<16x16xf32>
    %cst_33 = arith.constant dense<0.000000e+00> : vector<16xf32>
    %101 = vector.multi_reduction <add>, %100, %cst_33 [1] : vector<16x16xf32> to vector<16xf32>
    %102 = vector.shape_cast %101 : vector<16xf32> to vector<16x1xf32>
    %103 = tpu.reciprocal %102 {approx = true} : vector<16x1xf32> -> vector<16x1xf32>
    %104 = vector.broadcast %103 : vector<16x1xf32> to vector<16x16xf32>
    %105 = arith.mulf %100, %104 : vector<16x16xf32>
    %106 = arith.truncf %105 : vector<16x16xf32> to vector<16x16xbf16>
    %cst_34 = arith.constant dense<0.000000e+00> : vector<16x8xf32>
    %107 = tpu.matmul %106, %91, %cst_34 {dimension_numbers = #tpu.dot_dimension_numbers<[1], [0], [0], [1], [0, 0, 1, 1], [], []>} : vector<16x16xbf16>, vector<16x8xbf16>, vector<16x8xf32> -> vector<16x8xf32>
    %108 = arith.truncf %107 : vector<16x8xf32> to vector<16x8xbf16>
    %c0_35 = arith.constant 0 : index
    %c1 = arith.constant 1 : index
    %c0_36 = arith.constant 0 : index
    %c0_37 = arith.constant 0 : index
    %109 = vector.load %arg3[%c0_35, %c1, %c0_36, %c0_37] : memref<1x4x8x32xbf16, #tpu.memory_space<vmem>>, vector<1x1x8x32xbf16>
    %110 = vector.shape_cast %109 : vector<1x1x8x32xbf16> to vector<8x32xbf16>
    %cst_38 = arith.constant dense<0.000000e+00> : vector<16x32xf32>
    %111 = tpu.matmul %108, %110, %cst_38 {dimension_numbers = #tpu.dot_dimension_numbers<[1], [0], [0], [1], [0, 0, 1, 1], [], []>} : vector<16x8xbf16>, vector<8x32xbf16>, vector<16x32xf32> -> vector<16x32xf32>
    %112 = arith.addf %85, %111 : vector<16x32xf32>
    %113 = vector.extract_strided_slice %19 {offsets = [0, 16], sizes = [16, 8], strides = [1, 1]} : vector<16x32xf32> to vector<16x8xf32>
    %114 = arith.truncf %113 : vector<16x8xf32> to vector<16x8xbf16>
    %115 = vector.extract_strided_slice %20 {offsets = [0, 16], sizes = [16, 8], strides = [1, 1]} : vector<16x32xf32> to vector<16x8xf32>
    %116 = arith.truncf %115 : vector<16x8xf32> to vector<16x8xbf16>
    %117 = vector.extract_strided_slice %21 {offsets = [0, 16], sizes = [16, 8], strides = [1, 1]} : vector<16x32xf32> to vector<16x8xf32>
    %118 = arith.truncf %117 : vector<16x8xf32> to vector<16x8xbf16>
    %cst_39 = arith.constant dense<0.000000e+00> : vector<16x16xf32>
    %119 = tpu.matmul %114, %116, %cst_39 {dimension_numbers = #tpu.dot_dimension_numbers<[1], [1], [0], [0], [0, 0, 1, 0], [], []>} : vector<16x8xbf16>, vector<16x8xbf16>, vector<16x16xf32> -> vector<16x16xf32>
    %cst_40 = arith.constant 0.353553385 : f32
    %120 = vector.broadcast %cst_40 : f32 to vector<16x16xf32>
    %121 = arith.mulf %119, %120 : vector<16x16xf32>
    %122 = arith.addf %121, %59 : vector<16x16xf32>
    %cst_41 = arith.constant dense<0xFF800000> : vector<16xf32>
    %123 = vector.multi_reduction <maximumf>, %122, %cst_41 [1] : vector<16x16xf32> to vector<16xf32>
    %124 = vector.shape_cast %123 : vector<16xf32> to vector<16x1xf32>
    %125 = vector.broadcast %124 : vector<16x1xf32> to vector<16x16xf32>
    %126 = arith.subf %122, %125 : vector<16x16xf32>
    %127 = math.exp %126 : vector<16x16xf32>
    %cst_42 = arith.constant dense<0.000000e+00> : vector<16xf32>
    %128 = vector.multi_reduction <add>, %127, %cst_42 [1] : vector<16x16xf32> to vector<16xf32>
    %129 = vector.shape_cast %128 : vector<16xf32> to vector<16x1xf32>
    %130 = tpu.reciprocal %129 {approx = true} : vector<16x1xf32> -> vector<16x1xf32>
    %131 = vector.broadcast %130 : vector<16x1xf32> to vector<16x16xf32>
    %132 = arith.mulf %127, %131 : vector<16x16xf32>
    %133 = arith.truncf %132 : vector<16x16xf32> to vector<16x16xbf16>
    %cst_43 = arith.constant dense<0.000000e+00> : vector<16x8xf32>
    %134 = tpu.matmul %133, %118, %cst_43 {dimension_numbers = #tpu.dot_dimension_numbers<[1], [0], [0], [1], [0, 0, 1, 1], [], []>} : vector<16x16xbf16>, vector<16x8xbf16>, vector<16x8xf32> -> vector<16x8xf32>
    %135 = arith.truncf %134 : vector<16x8xf32> to vector<16x8xbf16>
    %c0_44 = arith.constant 0 : index
    %c2 = arith.constant 2 : index
    %c0_45 = arith.constant 0 : index
    %c0_46 = arith.constant 0 : index
    %136 = vector.load %arg3[%c0_44, %c2, %c0_45, %c0_46] : memref<1x4x8x32xbf16, #tpu.memory_space<vmem>>, vector<1x1x8x32xbf16>
    %137 = vector.shape_cast %136 : vector<1x1x8x32xbf16> to vector<8x32xbf16>
    %cst_47 = arith.constant dense<0.000000e+00> : vector<16x32xf32>
    %138 = tpu.matmul %135, %137, %cst_47 {dimension_numbers = #tpu.dot_dimension_numbers<[1], [0], [0], [1], [0, 0, 1, 1], [], []>} : vector<16x8xbf16>, vector<8x32xbf16>, vector<16x32xf32> -> vector<16x32xf32>
    %139 = arith.addf %112, %138 : vector<16x32xf32>
    %140 = vector.extract_strided_slice %19 {offsets = [0, 24], sizes = [16, 8], strides = [1, 1]} : vector<16x32xf32> to vector<16x8xf32>
    %141 = arith.truncf %140 : vector<16x8xf32> to vector<16x8xbf16>
    %142 = vector.extract_strided_slice %20 {offsets = [0, 24], sizes = [16, 8], strides = [1, 1]} : vector<16x32xf32> to vector<16x8xf32>
    %143 = arith.truncf %142 : vector<16x8xf32> to vector<16x8xbf16>
    %144 = vector.extract_strided_slice %21 {offsets = [0, 24], sizes = [16, 8], strides = [1, 1]} : vector<16x32xf32> to vector<16x8xf32>
    %145 = arith.truncf %144 : vector<16x8xf32> to vector<16x8xbf16>
    %cst_48 = arith.constant dense<0.000000e+00> : vector<16x16xf32>
    %146 = tpu.matmul %141, %143, %cst_48 {dimension_numbers = #tpu.dot_dimension_numbers<[1], [1], [0], [0], [0, 0, 1, 0], [], []>} : vector<16x8xbf16>, vector<16x8xbf16>, vector<16x16xf32> -> vector<16x16xf32>
    %cst_49 = arith.constant 0.353553385 : f32
    %147 = vector.broadcast %cst_49 : f32 to vector<16x16xf32>
    %148 = arith.mulf %146, %147 : vector<16x16xf32>
    %149 = arith.addf %148, %59 : vector<16x16xf32>
    %cst_50 = arith.constant dense<0xFF800000> : vector<16xf32>
    %150 = vector.multi_reduction <maximumf>, %149, %cst_50 [1] : vector<16x16xf32> to vector<16xf32>
    %151 = vector.shape_cast %150 : vector<16xf32> to vector<16x1xf32>
    %152 = vector.broadcast %151 : vector<16x1xf32> to vector<16x16xf32>
    %153 = arith.subf %149, %152 : vector<16x16xf32>
    %154 = math.exp %153 : vector<16x16xf32>
    %cst_51 = arith.constant dense<0.000000e+00> : vector<16xf32>
    %155 = vector.multi_reduction <add>, %154, %cst_51 [1] : vector<16x16xf32> to vector<16xf32>
    %156 = vector.shape_cast %155 : vector<16xf32> to vector<16x1xf32>
    %157 = tpu.reciprocal %156 {approx = true} : vector<16x1xf32> -> vector<16x1xf32>
    %158 = vector.broadcast %157 : vector<16x1xf32> to vector<16x16xf32>
    %159 = arith.mulf %154, %158 : vector<16x16xf32>
    %160 = arith.truncf %159 : vector<16x16xf32> to vector<16x16xbf16>
    %cst_52 = arith.constant dense<0.000000e+00> : vector<16x8xf32>
    %161 = tpu.matmul %160, %145, %cst_52 {dimension_numbers = #tpu.dot_dimension_numbers<[1], [0], [0], [1], [0, 0, 1, 1], [], []>} : vector<16x16xbf16>, vector<16x8xbf16>, vector<16x8xf32> -> vector<16x8xf32>
    %162 = arith.truncf %161 : vector<16x8xf32> to vector<16x8xbf16>
    %c0_53 = arith.constant 0 : index
    %c3 = arith.constant 3 : index
    %c0_54 = arith.constant 0 : index
    %c0_55 = arith.constant 0 : index
    %163 = vector.load %arg3[%c0_53, %c3, %c0_54, %c0_55] : memref<1x4x8x32xbf16, #tpu.memory_space<vmem>>, vector<1x1x8x32xbf16>
    %164 = vector.shape_cast %163 : vector<1x1x8x32xbf16> to vector<8x32xbf16>
    %cst_56 = arith.constant dense<0.000000e+00> : vector<16x32xf32>
    %165 = tpu.matmul %162, %164, %cst_56 {dimension_numbers = #tpu.dot_dimension_numbers<[1], [0], [0], [1], [0, 0, 1, 1], [], []>} : vector<16x8xbf16>, vector<8x32xbf16>, vector<16x32xf32> -> vector<16x32xf32>
    %166 = arith.addf %139, %165 : vector<16x32xf32>
    %167 = vector.broadcast %7 : vector<1x32xf32> to vector<16x32xf32>
    %168 = arith.addf %166, %167 : vector<16x32xf32>
    %169 = arith.addf %3, %168 : vector<16x32xf32>
    %cst_57 = arith.constant dense<0.000000e+00> : vector<16xf32>
    %170 = vector.multi_reduction <add>, %169, %cst_57 [1] : vector<16x32xf32> to vector<16xf32>
    %171 = vector.shape_cast %170 : vector<16xf32> to vector<16x1xf32>
    %cst_58 = arith.constant 3.200000e+01 : f32
    %172 = vector.broadcast %cst_58 : f32 to vector<16x1xf32>
    %173 = arith.divf %171, %172 : vector<16x1xf32>
    %174 = vector.broadcast %173 : vector<16x1xf32> to vector<16x32xf32>
    %175 = arith.subf %169, %174 : vector<16x32xf32>
    %176 = arith.mulf %175, %175 : vector<16x32xf32>
    %cst_59 = arith.constant dense<0.000000e+00> : vector<16xf32>
    %177 = vector.multi_reduction <add>, %176, %cst_59 [1] : vector<16x32xf32> to vector<16xf32>
    %178 = vector.shape_cast %177 : vector<16xf32> to vector<16x1xf32>
    %cst_60 = arith.constant 3.200000e+01 : f32
    %179 = vector.broadcast %cst_60 : f32 to vector<16x1xf32>
    %180 = arith.divf %178, %179 : vector<16x1xf32>
    %181 = vector.broadcast %173 : vector<16x1xf32> to vector<16x32xf32>
    %182 = arith.subf %169, %181 : vector<16x32xf32>
    %cst_61 = arith.constant 9.99999974E-6 : f32
    %183 = vector.broadcast %cst_61 : f32 to vector<16x1xf32>
    %184 = arith.addf %180, %183 : vector<16x1xf32>
    %185 = math.rsqrt %184 : vector<16x1xf32>
    %186 = vector.broadcast %185 : vector<16x1xf32> to vector<16x32xf32>
    %187 = arith.mulf %182, %186 : vector<16x32xf32>
    %188 = vector.broadcast %9 : vector<1x32xf32> to vector<16x32xf32>
    %189 = arith.mulf %187, %188 : vector<16x32xf32>
    %190 = vector.broadcast %10 : vector<1x32xf32> to vector<16x32xf32>
    %191 = arith.addf %189, %190 : vector<16x32xf32>
    %192 = arith.truncf %191 : vector<16x32xf32> to vector<16x32xbf16>
    %cst_62 = arith.constant 0.000000e+00 : f32
    %193 = vector.broadcast %cst_62 : f32 to vector<16x32xf32>
    %c0_63 = arith.constant 0 : index
    %c0_64 = arith.constant 0 : index
    %c0_65 = arith.constant 0 : index
    %194 = vector.load %arg4[%c0_63, %c0_64, %c0_65] : memref<1x32x2048xbf16, #tpu.memory_space<vmem>>, vector<1x32x512xbf16>
    %195 = vector.shape_cast %194 : vector<1x32x512xbf16> to vector<32x512xbf16>
    %cst_66 = arith.constant dense<0.000000e+00> : vector<16x512xf32>
    %196 = tpu.matmul %192, %195, %cst_66 {dimension_numbers = #tpu.dot_dimension_numbers<[1], [0], [0], [1], [0, 0, 1, 1], [], []>} : vector<16x32xbf16>, vector<32x512xbf16>, vector<16x512xf32> -> vector<16x512xf32>
    %c0_67 = arith.constant 0 : index
    %c0_68 = arith.constant 0 : index
    %c0_69 = arith.constant 0 : index
    %197 = vector.load %arg5[%c0_67, %c0_68, %c0_69] : memref<1x1x2048xf32, #tpu.memory_space<vmem>>, vector<1x1x512xf32>
    %198 = vector.shape_cast %197 : vector<1x1x512xf32> to vector<1x512xf32>
    %199 = vector.broadcast %198 : vector<1x512xf32> to vector<16x512xf32>
    %200 = arith.addf %196, %199 : vector<16x512xf32>
    %cst_70 = arith.constant 0.000000e+00 : f32
    %201 = vector.broadcast %cst_70 : f32 to vector<16x512xf32>
    %202 = arith.maximumf %200, %201 : vector<16x512xf32>
    %203 = arith.truncf %202 : vector<16x512xf32> to vector<16x512xbf16>
    %c0_71 = arith.constant 0 : index
    %c0_72 = arith.constant 0 : index
    %c0_73 = arith.constant 0 : index
    %204 = vector.load %arg6[%c0_71, %c0_72, %c0_73] : memref<1x2048x32xbf16, #tpu.memory_space<vmem>>, vector<1x512x32xbf16>
    %205 = vector.shape_cast %204 : vector<1x512x32xbf16> to vector<512x32xbf16>
    %cst_74 = arith.constant dense<0.000000e+00> : vector<16x32xf32>
    %206 = tpu.matmul %203, %205, %cst_74 {dimension_numbers = #tpu.dot_dimension_numbers<[1], [0], [0], [1], [0, 0, 1, 1], [], []>} : vector<16x512xbf16>, vector<512x32xbf16>, vector<16x32xf32> -> vector<16x32xf32>
    %207 = arith.addf %193, %206 : vector<16x32xf32>
    %c0_75 = arith.constant 0 : index
    %c0_76 = arith.constant 0 : index
    %c512 = arith.constant 512 : index
    %208 = vector.load %arg4[%c0_75, %c0_76, %c512] : memref<1x32x2048xbf16, #tpu.memory_space<vmem>>, vector<1x32x512xbf16>
    %209 = vector.shape_cast %208 : vector<1x32x512xbf16> to vector<32x512xbf16>
    %cst_77 = arith.constant dense<0.000000e+00> : vector<16x512xf32>
    %210 = tpu.matmul %192, %209, %cst_77 {dimension_numbers = #tpu.dot_dimension_numbers<[1], [0], [0], [1], [0, 0, 1, 1], [], []>} : vector<16x32xbf16>, vector<32x512xbf16>, vector<16x512xf32> -> vector<16x512xf32>
    %c0_78 = arith.constant 0 : index
    %c0_79 = arith.constant 0 : index
    %c512_80 = arith.constant 512 : index
    %211 = vector.load %arg5[%c0_78, %c0_79, %c512_80] : memref<1x1x2048xf32, #tpu.memory_space<vmem>>, vector<1x1x512xf32>
    %212 = vector.shape_cast %211 : vector<1x1x512xf32> to vector<1x512xf32>
    %213 = vector.broadcast %212 : vector<1x512xf32> to vector<16x512xf32>
    %214 = arith.addf %210, %213 : vector<16x512xf32>
    %cst_81 = arith.constant 0.000000e+00 : f32
    %215 = vector.broadcast %cst_81 : f32 to vector<16x512xf32>
    %216 = arith.maximumf %214, %215 : vector<16x512xf32>
    %217 = arith.truncf %216 : vector<16x512xf32> to vector<16x512xbf16>
    %c0_82 = arith.constant 0 : index
    %c512_83 = arith.constant 512 : index
    %c0_84 = arith.constant 0 : index
    %218 = vector.load %arg6[%c0_82, %c512_83, %c0_84] : memref<1x2048x32xbf16, #tpu.memory_space<vmem>>, vector<1x512x32xbf16>
    %219 = vector.shape_cast %218 : vector<1x512x32xbf16> to vector<512x32xbf16>
    %cst_85 = arith.constant dense<0.000000e+00> : vector<16x32xf32>
    %220 = tpu.matmul %217, %219, %cst_85 {dimension_numbers = #tpu.dot_dimension_numbers<[1], [0], [0], [1], [0, 0, 1, 1], [], []>} : vector<16x512xbf16>, vector<512x32xbf16>, vector<16x32xf32> -> vector<16x32xf32>
    %221 = arith.addf %207, %220 : vector<16x32xf32>
    %c0_86 = arith.constant 0 : index
    %c0_87 = arith.constant 0 : index
    %c1024 = arith.constant 1024 : index
    %222 = vector.load %arg4[%c0_86, %c0_87, %c1024] : memref<1x32x2048xbf16, #tpu.memory_space<vmem>>, vector<1x32x512xbf16>
    %223 = vector.shape_cast %222 : vector<1x32x512xbf16> to vector<32x512xbf16>
    %cst_88 = arith.constant dense<0.000000e+00> : vector<16x512xf32>
    %224 = tpu.matmul %192, %223, %cst_88 {dimension_numbers = #tpu.dot_dimension_numbers<[1], [0], [0], [1], [0, 0, 1, 1], [], []>} : vector<16x32xbf16>, vector<32x512xbf16>, vector<16x512xf32> -> vector<16x512xf32>
    %c0_89 = arith.constant 0 : index
    %c0_90 = arith.constant 0 : index
    %c1024_91 = arith.constant 1024 : index
    %225 = vector.load %arg5[%c0_89, %c0_90, %c1024_91] : memref<1x1x2048xf32, #tpu.memory_space<vmem>>, vector<1x1x512xf32>
    %226 = vector.shape_cast %225 : vector<1x1x512xf32> to vector<1x512xf32>
    %227 = vector.broadcast %226 : vector<1x512xf32> to vector<16x512xf32>
    %228 = arith.addf %224, %227 : vector<16x512xf32>
    %cst_92 = arith.constant 0.000000e+00 : f32
    %229 = vector.broadcast %cst_92 : f32 to vector<16x512xf32>
    %230 = arith.maximumf %228, %229 : vector<16x512xf32>
    %231 = arith.truncf %230 : vector<16x512xf32> to vector<16x512xbf16>
    %c0_93 = arith.constant 0 : index
    %c1024_94 = arith.constant 1024 : index
    %c0_95 = arith.constant 0 : index
    %232 = vector.load %arg6[%c0_93, %c1024_94, %c0_95] : memref<1x2048x32xbf16, #tpu.memory_space<vmem>>, vector<1x512x32xbf16>
    %233 = vector.shape_cast %232 : vector<1x512x32xbf16> to vector<512x32xbf16>
    %cst_96 = arith.constant dense<0.000000e+00> : vector<16x32xf32>
    %234 = tpu.matmul %231, %233, %cst_96 {dimension_numbers = #tpu.dot_dimension_numbers<[1], [0], [0], [1], [0, 0, 1, 1], [], []>} : vector<16x512xbf16>, vector<512x32xbf16>, vector<16x32xf32> -> vector<16x32xf32>
    %235 = arith.addf %221, %234 : vector<16x32xf32>
    %c0_97 = arith.constant 0 : index
    %c0_98 = arith.constant 0 : index
    %c1536 = arith.constant 1536 : index
    %236 = vector.load %arg4[%c0_97, %c0_98, %c1536] : memref<1x32x2048xbf16, #tpu.memory_space<vmem>>, vector<1x32x512xbf16>
    %237 = vector.shape_cast %236 : vector<1x32x512xbf16> to vector<32x512xbf16>
    %cst_99 = arith.constant dense<0.000000e+00> : vector<16x512xf32>
    %238 = tpu.matmul %192, %237, %cst_99 {dimension_numbers = #tpu.dot_dimension_numbers<[1], [0], [0], [1], [0, 0, 1, 1], [], []>} : vector<16x32xbf16>, vector<32x512xbf16>, vector<16x512xf32> -> vector<16x512xf32>
    %c0_100 = arith.constant 0 : index
    %c0_101 = arith.constant 0 : index
    %c1536_102 = arith.constant 1536 : index
    %239 = vector.load %arg5[%c0_100, %c0_101, %c1536_102] : memref<1x1x2048xf32, #tpu.memory_space<vmem>>, vector<1x1x512xf32>
    %240 = vector.shape_cast %239 : vector<1x1x512xf32> to vector<1x512xf32>
    %241 = vector.broadcast %240 : vector<1x512xf32> to vector<16x512xf32>
    %242 = arith.addf %238, %241 : vector<16x512xf32>
    %cst_103 = arith.constant 0.000000e+00 : f32
    %243 = vector.broadcast %cst_103 : f32 to vector<16x512xf32>
    %244 = arith.maximumf %242, %243 : vector<16x512xf32>
    %245 = arith.truncf %244 : vector<16x512xf32> to vector<16x512xbf16>
    %c0_104 = arith.constant 0 : index
    %c1536_105 = arith.constant 1536 : index
    %c0_106 = arith.constant 0 : index
    %246 = vector.load %arg6[%c0_104, %c1536_105, %c0_106] : memref<1x2048x32xbf16, #tpu.memory_space<vmem>>, vector<1x512x32xbf16>
    %247 = vector.shape_cast %246 : vector<1x512x32xbf16> to vector<512x32xbf16>
    %cst_107 = arith.constant dense<0.000000e+00> : vector<16x32xf32>
    %248 = tpu.matmul %245, %247, %cst_107 {dimension_numbers = #tpu.dot_dimension_numbers<[1], [0], [0], [1], [0, 0, 1, 1], [], []>} : vector<16x512xbf16>, vector<512x32xbf16>, vector<16x32xf32> -> vector<16x32xf32>
    %249 = arith.addf %235, %248 : vector<16x32xf32>
    %250 = vector.broadcast %8 : vector<1x32xf32> to vector<16x32xf32>
    %251 = arith.addf %249, %250 : vector<16x32xf32>
    %252 = arith.addf %191, %251 : vector<16x32xf32>
    %cst_108 = arith.constant dense<0.000000e+00> : vector<16xf32>
    %253 = vector.multi_reduction <add>, %252, %cst_108 [1] : vector<16x32xf32> to vector<16xf32>
    %254 = vector.shape_cast %253 : vector<16xf32> to vector<16x1xf32>
    %cst_109 = arith.constant 3.200000e+01 : f32
    %255 = vector.broadcast %cst_109 : f32 to vector<16x1xf32>
    %256 = arith.divf %254, %255 : vector<16x1xf32>
    %257 = vector.broadcast %256 : vector<16x1xf32> to vector<16x32xf32>
    %258 = arith.subf %252, %257 : vector<16x32xf32>
    %259 = arith.mulf %258, %258 : vector<16x32xf32>
    %cst_110 = arith.constant dense<0.000000e+00> : vector<16xf32>
    %260 = vector.multi_reduction <add>, %259, %cst_110 [1] : vector<16x32xf32> to vector<16xf32>
    %261 = vector.shape_cast %260 : vector<16xf32> to vector<16x1xf32>
    %cst_111 = arith.constant 3.200000e+01 : f32
    %262 = vector.broadcast %cst_111 : f32 to vector<16x1xf32>
    %263 = arith.divf %261, %262 : vector<16x1xf32>
    %264 = vector.broadcast %256 : vector<16x1xf32> to vector<16x32xf32>
    %265 = arith.subf %252, %264 : vector<16x32xf32>
    %cst_112 = arith.constant 9.99999974E-6 : f32
    %266 = vector.broadcast %cst_112 : f32 to vector<16x1xf32>
    %267 = arith.addf %263, %266 : vector<16x1xf32>
    %268 = math.rsqrt %267 : vector<16x1xf32>
    %269 = vector.broadcast %268 : vector<16x1xf32> to vector<16x32xf32>
    %270 = arith.mulf %265, %269 : vector<16x32xf32>
    %271 = vector.broadcast %11 : vector<1x32xf32> to vector<16x32xf32>
    %272 = arith.mulf %270, %271 : vector<16x32xf32>
    %273 = vector.broadcast %12 : vector<1x32xf32> to vector<16x32xf32>
    %274 = arith.addf %272, %273 : vector<16x32xf32>
    %c0_113 = arith.constant 0 : index
    %c0_114 = arith.constant 0 : index
    %275 = vector.load %arg9[%c0_113, %c0_114] : memref<16x32xf32, #tpu.memory_space<vmem>>, vector<16x32xf32>
    tpu.vector_store %arg9[%c0_113, %c0_114], %274 {strides = array<i32>} : memref<16x32xf32, #tpu.memory_space<vmem>>, vector<16x32xf32>,
    %c1_i32_115 = arith.constant 1 : i32
    %276 = arith.cmpi eq, %arg0, %c1_i32_115 : i32
    %277 = arith.extui %276 : i1 to i32
    %c0_i32_116 = arith.constant 0 : i32
    %278 = arith.cmpi ne, %277, %c0_i32_116 : i32
    scf.if %278 {
      %c0_117 = arith.constant 0 : index
      %c0_118 = arith.constant 0 : index
      %279 = vector.load %arg8[%c0_117, %c0_118] : memref<16x32xf32, #tpu.memory_space<vmem>>, vector<16x32xf32>
      tpu.vector_store %arg8[%c0_117, %c0_118], %274 {strides = array<i32>} : memref<16x32xf32, #tpu.memory_space<vmem>>, vector<16x32xf32>,
    } else {
    }
    return
  }
  func.func @transform_0(%arg0: i32) -> (i32, i32) {
    %c0_i32 = arith.constant 0 : i32
    %c0_i32_0 = arith.constant 0 : i32
    %c0_i32_1 = arith.constant 0 : i32
    return %c0_i32, %c0_i32_0 : i32, i32
  }
  func.func @transform_1(%arg0: i32) -> (i32, i32, i32) {
    %c0_i32 = arith.constant 0 : i32
    %c0_i32_0 = arith.constant 0 : i32
    %c0_i32_1 = arith.constant 0 : i32
    return %arg0, %c0_i32, %c0_i32_0 : i32, i32, i32
  }
  func.func @transform_2(%arg0: i32) -> (i32, i32, i32, i32) {
    %c0_i32 = arith.constant 0 : i32
    %c0_i32_0 = arith.constant 0 : i32
    %c0_i32_1 = arith.constant 0 : i32
    %c0_i32_2 = arith.constant 0 : i32
    return %arg0, %c0_i32, %c0_i32_0, %c0_i32_1 : i32, i32, i32, i32
  }
  func.func @transform_3(%arg0: i32) -> (i32, i32, i32) {
    %c0_i32 = arith.constant 0 : i32
    %c0_i32_0 = arith.constant 0 : i32
    %c0_i32_1 = arith.constant 0 : i32
    return %arg0, %c0_i32, %c0_i32_0 : i32, i32, i32
  }
  func.func @transform_4(%arg0: i32) -> (i32, i32, i32) {
    %c0_i32 = arith.constant 0 : i32
    %c0_i32_0 = arith.constant 0 : i32
    %c0_i32_1 = arith.constant 0 : i32
    return %arg0, %c0_i32, %c0_i32_0 : i32, i32, i32
  }
  func.func @transform_5(%arg0: i32) -> (i32, i32, i32) {
    %c0_i32 = arith.constant 0 : i32
    %c0_i32_0 = arith.constant 0 : i32
    %c0_i32_1 = arith.constant 0 : i32
    return %arg0, %c0_i32, %c0_i32_0 : i32, i32, i32
  }
  func.func @transform_6(%arg0: i32) -> (i32, i32, i32) {
    %c0_i32 = arith.constant 0 : i32
    %c0_i32_0 = arith.constant 0 : i32
    %c0_i32_1 = arith.constant 0 : i32
    return %arg0, %c0_i32, %c0_i32_0 : i32, i32, i32
  }
  func.func @transform_7(%arg0: i32) -> (i32, i32) {
    %c0_i32 = arith.constant 0 : i32
    %c0_i32_0 = arith.constant 0 : i32
    %c0_i32_1 = arith.constant 0 : i32
    return %c0_i32, %c0_i32_0 : i32, i32
  }
}

</mosaic_0001>

<llo_original>
// kernel: transformer_encoder_pallas.1
$region0: #{transformer_encoder_pallas.1}
  #allocation0 [shape = 'u32[]', space=smem, size = 0x4, offset = 0x4, fixed_abs, tag = 'smem constant byte address 0x4 - core index']
  #allocation1 [shape = 'u32[144,128]{1,0:T(1,128)}', space=vmem, size = 0x12000, scoped, tag = 'internal scratch']
  #allocation2 [shape = 'f32[16,32]{1,0:T(8,128)}', space=vmem, size = 0x2000, scoped, tag = 'scratch operand']
  %s0 = inlined_call_operand.vmem [shape: f32[16,32], index: 0, kind: input, shape index: {}]
  %s1 = inlined_call_operand.vmem [shape: bf16[2,32,96], index: 1, kind: input, shape index: {}]
  %s2 = inlined_call_operand.vmem [shape: bf16[2,4,8,32], index: 2, kind: input, shape index: {}]
  %s3 = inlined_call_operand.vmem [shape: bf16[2,32,2048], index: 3, kind: input, shape index: {}]
  %s4 = inlined_call_operand.vmem [shape: f32[2,1,2048], index: 4, kind: input, shape index: {}]
  %s5 = inlined_call_operand.vmem [shape: bf16[2,2048,32], index: 5, kind: input, shape index: {}]
  %s6 = inlined_call_operand.vmem [shape: f32[2,8,128], index: 6, kind: input, shape index: {}]
  %s7 = inlined_call_operand.hbm [shape: f32[16,32], index: 7, kind: output, shape index: {}]
  %s8 = sld [smem:[#allocation0]]
  $region69: #{transformer_encoder_pallas.1} parent=0
    _
  %s10 = ssub.s32 1, %s8
  %s11 = scalar_select 0, %s10, %s8
  $region1: #{transformer_encoder_pallas.1} parent=0
    #allocation3 [shape = 'u8[8192]{0}', space=vmem, size = 0x2000, scoped, tag = 'output window, operand 0, single buffered']
    #allocation4 [shape = 's32[2]{0}', space=sflag, size = 0x8, scoped, tag = 'scoped memory for transformer_encoder_pallas.1']
    %12 = vsyncpa [#allocation4], 0
    loop: start=0, step=1, limit=4
    $region2: #{transformer_encoder_pallas.1} parent=1 // loop_pre_header
      _
    $region3: #{transformer_encoder_pallas.1} parent=1 // loop_header
      %s14 = sphi 0, %s18
      %p15 = scmp.ge.s32.totalorder %s14, 4
      %s22 = sphi 0, %s22
      %s24 = sphi 0, %s22
      %s25 = sphi 0, %s24
      %s39 = sphi 0, %s25
      %s45 = sphi 0, %s47
      %s48 = sphi 0, %s45
      %s49 = sphi 0, %s48
      %s65 = sphi 0, %s49
      %s71 = sphi 0, %s73
      %s74 = sphi 0, %s71
      %s75 = sphi 0, %s74
      %s91 = sphi 0, %s75
      %s97 = sphi 0, %s99
      %s100 = sphi 0, %s97
      %s101 = sphi 0, %s100
      %s117 = sphi 0, %s101
      %s123 = sphi 0, %s125
      %s126 = sphi 0, %s123
      %s127 = sphi 0, %s126
      %s143 = sphi 0, %s127
      %s149 = sphi 0, %s151
      %s152 = sphi 0, %s149
      %s153 = sphi 0, %s152
      %s169 = sphi 0, %s153
      %s175 = sphi 0, %s177
      %s178 = sphi 0, %s175
      %s179 = sphi 0, %s178
      %s195 = sphi 0, %s179
      %s199 = sphi 0, %s199
      %s201 = sphi 0, %s199
      %s202 = sphi 0, %s201
      %s216 = sphi 0, %s202
    $region4: #{transformer_encoder_pallas.1} parent=1 // loop_header_branch
      %17 = sbr.rel (%p15) target = $region8
    $region5: #{transformer_encoder_pallas.1} parent=1 // loop_body
      %s19 = ssub.s32 %s14, 1
      %s20 = ssub.s32 %s14, 2
      %s21 = sadd.s32 %s14, 1
      %s23 = sadd.s32 %s22, 1
      %p26 = scmp.eq.s32.totalorder %s14, 1
      %p27 = scmp.ne.s32.totalorder %s22, %s24
      %p28 = scmp.eq.s32.totalorder %s14, 0
      %p29 = por %p27, %p28
      %p30 = scmp.ne.s32.totalorder %s22, %s24
      %p31 = scmp.eq.s32.totalorder %s19, 1
      %p32 = por %p30, %p31
      %p33 = scmp.ne.s32.totalorder %s24, %s25
      %p34 = scmp.eq.s32.totalorder %s19, 0
      %p35 = por %p33, %p34
      %p36 = scmp.ne.s32.totalorder %s24, %s25
      %p37 = scmp.eq.s32.totalorder %s20, 1
      %p38 = por %p36, %p37
      %p40 = scmp.ne.s32.totalorder %s25, %s39
      %p41 = scmp.eq.s32.totalorder %s20, 0
      %p42 = por %p40, %p41
      %s43 = ssub.s32 %s14, %s21
      %p44 = scmp.eq.s32.totalorder %s43, 0
      %s46 = sadd.s32 %s45, 1
      %s47 = scalar_select %p44, %s45, %s46
      %p50 = pneg %p44
      %p51 = scmp.eq.s32.totalorder %s14, 1
      %p52 = por %p50, %p51
      %p53 = scmp.ne.s32.totalorder %s45, %s48
      %p54 = scmp.eq.s32.totalorder %s14, 0
      %p55 = por %p53, %p54
      %p56 = scmp.ne.s32.totalorder %s45, %s48
      %p57 = scmp.eq.s32.totalorder %s19, 1
      %p58 = por %p56, %p57
      %p59 = scmp.ne.s32.totalorder %s48, %s49
      %p60 = scmp.eq.s32.totalorder %s19, 0
      %p61 = por %p59, %p60
      %p62 = scmp.ne.s32.totalorder %s48, %s49
      %p63 = scmp.eq.s32.totalorder %s20, 1
      %p64 = por %p62, %p63
      %p66 = scmp.ne.s32.totalorder %s49, %s65
      %p67 = scmp.eq.s32.totalorder %s20, 0
      %p68 = por %p66, %p67
      %s69 = ssub.s32 %s14, %s21
      %p70 = scmp.eq.s32.totalorder %s69, 0
      %s72 = sadd.s32 %s71, 1
      %s73 = scalar_select %p70, %s71, %s72
      %p76 = pneg %p70
      %p77 = scmp.eq.s32.totalorder %s14, 1
      %p78 = por %p76, %p77
      %p79 = scmp.ne.s32.totalorder %s71, %s74
      %p80 = scmp.eq.s32.totalorder %s14, 0
      %p81 = por %p79, %p80
      %p82 = scmp.ne.s32.totalorder %s71, %s74
      %p83 = scmp.eq.s32.totalorder %s19, 1
      %p84 = por %p82, %p83
      %p85 = scmp.ne.s32.totalorder %s74, %s75
      %p86 = scmp.eq.s32.totalorder %s19, 0
      %p87 = por %p85, %p86
      %p88 = scmp.ne.s32.totalorder %s74, %s75
      %p89 = scmp.eq.s32.totalorder %s20, 1
      %p90 = por %p88, %p89
      %p92 = scmp.ne.s32.totalorder %s75, %s91
      %p93 = scmp.eq.s32.totalorder %s20, 0
      %p94 = por %p92, %p93
      %s95 = ssub.s32 %s14, %s21
      %p96 = scmp.eq.s32.totalorder %s95, 0
      %s98 = sadd.s32 %s97, 1
      %s99 = scalar_select %p96, %s97, %s98
      %p102 = pneg %p96
      %p103 = scmp.eq.s32.totalorder %s14, 1
      %p104 = por %p102, %p103
      %p105 = scmp.ne.s32.totalorder %s97, %s100
      %p106 = scmp.eq.s32.totalorder %s14, 0
      %p107 = por %p105, %p106
      %p108 = scmp.ne.s32.totalorder %s97, %s100
      %p109 = scmp.eq.s32.totalorder %s19, 1
      %p110 = por %p108, %p109
      %p111 = scmp.ne.s32.totalorder %s100, %s101
      %p112 = scmp.eq.s32.totalorder %s19, 0
      %p113 = por %p111, %p112
      %p114 = scmp.ne.s32.totalorder %s100, %s101
      %p115 = scmp.eq.s32.totalorder %s20, 1
      %p116 = por %p114, %p115
      %p118 = scmp.ne.s32.totalorder %s101, %s117
      %p119 = scmp.eq.s32.totalorder %s20, 0
      %p120 = por %p118, %p119
      %s121 = ssub.s32 %s14, %s21
      %p122 = scmp.eq.s32.totalorder %s121, 0
      %s124 = sadd.s32 %s123, 1
      %s125 = scalar_select %p122, %s123, %s124
      %p128 = pneg %p122
      %p129 = scmp.eq.s32.totalorder %s14, 1
      %p130 = por %p128, %p129
      %p131 = scmp.ne.s32.totalorder %s123, %s126
      %p132 = scmp.eq.s32.totalorder %s14, 0
      %p133 = por %p131, %p132
      %p134 = scmp.ne.s32.totalorder %s123, %s126
      %p135 = scmp.eq.s32.totalorder %s19, 1
      %p136 = por %p134, %p135
      %p137 = scmp.ne.s32.totalorder %s126, %s127
      %p138 = scmp.eq.s32.totalorder %s19, 0
      %p139 = por %p137, %p138
      %p140 = scmp.ne.s32.totalorder %s126, %s127
      %p141 = scmp.eq.s32.totalorder %s20, 1
      %p142 = por %p140, %p141
      %p144 = scmp.ne.s32.totalorder %s127, %s143
      %p145 = scmp.eq.s32.totalorder %s20, 0
      %p146 = por %p144, %p145
      %s147 = ssub.s32 %s14, %s21
      %p148 = scmp.eq.s32.totalorder %s147, 0
      %s150 = sadd.s32 %s149, 1
      %s151 = scalar_select %p148, %s149, %s150
      %p154 = pneg %p148
      %p155 = scmp.eq.s32.totalorder %s14, 1
      %p156 = por %p154, %p155
      %p157 = scmp.ne.s32.totalorder %s149, %s152
      %p158 = scmp.eq.s32.totalorder %s14, 0
      %p159 = por %p157, %p158
      %p160 = scmp.ne.s32.totalorder %s149, %s152
      %p161 = scmp.eq.s32.totalorder %s19, 1
      %p162 = por %p160, %p161
      %p163 = scmp.ne.s32.totalorder %s152, %s153
      %p164 = scmp.eq.s32.totalorder %s19, 0
      %p165 = por %p163, %p164
      %p166 = scmp.ne.s32.totalorder %s152, %s153
      %p167 = scmp.eq.s32.totalorder %s20, 1
      %p168 = por %p166, %p167
      %p170 = scmp.ne.s32.totalorder %s153, %s169
      %p171 = scmp.eq.s32.totalorder %s20, 0
      %p172 = por %p170, %p171
      %s173 = ssub.s32 %s14, %s21
      %p174 = scmp.eq.s32.totalorder %s173, 0
      %s176 = sadd.s32 %s175, 1
      %s177 = scalar_select %p174, %s175, %s176
      %p180 = pneg %p174
      %p181 = scmp.eq.s32.totalorder %s14, 1
      %p182 = por %p180, %p181
      %p183 = scmp.ne.s32.totalorder %s175, %s178
      %p184 = scmp.eq.s32.totalorder %s14, 0
      %p185 = por %p183, %p184
      %p186 = scmp.ne.s32.totalorder %s175, %s178
      %p187 = scmp.eq.s32.totalorder %s19, 1
      %p188 = por %p186, %p187
      %p189 = scmp.ne.s32.totalorder %s178, %s179
      %p190 = scmp.eq.s32.totalorder %s19, 0
      %p191 = por %p189, %p190
      %p192 = scmp.ne.s32.totalorder %s178, %s179
      %p193 = scmp.eq.s32.totalorder %s20, 1
      %p194 = por %p192, %p193
      %p196 = scmp.ne.s32.totalorder %s179, %s195
      %p197 = scmp.eq.s32.totalorder %s20, 0
      %p198 = por %p196, %p197
      %s200 = sadd.s32 %s199, 1
      %p203 = scmp.eq.s32.totalorder %s14, 1
      %p204 = scmp.ne.s32.totalorder %s199, %s201
      %p205 = scmp.eq.s32.totalorder %s14, 0
      %p206 = por %p204, %p205
      %p207 = scmp.ne.s32.totalorder %s199, %s201
      %p208 = scmp.eq.s32.totalorder %s19, 1
      %p209 = por %p207, %p208
      %p210 = scmp.ne.s32.totalorder %s201, %s202
      %p211 = scmp.eq.s32.totalorder %s19, 0
      %p212 = por %p210, %p211
      %p213 = scmp.ne.s32.totalorder %s201, %s202
      %p214 = scmp.eq.s32.totalorder %s20, 1
      %p215 = por %p213, %p214
      %p217 = scmp.ne.s32.totalorder %s202, %s216
      %p218 = scmp.eq.s32.totalorder %s20, 0
      %p219 = por %p217, %p218
      %p220 = scmp.le.s32.totalorder 1, %s14
      %p221 = scmp.lt.s32.totalorder %s14, 3
      %p222 = pnand %p220, %p221
      %p223 = pneg %p222
      // Predicated region
      $region9: #{transformer_encoder_pallas.1} parent=5 // pred_check
        _
      $region10: #{transformer_encoder_pallas.1} parent=5 // pred_check_branch
        %225 = sbr.rel (%p222) target = $region12
      $region11: #{transformer_encoder_pallas.1} parent=5 // pred_region
        %s226 = ssub.s32 %s14, 1
        // Predicated region
        $region13: #{transformer_encoder_pallas.1} parent=11 // pred_check
          %p227 = pneg %p35
        $region14: #{transformer_encoder_pallas.1} parent=11 // pred_check_branch
          %229 = sbr.rel (%p227) target = $region16
        $region15: #{transformer_encoder_pallas.1} parent=11 // pred_region
          _
        $region16: #{transformer_encoder_pallas.1} parent=11 // pred_fallthru
          _
      $region12: #{transformer_encoder_pallas.1} parent=5 // pred_fallthru
        _
      %p230 = scmp.lt.s32.totalorder %s14, 2
      // Predicated region
      $region17: #{transformer_encoder_pallas.1} parent=5 // pred_check
        %p231 = pneg %p230
      $region18: #{transformer_encoder_pallas.1} parent=5 // pred_check_branch
        %233 = sbr.rel (%p231) target = $region20
      $region19: #{transformer_encoder_pallas.1} parent=5 // pred_region
        // Predicated region
        $region21: #{transformer_encoder_pallas.1} parent=19 // pred_check
          %p234 = pneg %p55
        $region22: #{transformer_encoder_pallas.1} parent=19 // pred_check_branch
          %236 = sbr.rel (%p234) target = $region24
        $region23: #{transformer_encoder_pallas.1} parent=19 // pred_region
          %p237 = scmp.lt.s32.totalorder %s14, 1
          %s238 = scalar_select %p237, %s14, 1
          %s239 = smul.addr %s238, 4
          %s240 = smul.addr %s239, 4
          %s241 = scalar_lea.vmem %s1, %s240
        $region24: #{transformer_encoder_pallas.1} parent=19 // pred_fallthru
          _
        // Predicated region
        $region25: #{transformer_encoder_pallas.1} parent=19 // pred_check
          %p242 = pneg %p81
        $region26: #{transformer_encoder_pallas.1} parent=19 // pred_check_branch
          %244 = sbr.rel (%p242) target = $region28
        $region27: #{transformer_encoder_pallas.1} parent=19 // pred_region
          %p245 = scmp.lt.s32.totalorder %s14, 1
          %s246 = scalar_select %p245, %s14, 1
          %s247 = smul.addr %s246, 4
          %s248 = smul.addr %s247, 4
          %s249 = scalar_lea.vmem %s2, %s248
        $region28: #{transformer_encoder_pallas.1} parent=19 // pred_fallthru
          _
        // Predicated region
        $region29: #{transformer_encoder_pallas.1} parent=19 // pred_check
          %p250 = pneg %p107
        $region30: #{transformer_encoder_pallas.1} parent=19 // pred_check_branch
          %252 = sbr.rel (%p250) target = $region32
        $region31: #{transformer_encoder_pallas.1} parent=19 // pred_region
          %p253 = scmp.lt.s32.totalorder %s14, 1
          %s254 = scalar_select %p253, %s14, 1
          %s255 = smul.addr %s254, 64
          %s256 = smul.addr %s255, 4
          %s257 = scalar_lea.vmem %s3, %s256
        $region32: #{transformer_encoder_pallas.1} parent=19 // pred_fallthru
          _
        // Predicated region
        $region33: #{transformer_encoder_pallas.1} parent=19 // pred_check
          %p258 = pneg %p133
        $region34: #{transformer_encoder_pallas.1} parent=19 // pred_check_branch
          %260 = sbr.rel (%p258) target = $region36
        $region35: #{transformer_encoder_pallas.1} parent=19 // pred_region
          %p261 = scmp.lt.s32.totalorder %s14, 1
          %s262 = scalar_select %p261, %s14, 1
          %s263 = smul.addr %s262, 16
          %s264 = scalar_lea.vmem %s4, %s263
        $region36: #{transformer_encoder_pallas.1} parent=19 // pred_fallthru
          _
        // Predicated region
        $region37: #{transformer_encoder_pallas.1} parent=19 // pred_check
          %p265 = pneg %p159
        $region38: #{transformer_encoder_pallas.1} parent=19 // pred_check_branch
          %267 = sbr.rel (%p265) target = $region40
        $region39: #{transformer_encoder_pallas.1} parent=19 // pred_region
          %p268 = scmp.lt.s32.totalorder %s14, 1
          %s269 = scalar_select %p268, %s14, 1
          %s270 = smul.addr %s269, 256
          %s271 = smul.addr %s270, 4
          %s272 = scalar_lea.vmem %s5, %s271
        $region40: #{transformer_encoder_pallas.1} parent=19 // pred_fallthru
          _
        // Predicated region
        $region41: #{transformer_encoder_pallas.1} parent=19 // pred_check
          %p273 = pneg %p185
        $region42: #{transformer_encoder_pallas.1} parent=19 // pred_check_branch
          %275 = sbr.rel (%p273) target = $region44
        $region43: #{transformer_encoder_pallas.1} parent=19 // pred_region
          %p276 = scmp.lt.s32.totalorder %s14, 1
          %s277 = scalar_select %p276, %s14, 1
          %s278 = smul.addr %s277, 8
          %s279 = scalar_lea.vmem %s6, %s278
        $region44: #{transformer_encoder_pallas.1} parent=19 // pred_fallthru
          _
      $region20: #{transformer_encoder_pallas.1} parent=5 // pred_fallthru
        _
      %p280 = scmp.le.s32.totalorder 1, %s14
      %p281 = scmp.lt.s32.totalorder %s14, 3
      %p282 = pnand %p280, %p281
      %p283 = pneg %p282
      // Predicated region
      $region45: #{transformer_encoder_pallas.1} parent=5 // pred_check
        _
      $region46: #{transformer_encoder_pallas.1} parent=5 // pred_check_branch
        %285 = sbr.rel (%p282) target = $region48
      $region47: #{transformer_encoder_pallas.1} parent=5 // pred_region
        %s286 = ssub.s32 %s14, 1
        %p287 = pneg %p35
        %p288 = pneg %p32
        %p289 = scmp.lt.s32.totalorder %s19, 1
        %s290 = scalar_select %p289, %s19, 1
        %s291 = smul.addr %s290, 4
        %s292 = smul.addr %s291, 4
        %s293 = scalar_lea.vmem %s1, %s292
        %p294 = pneg %p61
        %p295 = pneg %p58
        %p296 = scmp.lt.s32.totalorder %s19, 1
        %s297 = scalar_select %p296, %s19, 1
        %s298 = smul.addr %s297, 4
        %s299 = smul.addr %s298, 4
        %s300 = scalar_lea.vmem %s2, %s299
        %p301 = pneg %p87
        %p302 = pneg %p84
        %p303 = scmp.lt.s32.totalorder %s19, 1
        %s304 = scalar_select %p303, %s19, 1
        %s305 = smul.addr %s304, 64
        %s306 = smul.addr %s305, 4
        %s307 = scalar_lea.vmem %s3, %s306
        %p308 = pneg %p113
        %p309 = pneg %p110
        %p310 = scmp.lt.s32.totalorder %s19, 1
        %s311 = scalar_select %p310, %s19, 1
        %s312 = smul.addr %s311, 16
        %s313 = scalar_lea.vmem %s4, %s312
        %p314 = pneg %p139
        %p315 = pneg %p136
        %p316 = scmp.lt.s32.totalorder %s19, 1
        %s317 = scalar_select %p316, %s19, 1
        %s318 = smul.addr %s317, 256
        %s319 = smul.addr %s318, 4
        %s320 = scalar_lea.vmem %s5, %s319
        %p321 = pneg %p165
        %p322 = pneg %p162
        %p323 = scmp.lt.s32.totalorder %s19, 1
        %s324 = scalar_select %p323, %s19, 1
        %s325 = smul.addr %s324, 8
        %s326 = scalar_lea.vmem %s6, %s325
        %p327 = pneg %p191
        %p328 = pneg %p188
        %p329 = pneg %p212
        %p330 = pneg %p209
        %p331 = scmp.lt.s32.totalorder %s19, 1
        %s332 = scalar_select %p331, %s19, 1
        %s333 = smul.addr %s332, 4
        %s334 = smul.addr %s333, 4
        %s335 = scalar_lea.vmem %s1, %s334
        %p336 = scmp.lt.s32.totalorder %s19, 1
        %s337 = scalar_select %p336, %s19, 1
        %s338 = smul.addr %s337, 4
        %s339 = smul.addr %s338, 4
        %s340 = scalar_lea.vmem %s2, %s339
        %p341 = scmp.lt.s32.totalorder %s19, 1
        %s342 = scalar_select %p341, %s19, 1
        %s343 = smul.addr %s342, 64
        %s344 = smul.addr %s343, 4
        %s345 = scalar_lea.vmem %s3, %s344
        %p346 = scmp.lt.s32.totalorder %s19, 1
        %s347 = scalar_select %p346, %s19, 1
        %s348 = smul.addr %s347, 16
        %s349 = scalar_lea.vmem %s4, %s348
        %p350 = scmp.lt.s32.totalorder %s19, 1
        %s351 = scalar_select %p350, %s19, 1
        %s352 = smul.addr %s351, 256
        %s353 = smul.addr %s352, 4
        %s354 = scalar_lea.vmem %s5, %s353
        %p355 = scmp.lt.s32.totalorder %s19, 1
        %s356 = scalar_select %p355, %s19, 1
        %s357 = smul.addr %s356, 8
        %s358 = scalar_lea.vmem %s6, %s357
        %p360 = scmp.eq.s32.totalorder %s19, 0
        // Predicated region
        $region49: #{transformer_encoder_pallas.1} parent=47 // pred_check
          %p361 = pneg %p360
        $region50: #{transformer_encoder_pallas.1} parent=47 // pred_check_branch
          %363 = sbr.rel (%p361) target = $region52
        $region51: #{transformer_encoder_pallas.1} parent=47 // pred_region
          %v364 = vld [vmem:[%s0] sm:$0xff]
          %v365 = vld [vmem:[%s0 + $0x8] sm:$0xff]
          %vm366 = vcmask 261120
          %367 = vst.msk [vmem:[#allocation2] sm:$0xff] %vm366, %v364
          %368 = vst.msk [vmem:[#allocation2 + $0x8] sm:$0xff] %vm366, %v365
        $region52: #{transformer_encoder_pallas.1} parent=47 // pred_fallthru
          _
        %v369 = vld [vmem:[#allocation2] sm:$0xff]
        %v370 = vld [vmem:[#allocation2 + $0x8] sm:$0xff]
        %v371 = vld [vmem:[%s358] sm:$0xff]
        %v372 = vpack.c.bf16 %v370, %v369
        %v373 = vld [vmem:[%s335] sm:$0xf]
        %v374 = vld [vmem:[%s335 + $0x4] sm:$0xf]
        %v375 = vld [vmem:[%s335 + $0x8] sm:$0xf]
        %v376 = vld [vmem:[%s335 + $0xc] sm:$0xf]
        %v377 = vlaneseq
        %v378 = vshrl.u32 %v377, 7
        %v379 = vsub.s32 0, %v378
        %v380 = vrot.slane %v371, %v379
        %v385 = vunpack.c.l.b16 %v373
        %v386 = vunpack.c.l.b16 %v374
        %v387 = vunpack.c.l.b16 %v375
        %v388 = vunpack.c.l.b16 %v376
        %v389 = vpack.c.b16 %v386, %v385
        %v390 = vpack.c.b16 %v388, %v387
        %vm393 = vcmask 261120
        %v395 = vsel %vm393, %v372, 0
        %397 = vmatprep.subr.bf16.mxu0 0
        %398 = vmatpush1.bf16.msra.mxu0 %v389
        %399 = vmatprep.subr.bf16.mxu0 0
        %400 = vmatpush1.bf16.msra.mxu0 %v390
        %401 = vmatprep.subr.bf16.mxu0 0
        %402 = vmatpush1.bf16.msra.mxu0 0
        %403 = vmatprep.subr.bf16.mxu0 0
        %404 = vmatpush1.bf16.msra.mxu0 0
        %405 = vmatprep.subr.bf16.mxu0 0
        %406 = vmatpush1.bf16.msra.mxu0 0
        %407 = vmatprep.subr.bf16.mxu0 0
        %408 = vmatpush1.bf16.msra.mxu0 0
        %409 = vmatprep.subr.bf16.mxu0 0
        %410 = vmatpush1.bf16.msra.mxu0 0
        %411 = vmatprep.subr.bf16.mxu0 0
        %412 = vmatpush1.bf16.msra.mxu0 0
        %413 = vmatprep.subr.bf16.mxu0 0
        %414 = vmatpush1.bf16.msra.mxu0 0
        %415 = vmatprep.subr.bf16.mxu0 0
        %416 = vmatpush1.bf16.msra.mxu0 0
        %417 = vmatprep.subr.bf16.mxu0 0
        %418 = vmatpush1.bf16.msra.mxu0 0
        %419 = vmatprep.subr.bf16.mxu0 0
        %420 = vmatpush1.bf16.msra.mxu0 0
        %421 = vmatprep.subr.bf16.mxu0 0
        %422 = vmatpush1.bf16.msra.mxu0 0
        %423 = vmatprep.subr.bf16.mxu0 0
        %424 = vmatpush1.bf16.msra.mxu0 0
        %425 = vmatprep.subr.bf16.mxu0 0
        %426 = vmatpush1.bf16.msra.mxu0 0
        %427 = vmatprep.subr.bf16.mxu0 0
        %428 = vmatpush1.bf16.msra.mxu0 0
        %429 = vmatprep.mubr.bf16.mxu0 0
        %430 = vmatmul.mubr.bf16.gmra.mrb[0].mxu0 %v395
        %v431 = vpop.f32.mrb[0].mxu0
        %v432 = vadd.f32 %v380, %v431
        %v433 = vpop.f32.mrb[0].mxu0
        %v434 = vpop.f32.mrb[0].mxu0
        %v435 = vadd.f32 %v380, %v434
        %v436 = vpop.f32.mrb[0].mxu0
        %437 = vdwg.mxu0
        %v438 = vlaneseq
        %v439 = vshrl.u32 %v438, 7
        %v440 = vadd.s32 %v439, 8
        %v441 = vlaneseq
        %v442 = vand.u32 %v441, 127
        %vm443 = vcmp.lt.s32.totalorder %v439, 0
        %v444 = vsub.s32 0, %v439
        %v445 = vsel %vm443, %v444, %v439
        %v446 = vshrl.u32 %v445, 1
        %v447 = vand.u32 %v445, 1
        %v448 = vsub.s32 0, %v447
        %v449 = vsel %vm443, %v448, %v447
        %vm450 = vcmp.lt.s32.totalorder %v440, 0
        %v451 = vsub.s32 0, %v440
        %v452 = vsel %vm450, %v451, %v440
        %v453 = vshrl.u32 %v452, 1
        %v454 = vand.u32 %v452, 1
        %v455 = vsub.s32 0, %v454
        %v456 = vsel %vm450, %v455, %v454
        %vm457 = vcmp.ne.s32.totalorder %v449, 0
        %vm458 = vcmp.ne.s32.totalorder %v456, 0
        %vm459 = vcmp.lt.s32.totalorder %v449, 0
        %vm460 = vcmp.lt.s32.totalorder %v456, 0
        %vm461 = vmand %vm459, %vm457
        %vm462 = vmand %vm460, %vm458
        %v463 = vadd.s32 %v449, 2
        %v464 = vadd.s32 %v456, 2
        %v465 = vsel %vm461, %v463, %v449
        %v466 = vsel %vm462, %v464, %v456
        %vm467 = vcmp.lt.s32.totalorder %v442, 0
        %v468 = vsub.s32 0, %v442
        %v469 = vsel %vm467, %v468, %v442
        %v470 = vshrl.u32 %v469, 1
        %v471 = vand.u32 %v469, 1
        %v472 = vsub.s32 0, %v471
        %v473 = vsel %vm467, %v472, %v471
        %vm474 = vcmp.ne.s32.totalorder %v473, 0
        %vm475 = vcmp.lt.s32.totalorder %v473, 0
        %vm476 = vmand %vm475, %vm474
        %v477 = vadd.s32 %v473, 2
        %v478 = vsel %vm476, %v477, %v473
        %vm479 = vcmp.eq.s32.totalorder %v465, %v478
        %vm480 = vcmp.eq.s32.totalorder %v466, %v478
        %v481 = vsel %vm479, 0.0, -1e+09
        %v482 = vsel %vm480, 0.0, -1e+09
        %v483 = vpack.c.bf16 %v435, %v432
        %485 = vrot.lane.b32.xlu0 %v483, 96
        %v486 = vpop.permute.xlu0 %485
        %vm487 = vcmask 64512
        %v489 = vsel %vm487, %v483, 0
        %v492 = vsel %vm487, %v486, 0
        %494 = vmatprep.subr.bf16.mxu0 0
        %495 = vmatpush1.bf16.xpose.msra.mxu0 %v492
        %496 = vmatprep.subr.bf16.mxu0 0
        %497 = vmatpush1.bf16.xpose.msra.mxu0 0
        %498 = vmatprep.subr.bf16.mxu0 0
        %499 = vmatpush1.bf16.xpose.msra.mxu0 0
        %500 = vmatprep.subr.bf16.mxu0 0
        %501 = vmatpush1.bf16.xpose.msra.mxu0 0
        %502 = vmatprep.subr.bf16.mxu0 0
        %503 = vmatpush1.bf16.xpose.msra.mxu0 0
        %504 = vmatprep.subr.bf16.mxu0 0
        %505 = vmatpush1.bf16.xpose.msra.mxu0 0
        %506 = vmatprep.subr.bf16.mxu0 0
        %507 = vmatpush1.bf16.xpose.msra.mxu0 0
        %508 = vmatprep.subr.bf16.mxu0 0
        %509 = vmatpush1.bf16.xpose.msra.mxu0 0
        %510 = vmatprep.subr.bf16.mxu0 0
        %511 = vmatpush1.bf16.xpose.msra.mxu0 0
        %512 = vmatprep.subr.bf16.mxu0 0
        %513 = vmatpush1.bf16.xpose.msra.mxu0 0
        %514 = vmatprep.subr.bf16.mxu0 0
        %515 = vmatpush1.bf16.xpose.msra.mxu0 0
        %516 = vmatprep.subr.bf16.mxu0 0
        %517 = vmatpush1.bf16.xpose.msra.mxu0 0
        %518 = vmatprep.subr.bf16.mxu0 0
        %519 = vmatpush1.bf16.xpose.msra.mxu0 0
        %520 = vmatprep.subr.bf16.mxu0 0
        %521 = vmatpush1.bf16.xpose.msra.mxu0 0
        %522 = vmatprep.subr.bf16.mxu0 0
        %523 = vmatpush1.bf16.xpose.msra.mxu0 0
        %524 = vmatprep.subr.bf16.mxu0 0
        %525 = vmatpush1.bf16.xpose.msra.mxu0 0
        %526 = vmatprep.mubr.bf16.mxu0 0
        %527 = vmatmul.mubr.bf16.gmra.mrb[0].mxu0 %v489
        %v528 = vpop.f32.mrb[0].mxu0
        %v529 = vadd.f32 0.0, %v528
        %v530 = vpop.f32.mrb[0].mxu0
        %v531 = vpop.f32.mrb[0].mxu0
        %v532 = vadd.f32 0.0, %v531
        %v533 = vpop.f32.mrb[0].mxu0
        %534 = vdwg.mxu0
        %v535 = vmul.f32 %v529, 0.35355338
        %v536 = vmul.f32 %v532, 0.35355338
        %v537 = vadd.f32 %v535, %v481
        %v538 = vadd.f32 %v536, %v482
        %vm539 = vcmask 130048
        %v540 = vsel %vm539, %v537, -inf
        %541 = vmax.xlane.f32.xlu0 %v540
        %v542 = vpop.xlane.xlu0 %541
        %v543 = vsel %vm539, %v538, -inf
        %544 = vmax.xlane.f32.xlu0 %v543
        %v545 = vpop.xlane.xlu0 %544
        %v546 = vsub.f32 %v537, %v542
        %v547 = vsub.f32 %v538, %v545
        %v548 = vmul.f32 %v546, 1.442695
        %v549 = vpow.pop %v548
        %v550 = vmul.f32 %v547, 1.442695
        %v551 = vpow.pop %v550
        %v552 = vsel %vm539, %v549, 0.0
        %553 = vadd.xlane.f32.xlu0 %v552
        %v554 = vpop.xlane.xlu0 %553
        %v555 = vsel %vm539, %v551, 0.0
        %556 = vadd.xlane.f32.xlu0 %v555
        %v557 = vpop.xlane.xlu0 %556
        %v558 = vrcp.pop %v554
        %v559 = vrcp.pop %v557
        %v560 = vmul.f32 %v549, %v558
        %v561 = vmul.f32 %v551, %v559
        %v562 = vpack.c.bf16 %v561, %v560
        %563 = vrot.lane.b32.xlu0 %v483, 64
        %v564 = vpop.permute.xlu0 %563
        %v567 = vsel %vm539, %v562, 0
        %569 = vmatprep.subr.bf16.mxu0 0
        %570 = vmatpush1.bf16.msra.mxu0 %v564
        %571 = vmatprep.subr.bf16.mxu0 0
        %572 = vmatpush1.bf16.msra.mxu0 0
        %573 = vmatprep.subr.bf16.mxu0 0
        %574 = vmatpush1.bf16.msra.mxu0 0
        %575 = vmatprep.subr.bf16.mxu0 0
        %576 = vmatpush1.bf16.msra.mxu0 0
        %577 = vmatprep.subr.bf16.mxu0 0
        %578 = vmatpush1.bf16.msra.mxu0 0
        %579 = vmatprep.subr.bf16.mxu0 0
        %580 = vmatpush1.bf16.msra.mxu0 0
        %581 = vmatprep.subr.bf16.mxu0 0
        %582 = vmatpush1.bf16.msra.mxu0 0
        %583 = vmatprep.subr.bf16.mxu0 0
        %584 = vmatpush1.bf16.msra.mxu0 0
        %585 = vmatprep.subr.bf16.mxu0 0
        %586 = vmatpush1.bf16.msra.mxu0 0
        %587 = vmatprep.subr.bf16.mxu0 0
        %588 = vmatpush1.bf16.msra.mxu0 0
        %589 = vmatprep.subr.bf16.mxu0 0
        %590 = vmatpush1.bf16.msra.mxu0 0
        %591 = vmatprep.subr.bf16.mxu0 0
        %592 = vmatpush1.bf16.msra.mxu0 0
        %593 = vmatprep.subr.bf16.mxu0 0
        %594 = vmatpush1.bf16.msra.mxu0 0
        %595 = vmatprep.subr.bf16.mxu0 0
        %596 = vmatpush1.bf16.msra.mxu0 0
        %597 = vmatprep.subr.bf16.mxu0 0
        %598 = vmatpush1.bf16.msra.mxu0 0
        %599 = vmatprep.subr.bf16.mxu0 0
        %600 = vmatpush1.bf16.msra.mxu0 0
        %601 = vmatprep.mubr.bf16.mxu0 0
        %602 = vmatmul.mubr.bf16.gmra.mrb[0].mxu0 %v567
        %v603 = vpop.f32.mrb[0].mxu0
        %v604 = vadd.f32 0.0, %v603
        %v605 = vpop.f32.mrb[0].mxu0
        %v606 = vpop.f32.mrb[0].mxu0
        %v607 = vadd.f32 0.0, %v606
        %v608 = vpop.f32.mrb[0].mxu0
        %609 = vdwg.mxu0
        %v610 = vpack.c.bf16 %v607, %v604
        %v611 = vld [vmem:[%s340] sm:$0xf]
        %612 = vrot.lane.b32.xlu0 %v483, 120
        %v613 = vpop.permute.xlu0 %612
        %614 = vrot.lane.b32.xlu0 %v483, 88
        %v615 = vpop.permute.xlu0 %614
        %v617 = vsel %vm487, %v613, 0
        %v620 = vsel %vm487, %v615, 0
        %622 = vmatprep.subr.bf16.mxu0 0
        %623 = vmatpush1.bf16.xpose.msra.mxu0 %v620
        %624 = vmatprep.subr.bf16.mxu0 0
        %625 = vmatpush1.bf16.xpose.msra.mxu0 0
        %626 = vmatprep.subr.bf16.mxu0 0
        %627 = vmatpush1.bf16.xpose.msra.mxu0 0
        %628 = vmatprep.subr.bf16.mxu0 0
        %629 = vmatpush1.bf16.xpose.msra.mxu0 0
        %630 = vmatprep.subr.bf16.mxu0 0
        %631 = vmatpush1.bf16.xpose.msra.mxu0 0
        %632 = vmatprep.subr.bf16.mxu0 0
        %633 = vmatpush1.bf16.xpose.msra.mxu0 0
        %634 = vmatprep.subr.bf16.mxu0 0
        %635 = vmatpush1.bf16.xpose.msra.mxu0 0
        %636 = vmatprep.subr.bf16.mxu0 0
        %637 = vmatpush1.bf16.xpose.msra.mxu0 0
        %638 = vmatprep.subr.bf16.mxu0 0
        %639 = vmatpush1.bf16.xpose.msra.mxu0 0
        %640 = vmatprep.subr.bf16.mxu0 0
        %641 = vmatpush1.bf16.xpose.msra.mxu0 0
        %642 = vmatprep.subr.bf16.mxu0 0
        %643 = vmatpush1.bf16.xpose.msra.mxu0 0
        %644 = vmatprep.subr.bf16.mxu0 0
        %645 = vmatpush1.bf16.xpose.msra.mxu0 0
        %646 = vmatprep.subr.bf16.mxu0 0
        %647 = vmatpush1.bf16.xpose.msra.mxu0 0
        %648 = vmatprep.subr.bf16.mxu0 0
        %649 = vmatpush1.bf16.xpose.msra.mxu0 0
        %650 = vmatprep.subr.bf16.mxu0 0
        %651 = vmatpush1.bf16.xpose.msra.mxu0 0
        %652 = vmatprep.subr.bf16.mxu0 0
        %653 = vmatpush1.bf16.xpose.msra.mxu0 0
        %654 = vmatprep.mubr.bf16.mxu0 0
        %655 = vmatmul.mubr.bf16.gmra.mrb[0].mxu0 %v617
        %v656 = vpop.f32.mrb[0].mxu0
        %v657 = vadd.f32 0.0, %v656
        %v658 = vpop.f32.mrb[0].mxu0
        %v659 = vpop.f32.mrb[0].mxu0
        %v660 = vadd.f32 0.0, %v659
        %v661 = vpop.f32.mrb[0].mxu0
        %662 = vdwg.mxu0
        %v663 = vmul.f32 %v657, 0.35355338
        %v664 = vmul.f32 %v660, 0.35355338
        %v665 = vadd.f32 %v663, %v481
        %v666 = vadd.f32 %v664, %v482
        %v667 = vsel %vm539, %v665, -inf
        %668 = vmax.xlane.f32.xlu0 %v667
        %v669 = vpop.xlane.xlu0 %668
        %v670 = vsel %vm539, %v666, -inf
        %671 = vmax.xlane.f32.xlu0 %v670
        %v672 = vpop.xlane.xlu0 %671
        %v673 = vsub.f32 %v665, %v669
        %v674 = vsub.f32 %v666, %v672
        %v675 = vmul.f32 %v673, 1.442695
        %v676 = vpow.pop %v675
        %v677 = vmul.f32 %v674, 1.442695
        %v678 = vpow.pop %v677
        %v679 = vsel %vm539, %v676, 0.0
        %680 = vadd.xlane.f32.xlu0 %v679
        %v681 = vpop.xlane.xlu0 %680
        %v682 = vsel %vm539, %v678, 0.0
        %683 = vadd.xlane.f32.xlu0 %v682
        %v684 = vpop.xlane.xlu0 %683
        %v685 = vrcp.pop %v681
        %v686 = vrcp.pop %v684
        %v687 = vmul.f32 %v676, %v685
        %v688 = vmul.f32 %v678, %v686
        %v689 = vpack.c.bf16 %v688, %v687
        %690 = vrot.lane.b32.xlu0 %v483, 56
        %v691 = vpop.permute.xlu0 %690
        %v694 = vsel %vm539, %v689, 0
        %696 = vmatprep.subr.bf16.mxu0 0
        %697 = vmatpush1.bf16.msra.mxu0 %v691
        %698 = vmatprep.subr.bf16.mxu0 0
        %699 = vmatpush1.bf16.msra.mxu0 0
        %700 = vmatprep.subr.bf16.mxu0 0
        %701 = vmatpush1.bf16.msra.mxu0 0
        %702 = vmatprep.subr.bf16.mxu0 0
        %703 = vmatpush1.bf16.msra.mxu0 0
        %704 = vmatprep.subr.bf16.mxu0 0
        %705 = vmatpush1.bf16.msra.mxu0 0
        %706 = vmatprep.subr.bf16.mxu0 0
        %707 = vmatpush1.bf16.msra.mxu0 0
        %708 = vmatprep.subr.bf16.mxu0 0
        %709 = vmatpush1.bf16.msra.mxu0 0
        %710 = vmatprep.subr.bf16.mxu0 0
        %711 = vmatpush1.bf16.msra.mxu0 0
        %712 = vmatprep.subr.bf16.mxu0 0
        %713 = vmatpush1.bf16.msra.mxu0 0
        %714 = vmatprep.subr.bf16.mxu0 0
        %715 = vmatpush1.bf16.msra.mxu0 0
        %716 = vmatprep.subr.bf16.mxu0 0
        %717 = vmatpush1.bf16.msra.mxu0 0
        %718 = vmatprep.subr.bf16.mxu0 0
        %719 = vmatpush1.bf16.msra.mxu0 0
        %720 = vmatprep.subr.bf16.mxu0 0
        %721 = vmatpush1.bf16.msra.mxu0 0
        %722 = vmatprep.subr.bf16.mxu0 0
        %723 = vmatpush1.bf16.msra.mxu0 0
        %724 = vmatprep.subr.bf16.mxu0 0
        %725 = vmatpush1.bf16.msra.mxu0 0
        %726 = vmatprep.subr.bf16.mxu0 0
        %727 = vmatpush1.bf16.msra.mxu0 0
        %728 = vmatprep.mubr.bf16.mxu0 0
        %729 = vmatmul.mubr.bf16.gmra.mrb[0].mxu0 %v694
        %v730 = vpop.f32.mrb[0].mxu0
        %v731 = vadd.f32 0.0, %v730
        %v732 = vpop.f32.mrb[0].mxu0
        %v733 = vpop.f32.mrb[0].mxu0
        %v734 = vadd.f32 0.0, %v733
        %v735 = vpop.f32.mrb[0].mxu0
        %736 = vdwg.mxu0
        %v737 = vpack.c.bf16 %v734, %v731
        %s738 = scalar_lea.vmem %s340, 4
        %v739 = vld [vmem:[%s738] sm:$0xf]
        %v741 = vsel %vm487, %v737, 0
        %vm743 = vcmask 1043456
        %v745 = vsel %vm743, %v739, 0
        %747 = vmatprep.subr.bf16.mxu0 0
        %748 = vmatpush1.bf16.msra.mxu0 %v745
        %749 = vmatprep.subr.bf16.mxu0 0
        %750 = vmatpush1.bf16.msra.mxu0 0
        %751 = vmatprep.subr.bf16.mxu0 0
        %752 = vmatpush1.bf16.msra.mxu0 0
        %753 = vmatprep.subr.bf16.mxu0 0
        %754 = vmatpush1.bf16.msra.mxu0 0
        %755 = vmatprep.subr.bf16.mxu0 0
        %756 = vmatpush1.bf16.msra.mxu0 0
        %757 = vmatprep.subr.bf16.mxu0 0
        %758 = vmatpush1.bf16.msra.mxu0 0
        %759 = vmatprep.subr.bf16.mxu0 0
        %760 = vmatpush1.bf16.msra.mxu0 0
        %761 = vmatprep.subr.bf16.mxu0 0
        %762 = vmatpush1.bf16.msra.mxu0 0
        %763 = vmatprep.subr.bf16.mxu0 0
        %764 = vmatpush1.bf16.msra.mxu0 0
        %765 = vmatprep.subr.bf16.mxu0 0
        %766 = vmatpush1.bf16.msra.mxu0 0
        %767 = vmatprep.subr.bf16.mxu0 0
        %768 = vmatpush1.bf16.msra.mxu0 0
        %769 = vmatprep.subr.bf16.mxu0 0
        %770 = vmatpush1.bf16.msra.mxu0 0
        %771 = vmatprep.subr.bf16.mxu0 0
        %772 = vmatpush1.bf16.msra.mxu0 0
        %773 = vmatprep.subr.bf16.mxu0 0
        %774 = vmatpush1.bf16.msra.mxu0 0
        %775 = vmatprep.subr.bf16.mxu0 0
        %776 = vmatpush1.bf16.msra.mxu0 0
        %777 = vmatprep.subr.bf16.mxu0 0
        %778 = vmatpush1.bf16.msra.mxu0 0
        %779 = vmatprep.mubr.bf16.mxu0 0
        %780 = vmatmul.mubr.bf16.gmra.mrb[0].mxu0 %v741
        %v781 = vpop.f32.mrb[0].mxu0
        %v782 = vadd.f32 0.0, %v781
        %v783 = vpop.f32.mrb[0].mxu0
        %v784 = vpop.f32.mrb[0].mxu0
        %v785 = vadd.f32 0.0, %v784
        %v786 = vpop.f32.mrb[0].mxu0
        %787 = vdwg.mxu0
        %v789 = vsel %vm487, %v610, 0
        %v792 = vsel %vm743, %v611, 0
        %794 = vmatprep.subr.bf16.mxu0 0
        %795 = vmatpush1.bf16.msra.mxu0 %v792
        %796 = vmatprep.subr.bf16.mxu0 0
        %797 = vmatpush1.bf16.msra.mxu0 0
        %798 = vmatprep.subr.bf16.mxu0 0
        %799 = vmatpush1.bf16.msra.mxu0 0
        %800 = vmatprep.subr.bf16.mxu0 0
        %801 = vmatpush1.bf16.msra.mxu0 0
        %802 = vmatprep.subr.bf16.mxu0 0
        %803 = vmatpush1.bf16.msra.mxu0 0
        %804 = vmatprep.subr.bf16.mxu0 0
        %805 = vmatpush1.bf16.msra.mxu0 0
        %806 = vmatprep.subr.bf16.mxu0 0
        %807 = vmatpush1.bf16.msra.mxu0 0
        %808 = vmatprep.subr.bf16.mxu0 0
        %809 = vmatpush1.bf16.msra.mxu0 0
        %810 = vmatprep.subr.bf16.mxu0 0
        %811 = vmatpush1.bf16.msra.mxu0 0
        %812 = vmatprep.subr.bf16.mxu0 0
        %813 = vmatpush1.bf16.msra.mxu0 0
        %814 = vmatprep.subr.bf16.mxu0 0
        %815 = vmatpush1.bf16.msra.mxu0 0
        %816 = vmatprep.subr.bf16.mxu0 0
        %817 = vmatpush1.bf16.msra.mxu0 0
        %818 = vmatprep.subr.bf16.mxu0 0
        %819 = vmatpush1.bf16.msra.mxu0 0
        %820 = vmatprep.subr.bf16.mxu0 0
        %821 = vmatpush1.bf16.msra.mxu0 0
        %822 = vmatprep.subr.bf16.mxu0 0
        %823 = vmatpush1.bf16.msra.mxu0 0
        %824 = vmatprep.subr.bf16.mxu0 0
        %825 = vmatpush1.bf16.msra.mxu0 0
        %826 = vmatprep.mubr.bf16.mxu0 0
        %827 = vmatmul.mubr.bf16.gmra.mrb[0].mxu0 %v789
        %v828 = vpop.f32.mrb[0].mxu0
        %v829 = vadd.f32 %v782, %v828
        %v830 = vpop.f32.mrb[0].mxu0
        %v831 = vpop.f32.mrb[0].mxu0
        %v832 = vadd.f32 %v785, %v831
        %v833 = vpop.f32.mrb[0].mxu0
        %834 = vdwg.mxu0
        %835 = vrot.lane.b32.xlu0 %v483, 112
        %v836 = vpop.permute.xlu0 %835
        %837 = vrot.lane.b32.xlu0 %v483, 80
        %v838 = vpop.permute.xlu0 %837
        %v840 = vsel %vm487, %v836, 0
        %v843 = vsel %vm487, %v838, 0
        %845 = vmatprep.subr.bf16.mxu0 0
        %846 = vmatpush1.bf16.xpose.msra.mxu0 %v843
        %847 = vmatprep.subr.bf16.mxu0 0
        %848 = vmatpush1.bf16.xpose.msra.mxu0 0
        %849 = vmatprep.subr.bf16.mxu0 0
        %850 = vmatpush1.bf16.xpose.msra.mxu0 0
        %851 = vmatprep.subr.bf16.mxu0 0
        %852 = vmatpush1.bf16.xpose.msra.mxu0 0
        %853 = vmatprep.subr.bf16.mxu0 0
        %854 = vmatpush1.bf16.xpose.msra.mxu0 0
        %855 = vmatprep.subr.bf16.mxu0 0
        %856 = vmatpush1.bf16.xpose.msra.mxu0 0
        %857 = vmatprep.subr.bf16.mxu0 0
        %858 = vmatpush1.bf16.xpose.msra.mxu0 0
        %859 = vmatprep.subr.bf16.mxu0 0
        %860 = vmatpush1.bf16.xpose.msra.mxu0 0
        %861 = vmatprep.subr.bf16.mxu0 0
        %862 = vmatpush1.bf16.xpose.msra.mxu0 0
        %863 = vmatprep.subr.bf16.mxu0 0
        %864 = vmatpush1.bf16.xpose.msra.mxu0 0
        %865 = vmatprep.subr.bf16.mxu0 0
        %866 = vmatpush1.bf16.xpose.msra.mxu0 0
        %867 = vmatprep.subr.bf16.mxu0 0
        %868 = vmatpush1.bf16.xpose.msra.mxu0 0
        %869 = vmatprep.subr.bf16.mxu0 0
        %870 = vmatpush1.bf16.xpose.msra.mxu0 0
        %871 = vmatprep.subr.bf16.mxu0 0
        %872 = vmatpush1.bf16.xpose.msra.mxu0 0
        %873 = vmatprep.subr.bf16.mxu0 0
        %874 = vmatpush1.bf16.xpose.msra.mxu0 0
        %875 = vmatprep.subr.bf16.mxu0 0
        %876 = vmatpush1.bf16.xpose.msra.mxu0 0
        %877 = vmatprep.mubr.bf16.mxu0 0
        %878 = vmatmul.mubr.bf16.gmra.mrb[0].mxu0 %v840
        %v879 = vpop.f32.mrb[0].mxu0
        %v880 = vadd.f32 0.0, %v879
        %v881 = vpop.f32.mrb[0].mxu0
        %v882 = vpop.f32.mrb[0].mxu0
        %v883 = vadd.f32 0.0, %v882
        %v884 = vpop.f32.mrb[0].mxu0
        %885 = vdwg.mxu0
        %v886 = vmul.f32 %v880, 0.35355338
        %v887 = vmul.f32 %v883, 0.35355338
        %v888 = vadd.f32 %v886, %v481
        %v889 = vadd.f32 %v887, %v482
        %v890 = vsel %vm539, %v888, -inf
        %891 = vmax.xlane.f32.xlu0 %v890
        %v892 = vpop.xlane.xlu0 %891
        %v893 = vsel %vm539, %v889, -inf
        %894 = vmax.xlane.f32.xlu0 %v893
        %v895 = vpop.xlane.xlu0 %894
        %v896 = vsub.f32 %v888, %v892
        %v897 = vsub.f32 %v889, %v895
        %v898 = vmul.f32 %v896, 1.442695
        %v899 = vpow.pop %v898
        %v900 = vmul.f32 %v897, 1.442695
        %v901 = vpow.pop %v900
        %v902 = vsel %vm539, %v899, 0.0
        %903 = vadd.xlane.f32.xlu0 %v902
        %v904 = vpop.xlane.xlu0 %903
        %v905 = vsel %vm539, %v901, 0.0
        %906 = vadd.xlane.f32.xlu0 %v905
        %v907 = vpop.xlane.xlu0 %906
        %v908 = vrcp.pop %v904
        %v909 = vrcp.pop %v907
        %v910 = vmul.f32 %v899, %v908
        %v911 = vmul.f32 %v901, %v909
        %v912 = vpack.c.bf16 %v911, %v910
        %913 = vrot.lane.b32.xlu0 %v483, 48
        %v914 = vpop.permute.xlu0 %913
        %v917 = vsel %vm539, %v912, 0
        %919 = vmatprep.subr.bf16.mxu0 0
        %920 = vmatpush1.bf16.msra.mxu0 %v914
        %921 = vmatprep.subr.bf16.mxu0 0
        %922 = vmatpush1.bf16.msra.mxu0 0
        %923 = vmatprep.subr.bf16.mxu0 0
        %924 = vmatpush1.bf16.msra.mxu0 0
        %925 = vmatprep.subr.bf16.mxu0 0
        %926 = vmatpush1.bf16.msra.mxu0 0
        %927 = vmatprep.subr.bf16.mxu0 0
        %928 = vmatpush1.bf16.msra.mxu0 0
        %929 = vmatprep.subr.bf16.mxu0 0
        %930 = vmatpush1.bf16.msra.mxu0 0
        %931 = vmatprep.subr.bf16.mxu0 0
        %932 = vmatpush1.bf16.msra.mxu0 0
        %933 = vmatprep.subr.bf16.mxu0 0
        %934 = vmatpush1.bf16.msra.mxu0 0
        %935 = vmatprep.subr.bf16.mxu0 0
        %936 = vmatpush1.bf16.msra.mxu0 0
        %937 = vmatprep.subr.bf16.mxu0 0
        %938 = vmatpush1.bf16.msra.mxu0 0
        %939 = vmatprep.subr.bf16.mxu0 0
        %940 = vmatpush1.bf16.msra.mxu0 0
        %941 = vmatprep.subr.bf16.mxu0 0
        %942 = vmatpush1.bf16.msra.mxu0 0
        %943 = vmatprep.subr.bf16.mxu0 0
        %944 = vmatpush1.bf16.msra.mxu0 0
        %945 = vmatprep.subr.bf16.mxu0 0
        %946 = vmatpush1.bf16.msra.mxu0 0
        %947 = vmatprep.subr.bf16.mxu0 0
        %948 = vmatpush1.bf16.msra.mxu0 0
        %949 = vmatprep.subr.bf16.mxu0 0
        %950 = vmatpush1.bf16.msra.mxu0 0
        %951 = vmatprep.mubr.bf16.mxu0 0
        %952 = vmatmul.mubr.bf16.gmra.mrb[0].mxu0 %v917
        %v953 = vpop.f32.mrb[0].mxu0
        %v954 = vadd.f32 0.0, %v953
        %v955 = vpop.f32.mrb[0].mxu0
        %v956 = vpop.f32.mrb[0].mxu0
        %v957 = vadd.f32 0.0, %v956
        %v958 = vpop.f32.mrb[0].mxu0
        %959 = vdwg.mxu0
        %v960 = vpack.c.bf16 %v957, %v954
        %s961 = scalar_lea.vmem %s340, 8
        %v962 = vld [vmem:[%s961] sm:$0xf]
        %v964 = vsel %vm487, %v960, 0
        %v967 = vsel %vm743, %v962, 0
        %969 = vmatprep.subr.bf16.mxu0 0
        %970 = vmatpush1.bf16.msra.mxu0 %v967
        %971 = vmatprep.subr.bf16.mxu0 0
        %972 = vmatpush1.bf16.msra.mxu0 0
        %973 = vmatprep.subr.bf16.mxu0 0
        %974 = vmatpush1.bf16.msra.mxu0 0
        %975 = vmatprep.subr.bf16.mxu0 0
        %976 = vmatpush1.bf16.msra.mxu0 0
        %977 = vmatprep.subr.bf16.mxu0 0
        %978 = vmatpush1.bf16.msra.mxu0 0
        %979 = vmatprep.subr.bf16.mxu0 0
        %980 = vmatpush1.bf16.msra.mxu0 0
        %981 = vmatprep.subr.bf16.mxu0 0
        %982 = vmatpush1.bf16.msra.mxu0 0
        %983 = vmatprep.subr.bf16.mxu0 0
        %984 = vmatpush1.bf16.msra.mxu0 0
        %985 = vmatprep.subr.bf16.mxu0 0
        %986 = vmatpush1.bf16.msra.mxu0 0
        %987 = vmatprep.subr.bf16.mxu0 0
        %988 = vmatpush1.bf16.msra.mxu0 0
        %989 = vmatprep.subr.bf16.mxu0 0
        %990 = vmatpush1.bf16.msra.mxu0 0
        %991 = vmatprep.subr.bf16.mxu0 0
        %992 = vmatpush1.bf16.msra.mxu0 0
        %993 = vmatprep.subr.bf16.mxu0 0
        %994 = vmatpush1.bf16.msra.mxu0 0
        %995 = vmatprep.subr.bf16.mxu0 0
        %996 = vmatpush1.bf16.msra.mxu0 0
        %997 = vmatprep.subr.bf16.mxu0 0
        %998 = vmatpush1.bf16.msra.mxu0 0
        %999 = vmatprep.subr.bf16.mxu0 0
        %1000 = vmatpush1.bf16.msra.mxu0 0
        %1001 = vmatprep.mubr.bf16.mxu0 0
        %1002 = vmatmul.mubr.bf16.gmra.mrb[0].mxu0 %v964
        %v1003 = vpop.f32.mrb[0].mxu0
        %v1004 = vadd.f32 0.0, %v1003
        %v1005 = vpop.f32.mrb[0].mxu0
        %v1006 = vpop.f32.mrb[0].mxu0
        %v1007 = vadd.f32 0.0, %v1006
        %v1008 = vpop.f32.mrb[0].mxu0
        %1009 = vdwg.mxu0
        %v1010 = vadd.f32 %v829, %v1004
        %v1011 = vadd.f32 %v832, %v1007
        %1012 = vrot.lane.b32.xlu0 %v483, 104
        %v1013 = vpop.permute.xlu0 %1012
        %1014 = vrot.lane.b32.xlu0 %v483, 72
        %v1015 = vpop.permute.xlu0 %1014
        %v1017 = vsel %vm487, %v1013, 0
        %v1020 = vsel %vm487, %v1015, 0
        %1022 = vmatprep.subr.bf16.mxu0 0
        %1023 = vmatpush1.bf16.xpose.msra.mxu0 %v1020
        %1024 = vmatprep.subr.bf16.mxu0 0
        %1025 = vmatpush1.bf16.xpose.msra.mxu0 0
        %1026 = vmatprep.subr.bf16.mxu0 0
        %1027 = vmatpush1.bf16.xpose.msra.mxu0 0
        %1028 = vmatprep.subr.bf16.mxu0 0
        %1029 = vmatpush1.bf16.xpose.msra.mxu0 0
        %1030 = vmatprep.subr.bf16.mxu0 0
        %1031 = vmatpush1.bf16.xpose.msra.mxu0 0
        %1032 = vmatprep.subr.bf16.mxu0 0
        %1033 = vmatpush1.bf16.xpose.msra.mxu0 0
        %1034 = vmatprep.subr.bf16.mxu0 0
        %1035 = vmatpush1.bf16.xpose.msra.mxu0 0
        %1036 = vmatprep.subr.bf16.mxu0 0
        %1037 = vmatpush1.bf16.xpose.msra.mxu0 0
        %1038 = vmatprep.subr.bf16.mxu0 0
        %1039 = vmatpush1.bf16.xpose.msra.mxu0 0
        %1040 = vmatprep.subr.bf16.mxu0 0
        %1041 = vmatpush1.bf16.xpose.msra.mxu0 0
        %1042 = vmatprep.subr.bf16.mxu0 0
        %1043 = vmatpush1.bf16.xpose.msra.mxu0 0
        %1044 = vmatprep.subr.bf16.mxu0 0
        %1045 = vmatpush1.bf16.xpose.msra.mxu0 0
        %1046 = vmatprep.subr.bf16.mxu0 0
        %1047 = vmatpush1.bf16.xpose.msra.mxu0 0
        %1048 = vmatprep.subr.bf16.mxu0 0
        %1049 = vmatpush1.bf16.xpose.msra.mxu0 0
        %1050 = vmatprep.subr.bf16.mxu0 0
        %1051 = vmatpush1.bf16.xpose.msra.mxu0 0
        %1052 = vmatprep.subr.bf16.mxu0 0
        %1053 = vmatpush1.bf16.xpose.msra.mxu0 0
        %1054 = vmatprep.mubr.bf16.mxu0 0
        %1055 = vmatmul.mubr.bf16.gmra.mrb[0].mxu0 %v1017
        %v1056 = vpop.f32.mrb[0].mxu0
        %v1057 = vadd.f32 0.0, %v1056
        %v1058 = vpop.f32.mrb[0].mxu0
        %v1059 = vpop.f32.mrb[0].mxu0
        %v1060 = vadd.f32 0.0, %v1059
        %v1061 = vpop.f32.mrb[0].mxu0
        %1062 = vdwg.mxu0
        %v1063 = vmul.f32 %v1057, 0.35355338
        %v1064 = vmul.f32 %v1060, 0.35355338
        %v1065 = vadd.f32 %v1063, %v481
        %v1066 = vadd.f32 %v1064, %v482
        %v1067 = vsel %vm539, %v1065, -inf
        %1068 = vmax.xlane.f32.xlu0 %v1067
        %v1069 = vpop.xlane.xlu0 %1068
        %v1070 = vsel %vm539, %v1066, -inf
        %1071 = vmax.xlane.f32.xlu0 %v1070
        %v1072 = vpop.xlane.xlu0 %1071
        %v1073 = vsub.f32 %v1065, %v1069
        %v1074 = vsub.f32 %v1066, %v1072
        %v1075 = vmul.f32 %v1073, 1.442695
        %v1076 = vpow.pop %v1075
        %v1077 = vmul.f32 %v1074, 1.442695
        %v1078 = vpow.pop %v1077
        %v1079 = vsel %vm539, %v1076, 0.0
        %1080 = vadd.xlane.f32.xlu0 %v1079
        %v1081 = vpop.xlane.xlu0 %1080
        %v1082 = vsel %vm539, %v1078, 0.0
        %1083 = vadd.xlane.f32.xlu0 %v1082
        %v1084 = vpop.xlane.xlu0 %1083
        %v1085 = vrcp.pop %v1081
        %v1086 = vrcp.pop %v1084
        %v1087 = vmul.f32 %v1076, %v1085
        %v1088 = vmul.f32 %v1078, %v1086
        %v1089 = vpack.c.bf16 %v1088, %v1087
        %1090 = vrot.lane.b32.xlu0 %v483, 40
        %v1091 = vpop.permute.xlu0 %1090
        %v1094 = vsel %vm539, %v1089, 0
        %1096 = vmatprep.subr.bf16.mxu0 0
        %1097 = vmatpush1.bf16.msra.mxu0 %v1091
        %1098 = vmatprep.subr.bf16.mxu0 0
        %1099 = vmatpush1.bf16.msra.mxu0 0
        %1100 = vmatprep.subr.bf16.mxu0 0
        %1101 = vmatpush1.bf16.msra.mxu0 0
        %1102 = vmatprep.subr.bf16.mxu0 0
        %1103 = vmatpush1.bf16.msra.mxu0 0
        %1104 = vmatprep.subr.bf16.mxu0 0
        %1105 = vmatpush1.bf16.msra.mxu0 0
        %1106 = vmatprep.subr.bf16.mxu0 0
        %1107 = vmatpush1.bf16.msra.mxu0 0
        %1108 = vmatprep.subr.bf16.mxu0 0
        %1109 = vmatpush1.bf16.msra.mxu0 0
        %1110 = vmatprep.subr.bf16.mxu0 0
        %1111 = vmatpush1.bf16.msra.mxu0 0
        %1112 = vmatprep.subr.bf16.mxu0 0
        %1113 = vmatpush1.bf16.msra.mxu0 0
        %1114 = vmatprep.subr.bf16.mxu0 0
        %1115 = vmatpush1.bf16.msra.mxu0 0
        %1116 = vmatprep.subr.bf16.mxu0 0
        %1117 = vmatpush1.bf16.msra.mxu0 0
        %1118 = vmatprep.subr.bf16.mxu0 0
        %1119 = vmatpush1.bf16.msra.mxu0 0
        %1120 = vmatprep.subr.bf16.mxu0 0
        %1121 = vmatpush1.bf16.msra.mxu0 0
        %1122 = vmatprep.subr.bf16.mxu0 0
        %1123 = vmatpush1.bf16.msra.mxu0 0
        %1124 = vmatprep.subr.bf16.mxu0 0
        %1125 = vmatpush1.bf16.msra.mxu0 0
        %1126 = vmatprep.subr.bf16.mxu0 0
        %1127 = vmatpush1.bf16.msra.mxu0 0
        %1128 = vmatprep.mubr.bf16.mxu0 0
        %1129 = vmatmul.mubr.bf16.gmra.mrb[0].mxu0 %v1094
        %v1130 = vpop.f32.mrb[0].mxu0
        %v1131 = vadd.f32 0.0, %v1130
        %v1132 = vpop.f32.mrb[0].mxu0
        %v1133 = vpop.f32.mrb[0].mxu0
        %v1134 = vadd.f32 0.0, %v1133
        %v1135 = vpop.f32.mrb[0].mxu0
        %1136 = vdwg.mxu0
        %v1137 = vpack.c.bf16 %v1134, %v1131
        %s1138 = scalar_lea.vmem %s340, 12
        %v1139 = vld [vmem:[%s1138] sm:$0xf]
        %v1141 = vsel %vm487, %v1137, 0
        %v1144 = vsel %vm743, %v1139, 0
        %1146 = vmatprep.subr.bf16.mxu0 0
        %1147 = vmatpush1.bf16.msra.mxu0 %v1144
        %1148 = vmatprep.subr.bf16.mxu0 0
        %1149 = vmatpush1.bf16.msra.mxu0 0
        %1150 = vmatprep.subr.bf16.mxu0 0
        %1151 = vmatpush1.bf16.msra.mxu0 0
        %1152 = vmatprep.subr.bf16.mxu0 0
        %1153 = vmatpush1.bf16.msra.mxu0 0
        %1154 = vmatprep.subr.bf16.mxu0 0
        %1155 = vmatpush1.bf16.msra.mxu0 0
        %1156 = vmatprep.subr.bf16.mxu0 0
        %1157 = vmatpush1.bf16.msra.mxu0 0
        %1158 = vmatprep.subr.bf16.mxu0 0
        %1159 = vmatpush1.bf16.msra.mxu0 0
        %1160 = vmatprep.subr.bf16.mxu0 0
        %1161 = vmatpush1.bf16.msra.mxu0 0
        %1162 = vmatprep.subr.bf16.mxu0 0
        %1163 = vmatpush1.bf16.msra.mxu0 0
        %1164 = vmatprep.subr.bf16.mxu0 0
        %1165 = vmatpush1.bf16.msra.mxu0 0
        %1166 = vmatprep.subr.bf16.mxu0 0
        %1167 = vmatpush1.bf16.msra.mxu0 0
        %1168 = vmatprep.subr.bf16.mxu0 0
        %1169 = vmatpush1.bf16.msra.mxu0 0
        %1170 = vmatprep.subr.bf16.mxu0 0
        %1171 = vmatpush1.bf16.msra.mxu0 0
        %1172 = vmatprep.subr.bf16.mxu0 0
        %1173 = vmatpush1.bf16.msra.mxu0 0
        %1174 = vmatprep.subr.bf16.mxu0 0
        %1175 = vmatpush1.bf16.msra.mxu0 0
        %1176 = vmatprep.subr.bf16.mxu0 0
        %1177 = vmatpush1.bf16.msra.mxu0 0
        %1178 = vmatprep.mubr.bf16.mxu0 0
        %1179 = vmatmul.mubr.bf16.gmra.mrb[0].mxu0 %v1141
        %v1180 = vpop.f32.mrb[0].mxu0
        %v1181 = vadd.f32 0.0, %v1180
        %v1182 = vpop.f32.mrb[0].mxu0
        %v1183 = vpop.f32.mrb[0].mxu0
        %v1184 = vadd.f32 0.0, %v1183
        %v1185 = vpop.f32.mrb[0].mxu0
        %1186 = vdwg.mxu0
        %v1187 = vadd.f32 %v1010, %v1181
        %v1188 = vadd.f32 %v1011, %v1184
        %v1189 = vlaneseq
        %v1190 = vshrl.u32 %v1189, 7
        %v1191 = vsub.s32 1, %v1190
        %v1192 = vrot.slane %v371, %v1191
        %v1193 = vadd.f32 %v1187, %v1192
        %v1194 = vadd.f32 %v1188, %v1192
        %v1195 = vadd.f32 %v369, %v1193
        %v1196 = vadd.f32 %v370, %v1194
        %v1197 = vsel %vm393, %v1195, 0.0
        %1198 = vadd.xlane.f32.xlu0 %v1197
        %v1199 = vpop.xlane.xlu0 %1198
        %v1200 = vsel %vm393, %v1196, 0.0
        %1201 = vadd.xlane.f32.xlu0 %v1200
        %v1202 = vpop.xlane.xlu0 %1201
        %v1203 = vrcp.pop 32.0
        %v1204 = vmul.f32 %v1199, %v1203
        %v1205 = vmul.f32 %v1202, %v1203
        %v1206 = vsub.f32 %v1195, %v1204
        %v1207 = vsub.f32 %v1196, %v1205
        %v1208 = vmul.f32 %v1206, %v1206
        %v1209 = vmul.f32 %v1207, %v1207
        %v1210 = vsel %vm393, %v1208, 0.0
        %1211 = vadd.xlane.f32.xlu0 %v1210
        %v1212 = vpop.xlane.xlu0 %1211
        %v1213 = vsel %vm393, %v1209, 0.0
        %1214 = vadd.xlane.f32.xlu0 %v1213
        %v1215 = vpop.xlane.xlu0 %1214
        %v1216 = vmul.f32 %v1212, %v1203
        %v1217 = vmul.f32 %v1215, %v1203
        %v1218 = vadd.f32 %v1216, 1e-05
        %v1219 = vadd.f32 %v1217, 1e-05
        %v1220 = vrsqrt.pop %v1218
        %v1221 = vrsqrt.pop %v1219
        %v1222 = vmul.f32 %v1206, %v1220
        %v1223 = vmul.f32 %v1207, %v1221
        %v1224 = vlaneseq
        %v1225 = vshrl.u32 %v1224, 7
        %v1226 = vsub.s32 3, %v1225
        %v1227 = vrot.slane %v371, %v1226
        %v1228 = vmul.f32 %v1222, %v1227
        %v1229 = vmul.f32 %v1223, %v1227
        %v1230 = vlaneseq
        %v1231 = vshrl.u32 %v1230, 7
        %v1232 = vsub.s32 4, %v1231
        %v1233 = vrot.slane %v371, %v1232
        %v1234 = vadd.f32 %v1228, %v1233
        %v1235 = vadd.f32 %v1229, %v1233
        %v1236 = vpack.c.bf16 %v1235, %v1234
        %v1237 = vld [vmem:[%s345] sm:$0xff]
        %v1238 = vld [vmem:[%s345 + $0x8] sm:$0xff]
        %v1239 = vld [vmem:[%s345 + $0x40] sm:$0xff]
        %v1240 = vld [vmem:[%s345 + $0x48] sm:$0xff]
        %v1241 = vld [vmem:[%s345 + $0x80] sm:$0xff]
        %v1242 = vld [vmem:[%s345 + $0x88] sm:$0xff]
        %v1243 = vld [vmem:[%s345 + $0xc0] sm:$0xff]
        %v1244 = vld [vmem:[%s345 + $0xc8] sm:$0xff]
        %v1245 = vld [vmem:[%s349] sm:$0xf]
        %v1247 = vlaneseq
        %v1248 = vshrl.u32 %v1247, 7
        %v1249 = vsub.s32 0, %v1248
        %v1250 = vrot.slane %v1245, %v1249
        %v1251 = vlaneseq
        %v1252 = vshrl.u32 %v1251, 7
        %v1253 = vsub.s32 1, %v1252
        %v1254 = vrot.slane %v1245, %v1253
        %v1255 = vlaneseq
        %v1256 = vshrl.u32 %v1255, 7
        %v1257 = vsub.s32 2, %v1256
        %v1258 = vrot.slane %v1245, %v1257
        %v1259 = vlaneseq
        %v1260 = vshrl.u32 %v1259, 7
        %v1261 = vsub.s32 3, %v1260
        %v1262 = vrot.slane %v1245, %v1261
        %v1275 = vunpack.c.l.b16 %v1237
        %v1276 = vunpack.c.h.b16 %v1237
        %v1277 = vunpack.c.l.b16 %v1238
        %v1278 = vunpack.c.h.b16 %v1238
        %v1279 = vunpack.c.l.b16 %v1239
        %v1280 = vunpack.c.h.b16 %v1239
        %v1281 = vunpack.c.l.b16 %v1240
        %v1282 = vunpack.c.h.b16 %v1240
        %v1283 = vunpack.c.l.b16 %v1241
        %v1284 = vunpack.c.h.b16 %v1241
        %v1285 = vunpack.c.l.b16 %v1242
        %v1286 = vunpack.c.h.b16 %v1242
        %v1287 = vunpack.c.l.b16 %v1243
        %v1288 = vunpack.c.h.b16 %v1243
        %v1289 = vunpack.c.l.b16 %v1244
        %v1290 = vunpack.c.h.b16 %v1244
        %v1291 = vpack.c.b16 %v1279, %v1275
        %v1292 = vpack.c.b16 %v1280, %v1276
        %v1293 = vpack.c.b16 %v1281, %v1277
        %v1294 = vpack.c.b16 %v1282, %v1278
        %v1295 = vpack.c.b16 %v1287, %v1283
        %v1296 = vpack.c.b16 %v1288, %v1284
        %v1297 = vpack.c.b16 %v1289, %v1285
        %v1298 = vpack.c.b16 %v1290, %v1286
        %v1308 = vsel %vm393, %v1236, 0
        %1310 = vmatprep.subr.bf16.mxu0 %v1292
        %1311 = vmatpush1.bf16.msra.mxu0 %v1291
        %1312 = vmatprep.subr.bf16.mxu0 %v1296
        %1313 = vmatpush1.bf16.msra.mxu0 %v1295
        %1314 = vmatprep.subr.bf16.mxu0 0
        %1315 = vmatpush1.bf16.msra.mxu0 0
        %1316 = vmatprep.subr.bf16.mxu0 0
        %1317 = vmatpush1.bf16.msra.mxu0 0
        %1318 = vmatprep.subr.bf16.mxu0 0
        %1319 = vmatpush1.bf16.msra.mxu0 0
        %1320 = vmatprep.subr.bf16.mxu0 0
        %1321 = vmatpush1.bf16.msra.mxu0 0
        %1322 = vmatprep.subr.bf16.mxu0 0
        %1323 = vmatpush1.bf16.msra.mxu0 0
        %1324 = vmatprep.subr.bf16.mxu0 0
        %1325 = vmatpush1.bf16.msra.mxu0 0
        %1326 = vmatprep.subr.bf16.mxu0 0
        %1327 = vmatpush1.bf16.msra.mxu0 0
        %1328 = vmatprep.subr.bf16.mxu0 0
        %1329 = vmatpush1.bf16.msra.mxu0 0
        %1330 = vmatprep.subr.bf16.mxu0 0
        %1331 = vmatpush1.bf16.msra.mxu0 0
        %1332 = vmatprep.subr.bf16.mxu0 0
        %1333 = vmatpush1.bf16.msra.mxu0 0
        %1334 = vmatprep.subr.bf16.mxu0 0
        %1335 = vmatpush1.bf16.msra.mxu0 0
        %1336 = vmatprep.subr.bf16.mxu0 0
        %1337 = vmatpush1.bf16.msra.mxu0 0
        %1338 = vmatprep.subr.bf16.mxu0 0
        %1339 = vmatpush1.bf16.msra.mxu0 0
        %1340 = vmatprep.subr.bf16.mxu0 0
        %1341 = vmatpush1.bf16.msra.mxu0 0
        %1342 = vmatprep.mubr.bf16.mxu0 0
        %1343 = vmatmul.mubr.bf16.gmra.mrb[0].mxu0 %v1308
        %v1344 = vpop.f32.mrb[0].mxu0
        %v1345 = vadd.f32 %v1250, %v1344
        %v1346 = vpop.f32.mrb[0].mxu0
        %v1347 = vadd.f32 %v1254, %v1346
        %v1348 = vpop.f32.mrb[0].mxu0
        %v1349 = vadd.f32 %v1250, %v1348
        %v1350 = vpop.f32.mrb[0].mxu0
        %v1351 = vadd.f32 %v1254, %v1350
        %1352 = vdwg.mxu0
        %1353 = vmatprep.subr.bf16.mxu0 %v1294
        %1354 = vmatpush1.bf16.msra.mxu0 %v1293
        %1355 = vmatprep.subr.bf16.mxu0 %v1298
        %1356 = vmatpush1.bf16.msra.mxu0 %v1297
        %1357 = vmatprep.subr.bf16.mxu0 0
        %1358 = vmatpush1.bf16.msra.mxu0 0
        %1359 = vmatprep.subr.bf16.mxu0 0
        %1360 = vmatpush1.bf16.msra.mxu0 0
        %1361 = vmatprep.subr.bf16.mxu0 0
        %1362 = vmatpush1.bf16.msra.mxu0 0
        %1363 = vmatprep.subr.bf16.mxu0 0
        %1364 = vmatpush1.bf16.msra.mxu0 0
        %1365 = vmatprep.subr.bf16.mxu0 0
        %1366 = vmatpush1.bf16.msra.mxu0 0
        %1367 = vmatprep.subr.bf16.mxu0 0
        %1368 = vmatpush1.bf16.msra.mxu0 0
        %1369 = vmatprep.subr.bf16.mxu0 0
        %1370 = vmatpush1.bf16.msra.mxu0 0
        %1371 = vmatprep.subr.bf16.mxu0 0
        %1372 = vmatpush1.bf16.msra.mxu0 0
        %1373 = vmatprep.subr.bf16.mxu0 0
        %1374 = vmatpush1.bf16.msra.mxu0 0
        %1375 = vmatprep.subr.bf16.mxu0 0
        %1376 = vmatpush1.bf16.msra.mxu0 0
        %1377 = vmatprep.subr.bf16.mxu0 0
        %1378 = vmatpush1.bf16.msra.mxu0 0
        %1379 = vmatprep.subr.bf16.mxu0 0
        %1380 = vmatpush1.bf16.msra.mxu0 0
        %1381 = vmatprep.subr.bf16.mxu0 0
        %1382 = vmatpush1.bf16.msra.mxu0 0
        %1383 = vmatprep.subr.bf16.mxu0 0
        %1384 = vmatpush1.bf16.msra.mxu0 0
        %1385 = vmatprep.mubr.bf16.mxu0 0
        %1386 = vmatmul.mubr.bf16.gmra.mrb[0].mxu0 %v1308
        %v1387 = vpop.f32.mrb[0].mxu0
        %v1388 = vadd.f32 %v1258, %v1387
        %v1389 = vpop.f32.mrb[0].mxu0
        %v1390 = vadd.f32 %v1262, %v1389
        %v1391 = vpop.f32.mrb[0].mxu0
        %v1392 = vadd.f32 %v1258, %v1391
        %v1393 = vpop.f32.mrb[0].mxu0
        %v1394 = vadd.f32 %v1262, %v1393
        %1395 = vdwg.mxu0
        %v1396 = vmax.f32 %v1345, 0.0
        %v1397 = vmax.f32 %v1347, 0.0
        %v1398 = vmax.f32 %v1388, 0.0
        %v1399 = vmax.f32 %v1390, 0.0
        %v1400 = vmax.f32 %v1349, 0.0
        %v1401 = vmax.f32 %v1351, 0.0
        %v1402 = vmax.f32 %v1392, 0.0
        %v1403 = vmax.f32 %v1394, 0.0
        %v1404 = vpack.c.bf16 %v1400, %v1396
        %v1405 = vpack.c.bf16 %v1401, %v1397
        %v1406 = vpack.c.bf16 %v1402, %v1398
        %v1407 = vpack.c.bf16 %v1403, %v1399
        %v1408 = vld [vmem:[%s354] sm:$0xf]
        %v1409 = vld [vmem:[%s354 + $0x4] sm:$0xf]
        %v1410 = vld [vmem:[%s354 + $0x8] sm:$0xf]
        %v1411 = vld [vmem:[%s354 + $0xc] sm:$0xf]
        %v1412 = vld [vmem:[%s354 + $0x10] sm:$0xf]
        %v1413 = vld [vmem:[%s354 + $0x14] sm:$0xf]
        %v1414 = vld [vmem:[%s354 + $0x18] sm:$0xf]
        %v1415 = vld [vmem:[%s354 + $0x1c] sm:$0xf]
        %v1416 = vld [vmem:[%s354 + $0x20] sm:$0xf]
        %v1417 = vld [vmem:[%s354 + $0x24] sm:$0xf]
        %v1418 = vld [vmem:[%s354 + $0x28] sm:$0xf]
        %v1419 = vld [vmem:[%s354 + $0x2c] sm:$0xf]
        %v1420 = vld [vmem:[%s354 + $0x30] sm:$0xf]
        %v1421 = vld [vmem:[%s354 + $0x34] sm:$0xf]
        %v1422 = vld [vmem:[%s354 + $0x38] sm:$0xf]
        %v1423 = vld [vmem:[%s354 + $0x3c] sm:$0xf]
        %v1424 = vld [vmem:[%s354 + $0x40] sm:$0xf]
        %v1425 = vld [vmem:[%s354 + $0x44] sm:$0xf]
        %v1426 = vld [vmem:[%s354 + $0x48] sm:$0xf]
        %v1427 = vld [vmem:[%s354 + $0x4c] sm:$0xf]
        %v1428 = vld [vmem:[%s354 + $0x50] sm:$0xf]
        %v1429 = vld [vmem:[%s354 + $0x54] sm:$0xf]
        %v1430 = vld [vmem:[%s354 + $0x58] sm:$0xf]
        %v1431 = vld [vmem:[%s354 + $0x5c] sm:$0xf]
        %v1432 = vld [vmem:[%s354 + $0x60] sm:$0xf]
        %v1433 = vld [vmem:[%s354 + $0x64] sm:$0xf]
        %v1434 = vld [vmem:[%s354 + $0x68] sm:$0xf]
        %v1435 = vld [vmem:[%s354 + $0x6c] sm:$0xf]
        %v1436 = vld [vmem:[%s354 + $0x70] sm:$0xf]
        %v1437 = vld [vmem:[%s354 + $0x74] sm:$0xf]
        %v1438 = vld [vmem:[%s354 + $0x78] sm:$0xf]
        %v1439 = vld [vmem:[%s354 + $0x7c] sm:$0xf]
        %v1440 = vld [vmem:[%s354 + $0x80] sm:$0xf]
        %v1441 = vld [vmem:[%s354 + $0x84] sm:$0xf]
        %v1442 = vld [vmem:[%s354 + $0x88] sm:$0xf]
        %v1443 = vld [vmem:[%s354 + $0x8c] sm:$0xf]
        %v1444 = vld [vmem:[%s354 + $0x90] sm:$0xf]
        %v1445 = vld [vmem:[%s354 + $0x94] sm:$0xf]
        %v1446 = vld [vmem:[%s354 + $0x98] sm:$0xf]
        %v1447 = vld [vmem:[%s354 + $0x9c] sm:$0xf]
        %v1448 = vld [vmem:[%s354 + $0xa0] sm:$0xf]
        %v1449 = vld [vmem:[%s354 + $0xa4] sm:$0xf]
        %v1450 = vld [vmem:[%s354 + $0xa8] sm:$0xf]
        %v1451 = vld [vmem:[%s354 + $0xac] sm:$0xf]
        %v1452 = vld [vmem:[%s354 + $0xb0] sm:$0xf]
        %v1453 = vld [vmem:[%s354 + $0xb4] sm:$0xf]
        %v1454 = vld [vmem:[%s354 + $0xb8] sm:$0xf]
        %v1455 = vld [vmem:[%s354 + $0xbc] sm:$0xf]
        %v1456 = vld [vmem:[%s354 + $0xc0] sm:$0xf]
        %v1457 = vld [vmem:[%s354 + $0xc4] sm:$0xf]
        %v1458 = vld [vmem:[%s354 + $0xc8] sm:$0xf]
        %v1459 = vld [vmem:[%s354 + $0xcc] sm:$0xf]
        %v1460 = vld [vmem:[%s354 + $0xd0] sm:$0xf]
        %v1461 = vld [vmem:[%s354 + $0xd4] sm:$0xf]
        %v1462 = vld [vmem:[%s354 + $0xd8] sm:$0xf]
        %v1463 = vld [vmem:[%s354 + $0xdc] sm:$0xf]
        %v1464 = vld [vmem:[%s354 + $0xe0] sm:$0xf]
        %v1465 = vld [vmem:[%s354 + $0xe4] sm:$0xf]
        %v1466 = vld [vmem:[%s354 + $0xe8] sm:$0xf]
        %v1467 = vld [vmem:[%s354 + $0xec] sm:$0xf]
        %v1468 = vld [vmem:[%s354 + $0xf0] sm:$0xf]
        %v1469 = vld [vmem:[%s354 + $0xf4] sm:$0xf]
        %v1470 = vld [vmem:[%s354 + $0xf8] sm:$0xf]
        %v1471 = vld [vmem:[%s354 + $0xfc] sm:$0xf]
        %v1472 = vld [vmem:[%s345 + $0x10] sm:$0xff]
        %v1473 = vld [vmem:[%s345 + $0x18] sm:$0xff]
        %v1474 = vld [vmem:[%s345 + $0x50] sm:$0xff]
        %v1475 = vld [vmem:[%s345 + $0x58] sm:$0xff]
        %v1476 = vld [vmem:[%s345 + $0x90] sm:$0xff]
        %v1477 = vld [vmem:[%s345 + $0x98] sm:$0xff]
        %v1478 = vld [vmem:[%s345 + $0xd0] sm:$0xff]
        %v1479 = vld [vmem:[%s345 + $0xd8] sm:$0xff]
        %v1480 = vld [vmem:[%s349 + $0x4] sm:$0xf]
        %v1482 = vlaneseq
        %v1483 = vshrl.u32 %v1482, 7
        %v1484 = vsub.s32 0, %v1483
        %v1485 = vrot.slane %v1480, %v1484
        %v1486 = vlaneseq
        %v1487 = vshrl.u32 %v1486, 7
        %v1488 = vsub.s32 1, %v1487
        %v1489 = vrot.slane %v1480, %v1488
        %v1490 = vlaneseq
        %v1491 = vshrl.u32 %v1490, 7
        %v1492 = vsub.s32 2, %v1491
        %v1493 = vrot.slane %v1480, %v1492
        %v1494 = vlaneseq
        %v1495 = vshrl.u32 %v1494, 7
        %v1496 = vsub.s32 3, %v1495
        %v1497 = vrot.slane %v1480, %v1496
        %v1510 = vunpack.c.l.b16 %v1472
        %v1511 = vunpack.c.h.b16 %v1472
        %v1512 = vunpack.c.l.b16 %v1473
        %v1513 = vunpack.c.h.b16 %v1473
        %v1514 = vunpack.c.l.b16 %v1474
        %v1515 = vunpack.c.h.b16 %v1474
        %v1516 = vunpack.c.l.b16 %v1475
        %v1517 = vunpack.c.h.b16 %v1475
        %v1518 = vunpack.c.l.b16 %v1476
        %v1519 = vunpack.c.h.b16 %v1476
        %v1520 = vunpack.c.l.b16 %v1477
        %v1521 = vunpack.c.h.b16 %v1477
        %v1522 = vunpack.c.l.b16 %v1478
        %v1523 = vunpack.c.h.b16 %v1478
        %v1524 = vunpack.c.l.b16 %v1479
        %v1525 = vunpack.c.h.b16 %v1479
        %v1526 = vpack.c.b16 %v1514, %v1510
        %v1527 = vpack.c.b16 %v1515, %v1511
        %v1528 = vpack.c.b16 %v1516, %v1512
        %v1529 = vpack.c.b16 %v1517, %v1513
        %v1530 = vpack.c.b16 %v1522, %v1518
        %v1531 = vpack.c.b16 %v1523, %v1519
        %v1532 = vpack.c.b16 %v1524, %v1520
        %v1533 = vpack.c.b16 %v1525, %v1521
        %1542 = vmatprep.subr.bf16.mxu0 %v1527
        %1543 = vmatpush1.bf16.msra.mxu0 %v1526
        %1544 = vmatprep.subr.bf16.mxu0 %v1531
        %1545 = vmatpush1.bf16.msra.mxu0 %v1530
        %1546 = vmatprep.subr.bf16.mxu0 0
        %1547 = vmatpush1.bf16.msra.mxu0 0
        %1548 = vmatprep.subr.bf16.mxu0 0
        %1549 = vmatpush1.bf16.msra.mxu0 0
        %1550 = vmatprep.subr.bf16.mxu0 0
        %1551 = vmatpush1.bf16.msra.mxu0 0
        %1552 = vmatprep.subr.bf16.mxu0 0
        %1553 = vmatpush1.bf16.msra.mxu0 0
        %1554 = vmatprep.subr.bf16.mxu0 0
        %1555 = vmatpush1.bf16.msra.mxu0 0
        %1556 = vmatprep.subr.bf16.mxu0 0
        %1557 = vmatpush1.bf16.msra.mxu0 0
        %1558 = vmatprep.subr.bf16.mxu0 0
        %1559 = vmatpush1.bf16.msra.mxu0 0
        %1560 = vmatprep.subr.bf16.mxu0 0
        %1561 = vmatpush1.bf16.msra.mxu0 0
        %1562 = vmatprep.subr.bf16.mxu0 0
        %1563 = vmatpush1.bf16.msra.mxu0 0
        %1564 = vmatprep.subr.bf16.mxu0 0
        %1565 = vmatpush1.bf16.msra.mxu0 0
        %1566 = vmatprep.subr.bf16.mxu0 0
        %1567 = vmatpush1.bf16.msra.mxu0 0
        %1568 = vmatprep.subr.bf16.mxu0 0
        %1569 = vmatpush1.bf16.msra.mxu0 0
        %1570 = vmatprep.subr.bf16.mxu0 0
        %1571 = vmatpush1.bf16.msra.mxu0 0
        %1572 = vmatprep.subr.bf16.mxu0 0
        %1573 = vmatpush1.bf16.msra.mxu0 0
        %1574 = vmatprep.mubr.bf16.mxu0 0
        %1575 = vmatmul.mubr.bf16.gmra.mrb[0].mxu0 %v1308
        %v1576 = vpop.f32.mrb[0].mxu0
        %v1577 = vadd.f32 %v1485, %v1576
        %v1578 = vpop.f32.mrb[0].mxu0
        %v1579 = vadd.f32 %v1489, %v1578
        %v1580 = vpop.f32.mrb[0].mxu0
        %v1581 = vadd.f32 %v1485, %v1580
        %v1582 = vpop.f32.mrb[0].mxu0
        %v1583 = vadd.f32 %v1489, %v1582
        %1584 = vdwg.mxu0
        %1585 = vmatprep.subr.bf16.mxu0 %v1529
        %1586 = vmatpush1.bf16.msra.mxu0 %v1528
        %1587 = vmatprep.subr.bf16.mxu0 %v1533
        %1588 = vmatpush1.bf16.msra.mxu0 %v1532
        %1589 = vmatprep.subr.bf16.mxu0 0
        %1590 = vmatpush1.bf16.msra.mxu0 0
        %1591 = vmatprep.subr.bf16.mxu0 0
        %1592 = vmatpush1.bf16.msra.mxu0 0
        %1593 = vmatprep.subr.bf16.mxu0 0
        %1594 = vmatpush1.bf16.msra.mxu0 0
        %1595 = vmatprep.subr.bf16.mxu0 0
        %1596 = vmatpush1.bf16.msra.mxu0 0
        %1597 = vmatprep.subr.bf16.mxu0 0
        %1598 = vmatpush1.bf16.msra.mxu0 0
        %1599 = vmatprep.subr.bf16.mxu0 0
        %1600 = vmatpush1.bf16.msra.mxu0 0
        %1601 = vmatprep.subr.bf16.mxu0 0
        %1602 = vmatpush1.bf16.msra.mxu0 0
        %1603 = vmatprep.subr.bf16.mxu0 0
        %1604 = vmatpush1.bf16.msra.mxu0 0
        %1605 = vmatprep.subr.bf16.mxu0 0
        %1606 = vmatpush1.bf16.msra.mxu0 0
        %1607 = vmatprep.subr.bf16.mxu0 0
        %1608 = vmatpush1.bf16.msra.mxu0 0
        %1609 = vmatprep.subr.bf16.mxu0 0
        %1610 = vmatpush1.bf16.msra.mxu0 0
        %1611 = vmatprep.subr.bf16.mxu0 0
        %1612 = vmatpush1.bf16.msra.mxu0 0
        %1613 = vmatprep.subr.bf16.mxu0 0
        %1614 = vmatpush1.bf16.msra.mxu0 0
        %1615 = vmatprep.subr.bf16.mxu0 0
        %1616 = vmatpush1.bf16.msra.mxu0 0
        %1617 = vmatprep.mubr.bf16.mxu0 0
        %1618 = vmatmul.mubr.bf16.gmra.mrb[0].mxu0 %v1308
        %v1619 = vpop.f32.mrb[0].mxu0
        %v1620 = vadd.f32 %v1493, %v1619
        %v1621 = vpop.f32.mrb[0].mxu0
        %v1622 = vadd.f32 %v1497, %v1621
        %v1623 = vpop.f32.mrb[0].mxu0
        %v1624 = vadd.f32 %v1493, %v1623
        %v1625 = vpop.f32.mrb[0].mxu0
        %v1626 = vadd.f32 %v1497, %v1625
        %1627 = vdwg.mxu0
        %v1628 = vmax.f32 %v1577, 0.0
        %v1629 = vmax.f32 %v1579, 0.0
        %v1630 = vmax.f32 %v1620, 0.0
        %v1631 = vmax.f32 %v1622, 0.0
        %v1632 = vmax.f32 %v1581, 0.0
        %v1633 = vmax.f32 %v1583, 0.0
        %v1634 = vmax.f32 %v1624, 0.0
        %v1635 = vmax.f32 %v1626, 0.0
        %v1636 = vpack.c.bf16 %v1632, %v1628
        %v1637 = vpack.c.bf16 %v1633, %v1629
        %v1638 = vpack.c.bf16 %v1634, %v1630
        %v1639 = vpack.c.bf16 %v1635, %v1631
        %v1640 = vld [vmem:[%s354 + $0x100] sm:$0xf]
        %v1641 = vld [vmem:[%s354 + $0x104] sm:$0xf]
        %v1642 = vld [vmem:[%s354 + $0x108] sm:$0xf]
        %v1643 = vld [vmem:[%s354 + $0x10c] sm:$0xf]
        %v1644 = vld [vmem:[%s354 + $0x110] sm:$0xf]
        %v1645 = vld [vmem:[%s354 + $0x114] sm:$0xf]
        %v1646 = vld [vmem:[%s354 + $0x118] sm:$0xf]
        %v1647 = vld [vmem:[%s354 + $0x11c] sm:$0xf]
        %v1648 = vld [vmem:[%s354 + $0x120] sm:$0xf]
        %v1649 = vld [vmem:[%s354 + $0x124] sm:$0xf]
        %v1650 = vld [vmem:[%s354 + $0x128] sm:$0xf]
        %v1651 = vld [vmem:[%s354 + $0x12c] sm:$0xf]
        %v1652 = vld [vmem:[%s354 + $0x130] sm:$0xf]
        %v1653 = vld [vmem:[%s354 + $0x134] sm:$0xf]
        %v1654 = vld [vmem:[%s354 + $0x138] sm:$0xf]
        %v1655 = vld [vmem:[%s354 + $0x13c] sm:$0xf]
        %v1656 = vld [vmem:[%s354 + $0x140] sm:$0xf]
        %v1657 = vld [vmem:[%s354 + $0x144] sm:$0xf]
        %v1658 = vld [vmem:[%s354 + $0x148] sm:$0xf]
        %v1659 = vld [vmem:[%s354 + $0x14c] sm:$0xf]
        %v1660 = vld [vmem:[%s354 + $0x150] sm:$0xf]
        %v1661 = vld [vmem:[%s354 + $0x154] sm:$0xf]
        %v1662 = vld [vmem:[%s354 + $0x158] sm:$0xf]
        %v1663 = vld [vmem:[%s354 + $0x15c] sm:$0xf]
        %v1664 = vld [vmem:[%s354 + $0x160] sm:$0xf]
        %v1665 = vld [vmem:[%s354 + $0x164] sm:$0xf]
        %v1666 = vld [vmem:[%s354 + $0x168] sm:$0xf]
        %v1667 = vld [vmem:[%s354 + $0x16c] sm:$0xf]
        %v1668 = vld [vmem:[%s354 + $0x170] sm:$0xf]
        %v1669 = vld [vmem:[%s354 + $0x174] sm:$0xf]
        %v1670 = vld [vmem:[%s354 + $0x178] sm:$0xf]
        %v1671 = vld [vmem:[%s354 + $0x17c] sm:$0xf]
        %v1672 = vld [vmem:[%s354 + $0x180] sm:$0xf]
        %v1673 = vld [vmem:[%s354 + $0x184] sm:$0xf]
        %v1674 = vld [vmem:[%s354 + $0x188] sm:$0xf]
        %v1675 = vld [vmem:[%s354 + $0x18c] sm:$0xf]
        %v1676 = vld [vmem:[%s354 + $0x190] sm:$0xf]
        %v1677 = vld [vmem:[%s354 + $0x194] sm:$0xf]
        %v1678 = vld [vmem:[%s354 + $0x198] sm:$0xf]
        %v1679 = vld [vmem:[%s354 + $0x19c] sm:$0xf]
        %v1680 = vld [vmem:[%s354 + $0x1a0] sm:$0xf]
        %v1681 = vld [vmem:[%s354 + $0x1a4] sm:$0xf]
        %v1682 = vld [vmem:[%s354 + $0x1a8] sm:$0xf]
        %v1683 = vld [vmem:[%s354 + $0x1ac] sm:$0xf]
        %v1684 = vld [vmem:[%s354 + $0x1b0] sm:$0xf]
        %v1685 = vld [vmem:[%s354 + $0x1b4] sm:$0xf]
        %v1686 = vld [vmem:[%s354 + $0x1b8] sm:$0xf]
        %v1687 = vld [vmem:[%s354 + $0x1bc] sm:$0xf]
        %v1688 = vld [vmem:[%s354 + $0x1c0] sm:$0xf]
        %v1689 = vld [vmem:[%s354 + $0x1c4] sm:$0xf]
        %v1690 = vld [vmem:[%s354 + $0x1c8] sm:$0xf]
        %v1691 = vld [vmem:[%s354 + $0x1cc] sm:$0xf]
        %v1692 = vld [vmem:[%s354 + $0x1d0] sm:$0xf]
        %v1693 = vld [vmem:[%s354 + $0x1d4] sm:$0xf]
        %v1694 = vld [vmem:[%s354 + $0x1d8] sm:$0xf]
        %v1695 = vld [vmem:[%s354 + $0x1dc] sm:$0xf]
        %v1696 = vld [vmem:[%s354 + $0x1e0] sm:$0xf]
        %v1697 = vld [vmem:[%s354 + $0x1e4] sm:$0xf]
        %v1698 = vld [vmem:[%s354 + $0x1e8] sm:$0xf]
        %v1699 = vld [vmem:[%s354 + $0x1ec] sm:$0xf]
        %v1700 = vld [vmem:[%s354 + $0x1f0] sm:$0xf]
        %v1701 = vld [vmem:[%s354 + $0x1f4] sm:$0xf]
        %v1702 = vld [vmem:[%s354 + $0x1f8] sm:$0xf]
        %v1703 = vld [vmem:[%s354 + $0x1fc] sm:$0xf]
        %v1768 = vunpack.c.l.b16 %v1640
        %v1769 = vunpack.c.l.b16 %v1641
        %v1770 = vunpack.c.l.b16 %v1642
        %v1771 = vunpack.c.l.b16 %v1643
        %v1772 = vunpack.c.l.b16 %v1644
        %v1773 = vunpack.c.l.b16 %v1645
        %v1774 = vunpack.c.l.b16 %v1646
        %v1775 = vunpack.c.l.b16 %v1647
        %v1776 = vunpack.c.l.b16 %v1648
        %v1777 = vunpack.c.l.b16 %v1649
        %v1778 = vunpack.c.l.b16 %v1650
        %v1779 = vunpack.c.l.b16 %v1651
        %v1780 = vunpack.c.l.b16 %v1652
        %v1781 = vunpack.c.l.b16 %v1653
        %v1782 = vunpack.c.l.b16 %v1654
        %v1783 = vunpack.c.l.b16 %v1655
        %v1784 = vunpack.c.l.b16 %v1656
        %v1785 = vunpack.c.l.b16 %v1657
        %v1786 = vunpack.c.l.b16 %v1658
        %v1787 = vunpack.c.l.b16 %v1659
        %v1788 = vunpack.c.l.b16 %v1660
        %v1789 = vunpack.c.l.b16 %v1661
        %v1790 = vunpack.c.l.b16 %v1662
        %v1791 = vunpack.c.l.b16 %v1663
        %v1792 = vunpack.c.l.b16 %v1664
        %v1793 = vunpack.c.l.b16 %v1665
        %v1794 = vunpack.c.l.b16 %v1666
        %v1795 = vunpack.c.l.b16 %v1667
        %v1796 = vunpack.c.l.b16 %v1668
        %v1797 = vunpack.c.l.b16 %v1669
        %v1798 = vunpack.c.l.b16 %v1670
        %v1799 = vunpack.c.l.b16 %v1671
        %v1800 = vunpack.c.l.b16 %v1672
        %v1801 = vunpack.c.l.b16 %v1673
        %v1802 = vunpack.c.l.b16 %v1674
        %v1803 = vunpack.c.l.b16 %v1675
        %v1804 = vunpack.c.l.b16 %v1676
        %v1805 = vunpack.c.l.b16 %v1677
        %v1806 = vunpack.c.l.b16 %v1678
        %v1807 = vunpack.c.l.b16 %v1679
        %v1808 = vunpack.c.l.b16 %v1680
        %v1809 = vunpack.c.l.b16 %v1681
        %v1810 = vunpack.c.l.b16 %v1682
        %v1811 = vunpack.c.l.b16 %v1683
        %v1812 = vunpack.c.l.b16 %v1684
        %v1813 = vunpack.c.l.b16 %v1685
        %v1814 = vunpack.c.l.b16 %v1686
        %v1815 = vunpack.c.l.b16 %v1687
        %v1816 = vunpack.c.l.b16 %v1688
        %v1817 = vunpack.c.l.b16 %v1689
        %v1818 = vunpack.c.l.b16 %v1690
        %v1819 = vunpack.c.l.b16 %v1691
        %v1820 = vunpack.c.l.b16 %v1692
        %v1821 = vunpack.c.l.b16 %v1693
        %v1822 = vunpack.c.l.b16 %v1694
        %v1823 = vunpack.c.l.b16 %v1695
        %v1824 = vunpack.c.l.b16 %v1696
        %v1825 = vunpack.c.l.b16 %v1697
        %v1826 = vunpack.c.l.b16 %v1698
        %v1827 = vunpack.c.l.b16 %v1699
        %v1828 = vunpack.c.l.b16 %v1700
        %v1829 = vunpack.c.l.b16 %v1701
        %v1830 = vunpack.c.l.b16 %v1702
        %v1831 = vunpack.c.l.b16 %v1703
        %v1832 = vpack.c.b16 %v1769, %v1768
        %v1833 = vpack.c.b16 %v1771, %v1770
        %v1834 = vpack.c.b16 %v1773, %v1772
        %v1835 = vpack.c.b16 %v1775, %v1774
        %v1836 = vpack.c.b16 %v1777, %v1776
        %v1837 = vpack.c.b16 %v1779, %v1778
        %v1838 = vpack.c.b16 %v1781, %v1780
        %v1839 = vpack.c.b16 %v1783, %v1782
        %v1840 = vpack.c.b16 %v1785, %v1784
        %v1841 = vpack.c.b16 %v1787, %v1786
        %v1842 = vpack.c.b16 %v1789, %v1788
        %v1843 = vpack.c.b16 %v1791, %v1790
        %v1844 = vpack.c.b16 %v1793, %v1792
        %v1845 = vpack.c.b16 %v1795, %v1794
        %v1846 = vpack.c.b16 %v1797, %v1796
        %v1847 = vpack.c.b16 %v1799, %v1798
        %v1848 = vpack.c.b16 %v1801, %v1800
        %v1849 = vpack.c.b16 %v1803, %v1802
        %v1850 = vpack.c.b16 %v1805, %v1804
        %v1851 = vpack.c.b16 %v1807, %v1806
        %v1852 = vpack.c.b16 %v1809, %v1808
        %v1853 = vpack.c.b16 %v1811, %v1810
        %v1854 = vpack.c.b16 %v1813, %v1812
        %v1855 = vpack.c.b16 %v1815, %v1814
        %v1856 = vpack.c.b16 %v1817, %v1816
        %v1857 = vpack.c.b16 %v1819, %v1818
        %v1858 = vpack.c.b16 %v1821, %v1820
        %v1859 = vpack.c.b16 %v1823, %v1822
        %v1860 = vpack.c.b16 %v1825, %v1824
        %v1861 = vpack.c.b16 %v1827, %v1826
        %v1862 = vpack.c.b16 %v1829, %v1828
        %v1863 = vpack.c.b16 %v1831, %v1830
        %1896 = vmatprep.subr.bf16.mxu0 0
        %1897 = vmatpush1.bf16.msra.mxu0 %v1832
        %1898 = vmatprep.subr.bf16.mxu0 0
        %1899 = vmatpush1.bf16.msra.mxu0 %v1833
        %1900 = vmatprep.subr.bf16.mxu0 0
        %1901 = vmatpush1.bf16.msra.mxu0 %v1834
        %1902 = vmatprep.subr.bf16.mxu0 0
        %1903 = vmatpush1.bf16.msra.mxu0 %v1835
        %1904 = vmatprep.subr.bf16.mxu0 0
        %1905 = vmatpush1.bf16.msra.mxu0 %v1836
        %1906 = vmatprep.subr.bf16.mxu0 0
        %1907 = vmatpush1.bf16.msra.mxu0 %v1837
        %1908 = vmatprep.subr.bf16.mxu0 0
        %1909 = vmatpush1.bf16.msra.mxu0 %v1838
        %1910 = vmatprep.subr.bf16.mxu0 0
        %1911 = vmatpush1.bf16.msra.mxu0 %v1839
        %1912 = vmatprep.subr.bf16.mxu0 0
        %1913 = vmatpush1.bf16.msra.mxu0 %v1840
        %1914 = vmatprep.subr.bf16.mxu0 0
        %1915 = vmatpush1.bf16.msra.mxu0 %v1841
        %1916 = vmatprep.subr.bf16.mxu0 0
        %1917 = vmatpush1.bf16.msra.mxu0 %v1842
        %1918 = vmatprep.subr.bf16.mxu0 0
        %1919 = vmatpush1.bf16.msra.mxu0 %v1843
        %1920 = vmatprep.subr.bf16.mxu0 0
        %1921 = vmatpush1.bf16.msra.mxu0 %v1844
        %1922 = vmatprep.subr.bf16.mxu0 0
        %1923 = vmatpush1.bf16.msra.mxu0 %v1845
        %1924 = vmatprep.subr.bf16.mxu0 0
        %1925 = vmatpush1.bf16.msra.mxu0 %v1846
        %1926 = vmatprep.subr.bf16.mxu0 0
        %1927 = vmatpush1.bf16.msra.mxu0 %v1847
        %1928 = vmatprep.mubr.bf16.mxu0 %v1637
        %1929 = vmatmul.mubr.bf16.gmra.mrb[0].mxu0 %v1636
        %v1930 = vpop.f32.mrb[0].mxu0
        %v1931 = vadd.f32 0.0, %v1930
        %v1932 = vpop.f32.mrb[0].mxu0
        %v1933 = vpop.f32.mrb[0].mxu0
        %v1934 = vadd.f32 0.0, %v1933
        %v1935 = vpop.f32.mrb[0].mxu0
        %1936 = vdwg.mxu0
        %1937 = vmatprep.subr.bf16.mxu0 0
        %1938 = vmatpush1.bf16.msra.mxu0 %v1848
        %1939 = vmatprep.subr.bf16.mxu0 0
        %1940 = vmatpush1.bf16.msra.mxu0 %v1849
        %1941 = vmatprep.subr.bf16.mxu0 0
        %1942 = vmatpush1.bf16.msra.mxu0 %v1850
        %1943 = vmatprep.subr.bf16.mxu0 0
        %1944 = vmatpush1.bf16.msra.mxu0 %v1851
        %1945 = vmatprep.subr.bf16.mxu0 0
        %1946 = vmatpush1.bf16.msra.mxu0 %v1852
        %1947 = vmatprep.subr.bf16.mxu0 0
        %1948 = vmatpush1.bf16.msra.mxu0 %v1853
        %1949 = vmatprep.subr.bf16.mxu0 0
        %1950 = vmatpush1.bf16.msra.mxu0 %v1854
        %1951 = vmatprep.subr.bf16.mxu0 0
        %1952 = vmatpush1.bf16.msra.mxu0 %v1855
        %1953 = vmatprep.subr.bf16.mxu0 0
        %1954 = vmatpush1.bf16.msra.mxu0 %v1856
        %1955 = vmatprep.subr.bf16.mxu0 0
        %1956 = vmatpush1.bf16.msra.mxu0 %v1857
        %1957 = vmatprep.subr.bf16.mxu0 0
        %1958 = vmatpush1.bf16.msra.mxu0 %v1858
        %1959 = vmatprep.subr.bf16.mxu0 0
        %1960 = vmatpush1.bf16.msra.mxu0 %v1859
        %1961 = vmatprep.subr.bf16.mxu0 0
        %1962 = vmatpush1.bf16.msra.mxu0 %v1860
        %1963 = vmatprep.subr.bf16.mxu0 0
        %1964 = vmatpush1.bf16.msra.mxu0 %v1861
        %1965 = vmatprep.subr.bf16.mxu0 0
        %1966 = vmatpush1.bf16.msra.mxu0 %v1862
        %1967 = vmatprep.subr.bf16.mxu0 0
        %1968 = vmatpush1.bf16.msra.mxu0 %v1863
        %1969 = vmatprep.mubr.bf16.mxu0 %v1639
        %1970 = vmatmul.mubr.bf16.gmra.mrb[0].mxu0 %v1638
        %v1971 = vpop.f32.mrb[0].mxu0
        %v1972 = vadd.f32 %v1931, %v1971
        %v1973 = vpop.f32.mrb[0].mxu0
        %v1974 = vpop.f32.mrb[0].mxu0
        %v1975 = vadd.f32 %v1934, %v1974
        %v1976 = vpop.f32.mrb[0].mxu0
        %1977 = vdwg.mxu0
        %v2042 = vunpack.c.l.b16 %v1408
        %v2043 = vunpack.c.l.b16 %v1409
        %v2044 = vunpack.c.l.b16 %v1410
        %v2045 = vunpack.c.l.b16 %v1411
        %v2046 = vunpack.c.l.b16 %v1412
        %v2047 = vunpack.c.l.b16 %v1413
        %v2048 = vunpack.c.l.b16 %v1414
        %v2049 = vunpack.c.l.b16 %v1415
        %v2050 = vunpack.c.l.b16 %v1416
        %v2051 = vunpack.c.l.b16 %v1417
        %v2052 = vunpack.c.l.b16 %v1418
        %v2053 = vunpack.c.l.b16 %v1419
        %v2054 = vunpack.c.l.b16 %v1420
        %v2055 = vunpack.c.l.b16 %v1421
        %v2056 = vunpack.c.l.b16 %v1422
        %v2057 = vunpack.c.l.b16 %v1423
        %v2058 = vunpack.c.l.b16 %v1424
        %v2059 = vunpack.c.l.b16 %v1425
        %v2060 = vunpack.c.l.b16 %v1426
        %v2061 = vunpack.c.l.b16 %v1427
        %v2062 = vunpack.c.l.b16 %v1428
        %v2063 = vunpack.c.l.b16 %v1429
        %v2064 = vunpack.c.l.b16 %v1430
        %v2065 = vunpack.c.l.b16 %v1431
        %v2066 = vunpack.c.l.b16 %v1432
        %v2067 = vunpack.c.l.b16 %v1433
        %v2068 = vunpack.c.l.b16 %v1434
        %v2069 = vunpack.c.l.b16 %v1435
        %v2070 = vunpack.c.l.b16 %v1436
        %v2071 = vunpack.c.l.b16 %v1437
        %v2072 = vunpack.c.l.b16 %v1438
        %v2073 = vunpack.c.l.b16 %v1439
        %v2074 = vunpack.c.l.b16 %v1440
        %v2075 = vunpack.c.l.b16 %v1441
        %v2076 = vunpack.c.l.b16 %v1442
        %v2077 = vunpack.c.l.b16 %v1443
        %v2078 = vunpack.c.l.b16 %v1444
        %v2079 = vunpack.c.l.b16 %v1445
        %v2080 = vunpack.c.l.b16 %v1446
        %v2081 = vunpack.c.l.b16 %v1447
        %v2082 = vunpack.c.l.b16 %v1448
        %v2083 = vunpack.c.l.b16 %v1449
        %v2084 = vunpack.c.l.b16 %v1450
        %v2085 = vunpack.c.l.b16 %v1451
        %v2086 = vunpack.c.l.b16 %v1452
        %v2087 = vunpack.c.l.b16 %v1453
        %v2088 = vunpack.c.l.b16 %v1454
        %v2089 = vunpack.c.l.b16 %v1455
        %v2090 = vunpack.c.l.b16 %v1456
        %v2091 = vunpack.c.l.b16 %v1457
        %v2092 = vunpack.c.l.b16 %v1458
        %v2093 = vunpack.c.l.b16 %v1459
        %v2094 = vunpack.c.l.b16 %v1460
        %v2095 = vunpack.c.l.b16 %v1461
        %v2096 = vunpack.c.l.b16 %v1462
        %v2097 = vunpack.c.l.b16 %v1463
        %v2098 = vunpack.c.l.b16 %v1464
        %v2099 = vunpack.c.l.b16 %v1465
        %v2100 = vunpack.c.l.b16 %v1466
        %v2101 = vunpack.c.l.b16 %v1467
        %v2102 = vunpack.c.l.b16 %v1468
        %v2103 = vunpack.c.l.b16 %v1469
        %v2104 = vunpack.c.l.b16 %v1470
        %v2105 = vunpack.c.l.b16 %v1471
        %v2106 = vpack.c.b16 %v2043, %v2042
        %v2107 = vpack.c.b16 %v2045, %v2044
        %v2108 = vpack.c.b16 %v2047, %v2046
        %v2109 = vpack.c.b16 %v2049, %v2048
        %v2110 = vpack.c.b16 %v2051, %v2050
        %v2111 = vpack.c.b16 %v2053, %v2052
        %v2112 = vpack.c.b16 %v2055, %v2054
        %v2113 = vpack.c.b16 %v2057, %v2056
        %v2114 = vpack.c.b16 %v2059, %v2058
        %v2115 = vpack.c.b16 %v2061, %v2060
        %v2116 = vpack.c.b16 %v2063, %v2062
        %v2117 = vpack.c.b16 %v2065, %v2064
        %v2118 = vpack.c.b16 %v2067, %v2066
        %v2119 = vpack.c.b16 %v2069, %v2068
        %v2120 = vpack.c.b16 %v2071, %v2070
        %v2121 = vpack.c.b16 %v2073, %v2072
        %v2122 = vpack.c.b16 %v2075, %v2074
        %v2123 = vpack.c.b16 %v2077, %v2076
        %v2124 = vpack.c.b16 %v2079, %v2078
        %v2125 = vpack.c.b16 %v2081, %v2080
        %v2126 = vpack.c.b16 %v2083, %v2082
        %v2127 = vpack.c.b16 %v2085, %v2084
        %v2128 = vpack.c.b16 %v2087, %v2086
        %v2129 = vpack.c.b16 %v2089, %v2088
        %v2130 = vpack.c.b16 %v2091, %v2090
        %v2131 = vpack.c.b16 %v2093, %v2092
        %v2132 = vpack.c.b16 %v2095, %v2094
        %v2133 = vpack.c.b16 %v2097, %v2096
        %v2134 = vpack.c.b16 %v2099, %v2098
        %v2135 = vpack.c.b16 %v2101, %v2100
        %v2136 = vpack.c.b16 %v2103, %v2102
        %v2137 = vpack.c.b16 %v2105, %v2104
        %2170 = vmatprep.subr.bf16.mxu0 0
        %2171 = vmatpush1.bf16.msra.mxu0 %v2106
        %2172 = vmatprep.subr.bf16.mxu0 0
        %2173 = vmatpush1.bf16.msra.mxu0 %v2107
        %2174 = vmatprep.subr.bf16.mxu0 0
        %2175 = vmatpush1.bf16.msra.mxu0 %v2108
        %2176 = vmatprep.subr.bf16.mxu0 0
        %2177 = vmatpush1.bf16.msra.mxu0 %v2109
        %2178 = vmatprep.subr.bf16.mxu0 0
        %2179 = vmatpush1.bf16.msra.mxu0 %v2110
        %2180 = vmatprep.subr.bf16.mxu0 0
        %2181 = vmatpush1.bf16.msra.mxu0 %v2111
        %2182 = vmatprep.subr.bf16.mxu0 0
        %2183 = vmatpush1.bf16.msra.mxu0 %v2112
        %2184 = vmatprep.subr.bf16.mxu0 0
        %2185 = vmatpush1.bf16.msra.mxu0 %v2113
        %2186 = vmatprep.subr.bf16.mxu0 0
        %2187 = vmatpush1.bf16.msra.mxu0 %v2114
        %2188 = vmatprep.subr.bf16.mxu0 0
        %2189 = vmatpush1.bf16.msra.mxu0 %v2115
        %2190 = vmatprep.subr.bf16.mxu0 0
        %2191 = vmatpush1.bf16.msra.mxu0 %v2116
        %2192 = vmatprep.subr.bf16.mxu0 0
        %2193 = vmatpush1.bf16.msra.mxu0 %v2117
        %2194 = vmatprep.subr.bf16.mxu0 0
        %2195 = vmatpush1.bf16.msra.mxu0 %v2118
        %2196 = vmatprep.subr.bf16.mxu0 0
        %2197 = vmatpush1.bf16.msra.mxu0 %v2119
        %2198 = vmatprep.subr.bf16.mxu0 0
        %2199 = vmatpush1.bf16.msra.mxu0 %v2120
        %2200 = vmatprep.subr.bf16.mxu0 0
        %2201 = vmatpush1.bf16.msra.mxu0 %v2121
        %2202 = vmatprep.mubr.bf16.mxu0 %v1405
        %2203 = vmatmul.mubr.bf16.gmra.mrb[0].mxu0 %v1404
        %v2204 = vpop.f32.mrb[0].mxu0
        %v2205 = vadd.f32 %v1972, %v2204
        %v2206 = vpop.f32.mrb[0].mxu0
        %v2207 = vpop.f32.mrb[0].mxu0
        %v2208 = vadd.f32 %v1975, %v2207
        %v2209 = vpop.f32.mrb[0].mxu0
        %2210 = vdwg.mxu0
        %2211 = vmatprep.subr.bf16.mxu0 0
        %2212 = vmatpush1.bf16.msra.mxu0 %v2122
        %2213 = vmatprep.subr.bf16.mxu0 0
        %2214 = vmatpush1.bf16.msra.mxu0 %v2123
        %2215 = vmatprep.subr.bf16.mxu0 0
        %2216 = vmatpush1.bf16.msra.mxu0 %v2124
        %2217 = vmatprep.subr.bf16.mxu0 0
        %2218 = vmatpush1.bf16.msra.mxu0 %v2125
        %2219 = vmatprep.subr.bf16.mxu0 0
        %2220 = vmatpush1.bf16.msra.mxu0 %v2126
        %2221 = vmatprep.subr.bf16.mxu0 0
        %2222 = vmatpush1.bf16.msra.mxu0 %v2127
        %2223 = vmatprep.subr.bf16.mxu0 0
        %2224 = vmatpush1.bf16.msra.mxu0 %v2128
        %2225 = vmatprep.subr.bf16.mxu0 0
        %2226 = vmatpush1.bf16.msra.mxu0 %v2129
        %2227 = vmatprep.subr.bf16.mxu0 0
        %2228 = vmatpush1.bf16.msra.mxu0 %v2130
        %2229 = vmatprep.subr.bf16.mxu0 0
        %2230 = vmatpush1.bf16.msra.mxu0 %v2131
        %2231 = vmatprep.subr.bf16.mxu0 0
        %2232 = vmatpush1.bf16.msra.mxu0 %v2132
        %2233 = vmatprep.subr.bf16.mxu0 0
        %2234 = vmatpush1.bf16.msra.mxu0 %v2133
        %2235 = vmatprep.subr.bf16.mxu0 0
        %2236 = vmatpush1.bf16.msra.mxu0 %v2134
        %2237 = vmatprep.subr.bf16.mxu0 0
        %2238 = vmatpush1.bf16.msra.mxu0 %v2135
        %2239 = vmatprep.subr.bf16.mxu0 0
        %2240 = vmatpush1.bf16.msra.mxu0 %v2136
        %2241 = vmatprep.subr.bf16.mxu0 0
        %2242 = vmatpush1.bf16.msra.mxu0 %v2137
        %2243 = vmatprep.mubr.bf16.mxu0 %v1407
        %2244 = vmatmul.mubr.bf16.gmra.mrb[0].mxu0 %v1406
        %v2245 = vpop.f32.mrb[0].mxu0
        %v2246 = vadd.f32 %v2205, %v2245
        %v2247 = vpop.f32.mrb[0].mxu0
        %v2248 = vpop.f32.mrb[0].mxu0
        %v2249 = vadd.f32 %v2208, %v2248
        %v2250 = vpop.f32.mrb[0].mxu0
        %2251 = vdwg.mxu0
        %v2252 = vld [vmem:[%s345 + $0x20] sm:$0xff]
        %v2253 = vld [vmem:[%s345 + $0x28] sm:$0xff]
        %v2254 = vld [vmem:[%s345 + $0x60] sm:$0xff]
        %v2255 = vld [vmem:[%s345 + $0x68] sm:$0xff]
        %v2256 = vld [vmem:[%s345 + $0xa0] sm:$0xff]
        %v2257 = vld [vmem:[%s345 + $0xa8] sm:$0xff]
        %v2258 = vld [vmem:[%s345 + $0xe0] sm:$0xff]
        %v2259 = vld [vmem:[%s345 + $0xe8] sm:$0xff]
        %v2260 = vld [vmem:[%s349 + $0x8] sm:$0xf]
        %v2262 = vlaneseq
        %v2263 = vshrl.u32 %v2262, 7
        %v2264 = vsub.s32 0, %v2263
        %v2265 = vrot.slane %v2260, %v2264
        %v2266 = vlaneseq
        %v2267 = vshrl.u32 %v2266, 7
        %v2268 = vsub.s32 1, %v2267
        %v2269 = vrot.slane %v2260, %v2268
        %v2270 = vlaneseq
        %v2271 = vshrl.u32 %v2270, 7
        %v2272 = vsub.s32 2, %v2271
        %v2273 = vrot.slane %v2260, %v2272
        %v2274 = vlaneseq
        %v2275 = vshrl.u32 %v2274, 7
        %v2276 = vsub.s32 3, %v2275
        %v2277 = vrot.slane %v2260, %v2276
        %v2290 = vunpack.c.l.b16 %v2252
        %v2291 = vunpack.c.h.b16 %v2252
        %v2292 = vunpack.c.l.b16 %v2253
        %v2293 = vunpack.c.h.b16 %v2253
        %v2294 = vunpack.c.l.b16 %v2254
        %v2295 = vunpack.c.h.b16 %v2254
        %v2296 = vunpack.c.l.b16 %v2255
        %v2297 = vunpack.c.h.b16 %v2255
        %v2298 = vunpack.c.l.b16 %v2256
        %v2299 = vunpack.c.h.b16 %v2256
        %v2300 = vunpack.c.l.b16 %v2257
        %v2301 = vunpack.c.h.b16 %v2257
        %v2302 = vunpack.c.l.b16 %v2258
        %v2303 = vunpack.c.h.b16 %v2258
        %v2304 = vunpack.c.l.b16 %v2259
        %v2305 = vunpack.c.h.b16 %v2259
        %v2306 = vpack.c.b16 %v2294, %v2290
        %v2307 = vpack.c.b16 %v2295, %v2291
        %v2308 = vpack.c.b16 %v2296, %v2292
        %v2309 = vpack.c.b16 %v2297, %v2293
        %v2310 = vpack.c.b16 %v2302, %v2298
        %v2311 = vpack.c.b16 %v2303, %v2299
        %v2312 = vpack.c.b16 %v2304, %v2300
        %v2313 = vpack.c.b16 %v2305, %v2301
        %2322 = vmatprep.subr.bf16.mxu0 %v2307
        %2323 = vmatpush1.bf16.msra.mxu0 %v2306
        %2324 = vmatprep.subr.bf16.mxu0 %v2311
        %2325 = vmatpush1.bf16.msra.mxu0 %v2310
        %2326 = vmatprep.subr.bf16.mxu0 0
        %2327 = vmatpush1.bf16.msra.mxu0 0
        %2328 = vmatprep.subr.bf16.mxu0 0
        %2329 = vmatpush1.bf16.msra.mxu0 0
        %2330 = vmatprep.subr.bf16.mxu0 0
        %2331 = vmatpush1.bf16.msra.mxu0 0
        %2332 = vmatprep.subr.bf16.mxu0 0
        %2333 = vmatpush1.bf16.msra.mxu0 0
        %2334 = vmatprep.subr.bf16.mxu0 0
        %2335 = vmatpush1.bf16.msra.mxu0 0
        %2336 = vmatprep.subr.bf16.mxu0 0
        %2337 = vmatpush1.bf16.msra.mxu0 0
        %2338 = vmatprep.subr.bf16.mxu0 0
        %2339 = vmatpush1.bf16.msra.mxu0 0
        %2340 = vmatprep.subr.bf16.mxu0 0
        %2341 = vmatpush1.bf16.msra.mxu0 0
        %2342 = vmatprep.subr.bf16.mxu0 0
        %2343 = vmatpush1.bf16.msra.mxu0 0
        %2344 = vmatprep.subr.bf16.mxu0 0
        %2345 = vmatpush1.bf16.msra.mxu0 0
        %2346 = vmatprep.subr.bf16.mxu0 0
        %2347 = vmatpush1.bf16.msra.mxu0 0
        %2348 = vmatprep.subr.bf16.mxu0 0
        %2349 = vmatpush1.bf16.msra.mxu0 0
        %2350 = vmatprep.subr.bf16.mxu0 0
        %2351 = vmatpush1.bf16.msra.mxu0 0
        %2352 = vmatprep.subr.bf16.mxu0 0
        %2353 = vmatpush1.bf16.msra.mxu0 0
        %2354 = vmatprep.mubr.bf16.mxu0 0
        %2355 = vmatmul.mubr.bf16.gmra.mrb[0].mxu0 %v1308
        %v2356 = vpop.f32.mrb[0].mxu0
        %v2357 = vadd.f32 %v2265, %v2356
        %v2358 = vpop.f32.mrb[0].mxu0
        %v2359 = vadd.f32 %v2269, %v2358
        %v2360 = vpop.f32.mrb[0].mxu0
        %v2361 = vadd.f32 %v2265, %v2360
        %v2362 = vpop.f32.mrb[0].mxu0
        %v2363 = vadd.f32 %v2269, %v2362
        %2364 = vdwg.mxu0
        %2365 = vmatprep.subr.bf16.mxu0 %v2309
        %2366 = vmatpush1.bf16.msra.mxu0 %v2308
        %2367 = vmatprep.subr.bf16.mxu0 %v2313
        %2368 = vmatpush1.bf16.msra.mxu0 %v2312
        %2369 = vmatprep.subr.bf16.mxu0 0
        %2370 = vmatpush1.bf16.msra.mxu0 0
        %2371 = vmatprep.subr.bf16.mxu0 0
        %2372 = vmatpush1.bf16.msra.mxu0 0
        %2373 = vmatprep.subr.bf16.mxu0 0
        %2374 = vmatpush1.bf16.msra.mxu0 0
        %2375 = vmatprep.subr.bf16.mxu0 0
        %2376 = vmatpush1.bf16.msra.mxu0 0
        %2377 = vmatprep.subr.bf16.mxu0 0
        %2378 = vmatpush1.bf16.msra.mxu0 0
        %2379 = vmatprep.subr.bf16.mxu0 0
        %2380 = vmatpush1.bf16.msra.mxu0 0
        %2381 = vmatprep.subr.bf16.mxu0 0
        %2382 = vmatpush1.bf16.msra.mxu0 0
        %2383 = vmatprep.subr.bf16.mxu0 0
        %2384 = vmatpush1.bf16.msra.mxu0 0
        %2385 = vmatprep.subr.bf16.mxu0 0
        %2386 = vmatpush1.bf16.msra.mxu0 0
        %2387 = vmatprep.subr.bf16.mxu0 0
        %2388 = vmatpush1.bf16.msra.mxu0 0
        %2389 = vmatprep.subr.bf16.mxu0 0
        %2390 = vmatpush1.bf16.msra.mxu0 0
        %2391 = vmatprep.subr.bf16.mxu0 0
        %2392 = vmatpush1.bf16.msra.mxu0 0
        %2393 = vmatprep.subr.bf16.mxu0 0
        %2394 = vmatpush1.bf16.msra.mxu0 0
        %2395 = vmatprep.subr.bf16.mxu0 0
        %2396 = vmatpush1.bf16.msra.mxu0 0
        %2397 = vmatprep.mubr.bf16.mxu0 0
        %2398 = vmatmul.mubr.bf16.gmra.mrb[0].mxu0 %v1308
        %v2399 = vpop.f32.mrb[0].mxu0
        %v2400 = vadd.f32 %v2273, %v2399
        %v2401 = vpop.f32.mrb[0].mxu0
        %v2402 = vadd.f32 %v2277, %v2401
        %v2403 = vpop.f32.mrb[0].mxu0
        %v2404 = vadd.f32 %v2273, %v2403
        %v2405 = vpop.f32.mrb[0].mxu0
        %v2406 = vadd.f32 %v2277, %v2405
        %2407 = vdwg.mxu0
        %v2408 = vmax.f32 %v2357, 0.0
        %v2409 = vmax.f32 %v2359, 0.0
        %v2410 = vmax.f32 %v2400, 0.0
        %v2411 = vmax.f32 %v2402, 0.0
        %v2412 = vmax.f32 %v2361, 0.0
        %v2413 = vmax.f32 %v2363, 0.0
        %v2414 = vmax.f32 %v2404, 0.0
        %v2415 = vmax.f32 %v2406, 0.0
        %v2416 = vpack.c.bf16 %v2412, %v2408
        %v2417 = vpack.c.bf16 %v2413, %v2409
        %v2418 = vpack.c.bf16 %v2414, %v2410
        %v2419 = vpack.c.bf16 %v2415, %v2411
        %v2420 = vld [vmem:[%s354 + $0x200] sm:$0xf]
        %v2421 = vld [vmem:[%s354 + $0x204] sm:$0xf]
        %v2422 = vld [vmem:[%s354 + $0x208] sm:$0xf]
        %v2423 = vld [vmem:[%s354 + $0x20c] sm:$0xf]
        %v2424 = vld [vmem:[%s354 + $0x210] sm:$0xf]
        %v2425 = vld [vmem:[%s354 + $0x214] sm:$0xf]
        %v2426 = vld [vmem:[%s354 + $0x218] sm:$0xf]
        %v2427 = vld [vmem:[%s354 + $0x21c] sm:$0xf]
        %v2428 = vld [vmem:[%s354 + $0x220] sm:$0xf]
        %v2429 = vld [vmem:[%s354 + $0x224] sm:$0xf]
        %v2430 = vld [vmem:[%s354 + $0x228] sm:$0xf]
        %v2431 = vld [vmem:[%s354 + $0x22c] sm:$0xf]
        %v2432 = vld [vmem:[%s354 + $0x230] sm:$0xf]
        %v2433 = vld [vmem:[%s354 + $0x234] sm:$0xf]
        %v2434 = vld [vmem:[%s354 + $0x238] sm:$0xf]
        %v2435 = vld [vmem:[%s354 + $0x23c] sm:$0xf]
        %v2436 = vld [vmem:[%s354 + $0x240] sm:$0xf]
        %v2437 = vld [vmem:[%s354 + $0x244] sm:$0xf]
        %v2438 = vld [vmem:[%s354 + $0x248] sm:$0xf]
        %v2439 = vld [vmem:[%s354 + $0x24c] sm:$0xf]
        %v2440 = vld [vmem:[%s354 + $0x250] sm:$0xf]
        %v2441 = vld [vmem:[%s354 + $0x254] sm:$0xf]
        %v2442 = vld [vmem:[%s354 + $0x258] sm:$0xf]
        %v2443 = vld [vmem:[%s354 + $0x25c] sm:$0xf]
        %v2444 = vld [vmem:[%s354 + $0x260] sm:$0xf]
        %v2445 = vld [vmem:[%s354 + $0x264] sm:$0xf]
        %v2446 = vld [vmem:[%s354 + $0x268] sm:$0xf]
        %v2447 = vld [vmem:[%s354 + $0x26c] sm:$0xf]
        %v2448 = vld [vmem:[%s354 + $0x270] sm:$0xf]
        %v2449 = vld [vmem:[%s354 + $0x274] sm:$0xf]
        %v2450 = vld [vmem:[%s354 + $0x278] sm:$0xf]
        %v2451 = vld [vmem:[%s354 + $0x27c] sm:$0xf]
        %v2452 = vld [vmem:[%s354 + $0x280] sm:$0xf]
        %v2453 = vld [vmem:[%s354 + $0x284] sm:$0xf]
        %v2454 = vld [vmem:[%s354 + $0x288] sm:$0xf]
        %v2455 = vld [vmem:[%s354 + $0x28c] sm:$0xf]
        %v2456 = vld [vmem:[%s354 + $0x290] sm:$0xf]
        %v2457 = vld [vmem:[%s354 + $0x294] sm:$0xf]
        %v2458 = vld [vmem:[%s354 + $0x298] sm:$0xf]
        %v2459 = vld [vmem:[%s354 + $0x29c] sm:$0xf]
        %v2460 = vld [vmem:[%s354 + $0x2a0] sm:$0xf]
        %v2461 = vld [vmem:[%s354 + $0x2a4] sm:$0xf]
        %v2462 = vld [vmem:[%s354 + $0x2a8] sm:$0xf]
        %v2463 = vld [vmem:[%s354 + $0x2ac] sm:$0xf]
        %v2464 = vld [vmem:[%s354 + $0x2b0] sm:$0xf]
        %v2465 = vld [vmem:[%s354 + $0x2b4] sm:$0xf]
        %v2466 = vld [vmem:[%s354 + $0x2b8] sm:$0xf]
        %v2467 = vld [vmem:[%s354 + $0x2bc] sm:$0xf]
        %v2468 = vld [vmem:[%s354 + $0x2c0] sm:$0xf]
        %v2469 = vld [vmem:[%s354 + $0x2c4] sm:$0xf]
        %v2470 = vld [vmem:[%s354 + $0x2c8] sm:$0xf]
        %v2471 = vld [vmem:[%s354 + $0x2cc] sm:$0xf]
        %v2472 = vld [vmem:[%s354 + $0x2d0] sm:$0xf]
        %v2473 = vld [vmem:[%s354 + $0x2d4] sm:$0xf]
        %v2474 = vld [vmem:[%s354 + $0x2d8] sm:$0xf]
        %v2475 = vld [vmem:[%s354 + $0x2dc] sm:$0xf]
        %v2476 = vld [vmem:[%s354 + $0x2e0] sm:$0xf]
        %v2477 = vld [vmem:[%s354 + $0x2e4] sm:$0xf]
        %v2478 = vld [vmem:[%s354 + $0x2e8] sm:$0xf]
        %v2479 = vld [vmem:[%s354 + $0x2ec] sm:$0xf]
        %v2480 = vld [vmem:[%s354 + $0x2f0] sm:$0xf]
        %v2481 = vld [vmem:[%s354 + $0x2f4] sm:$0xf]
        %v2482 = vld [vmem:[%s354 + $0x2f8] sm:$0xf]
        %v2483 = vld [vmem:[%s354 + $0x2fc] sm:$0xf]
        %v2548 = vunpack.c.l.b16 %v2420
        %v2549 = vunpack.c.l.b16 %v2421
        %v2550 = vunpack.c.l.b16 %v2422
        %v2551 = vunpack.c.l.b16 %v2423
        %v2552 = vunpack.c.l.b16 %v2424
        %v2553 = vunpack.c.l.b16 %v2425
        %v2554 = vunpack.c.l.b16 %v2426
        %v2555 = vunpack.c.l.b16 %v2427
        %v2556 = vunpack.c.l.b16 %v2428
        %v2557 = vunpack.c.l.b16 %v2429
        %v2558 = vunpack.c.l.b16 %v2430
        %v2559 = vunpack.c.l.b16 %v2431
        %v2560 = vunpack.c.l.b16 %v2432
        %v2561 = vunpack.c.l.b16 %v2433
        %v2562 = vunpack.c.l.b16 %v2434
        %v2563 = vunpack.c.l.b16 %v2435
        %v2564 = vunpack.c.l.b16 %v2436
        %v2565 = vunpack.c.l.b16 %v2437
        %v2566 = vunpack.c.l.b16 %v2438
        %v2567 = vunpack.c.l.b16 %v2439
        %v2568 = vunpack.c.l.b16 %v2440
        %v2569 = vunpack.c.l.b16 %v2441
        %v2570 = vunpack.c.l.b16 %v2442
        %v2571 = vunpack.c.l.b16 %v2443
        %v2572 = vunpack.c.l.b16 %v2444
        %v2573 = vunpack.c.l.b16 %v2445
        %v2574 = vunpack.c.l.b16 %v2446
        %v2575 = vunpack.c.l.b16 %v2447
        %v2576 = vunpack.c.l.b16 %v2448
        %v2577 = vunpack.c.l.b16 %v2449
        %v2578 = vunpack.c.l.b16 %v2450
        %v2579 = vunpack.c.l.b16 %v2451
        %v2580 = vunpack.c.l.b16 %v2452
        %v2581 = vunpack.c.l.b16 %v2453
        %v2582 = vunpack.c.l.b16 %v2454
        %v2583 = vunpack.c.l.b16 %v2455
        %v2584 = vunpack.c.l.b16 %v2456
        %v2585 = vunpack.c.l.b16 %v2457
        %v2586 = vunpack.c.l.b16 %v2458
        %v2587 = vunpack.c.l.b16 %v2459
        %v2588 = vunpack.c.l.b16 %v2460
        %v2589 = vunpack.c.l.b16 %v2461
        %v2590 = vunpack.c.l.b16 %v2462
        %v2591 = vunpack.c.l.b16 %v2463
        %v2592 = vunpack.c.l.b16 %v2464
        %v2593 = vunpack.c.l.b16 %v2465
        %v2594 = vunpack.c.l.b16 %v2466
        %v2595 = vunpack.c.l.b16 %v2467
        %v2596 = vunpack.c.l.b16 %v2468
        %v2597 = vunpack.c.l.b16 %v2469
        %v2598 = vunpack.c.l.b16 %v2470
        %v2599 = vunpack.c.l.b16 %v2471
        %v2600 = vunpack.c.l.b16 %v2472
        %v2601 = vunpack.c.l.b16 %v2473
        %v2602 = vunpack.c.l.b16 %v2474
        %v2603 = vunpack.c.l.b16 %v2475
        %v2604 = vunpack.c.l.b16 %v2476
        %v2605 = vunpack.c.l.b16 %v2477
        %v2606 = vunpack.c.l.b16 %v2478
        %v2607 = vunpack.c.l.b16 %v2479
        %v2608 = vunpack.c.l.b16 %v2480
        %v2609 = vunpack.c.l.b16 %v2481
        %v2610 = vunpack.c.l.b16 %v2482
        %v2611 = vunpack.c.l.b16 %v2483
        %v2612 = vpack.c.b16 %v2549, %v2548
        %v2613 = vpack.c.b16 %v2551, %v2550
        %v2614 = vpack.c.b16 %v2553, %v2552
        %v2615 = vpack.c.b16 %v2555, %v2554
        %v2616 = vpack.c.b16 %v2557, %v2556
        %v2617 = vpack.c.b16 %v2559, %v2558
        %v2618 = vpack.c.b16 %v2561, %v2560
        %v2619 = vpack.c.b16 %v2563, %v2562
        %v2620 = vpack.c.b16 %v2565, %v2564
        %v2621 = vpack.c.b16 %v2567, %v2566
        %v2622 = vpack.c.b16 %v2569, %v2568
        %v2623 = vpack.c.b16 %v2571, %v2570
        %v2624 = vpack.c.b16 %v2573, %v2572
        %v2625 = vpack.c.b16 %v2575, %v2574
        %v2626 = vpack.c.b16 %v2577, %v2576
        %v2627 = vpack.c.b16 %v2579, %v2578
        %v2628 = vpack.c.b16 %v2581, %v2580
        %v2629 = vpack.c.b16 %v2583, %v2582
        %v2630 = vpack.c.b16 %v2585, %v2584
        %v2631 = vpack.c.b16 %v2587, %v2586
        %v2632 = vpack.c.b16 %v2589, %v2588
        %v2633 = vpack.c.b16 %v2591, %v2590
        %v2634 = vpack.c.b16 %v2593, %v2592
        %v2635 = vpack.c.b16 %v2595, %v2594
        %v2636 = vpack.c.b16 %v2597, %v2596
        %v2637 = vpack.c.b16 %v2599, %v2598
        %v2638 = vpack.c.b16 %v2601, %v2600
        %v2639 = vpack.c.b16 %v2603, %v2602
        %v2640 = vpack.c.b16 %v2605, %v2604
        %v2641 = vpack.c.b16 %v2607, %v2606
        %v2642 = vpack.c.b16 %v2609, %v2608
        %v2643 = vpack.c.b16 %v2611, %v2610
        %2676 = vmatprep.subr.bf16.mxu0 0
        %2677 = vmatpush1.bf16.msra.mxu0 %v2612
        %2678 = vmatprep.subr.bf16.mxu0 0
        %2679 = vmatpush1.bf16.msra.mxu0 %v2613
        %2680 = vmatprep.subr.bf16.mxu0 0
        %2681 = vmatpush1.bf16.msra.mxu0 %v2614
        %2682 = vmatprep.subr.bf16.mxu0 0
        %2683 = vmatpush1.bf16.msra.mxu0 %v2615
        %2684 = vmatprep.subr.bf16.mxu0 0
        %2685 = vmatpush1.bf16.msra.mxu0 %v2616
        %2686 = vmatprep.subr.bf16.mxu0 0
        %2687 = vmatpush1.bf16.msra.mxu0 %v2617
        %2688 = vmatprep.subr.bf16.mxu0 0
        %2689 = vmatpush1.bf16.msra.mxu0 %v2618
        %2690 = vmatprep.subr.bf16.mxu0 0
        %2691 = vmatpush1.bf16.msra.mxu0 %v2619
        %2692 = vmatprep.subr.bf16.mxu0 0
        %2693 = vmatpush1.bf16.msra.mxu0 %v2620
        %2694 = vmatprep.subr.bf16.mxu0 0
        %2695 = vmatpush1.bf16.msra.mxu0 %v2621
        %2696 = vmatprep.subr.bf16.mxu0 0
        %2697 = vmatpush1.bf16.msra.mxu0 %v2622
        %2698 = vmatprep.subr.bf16.mxu0 0
        %2699 = vmatpush1.bf16.msra.mxu0 %v2623
        %2700 = vmatprep.subr.bf16.mxu0 0
        %2701 = vmatpush1.bf16.msra.mxu0 %v2624
        %2702 = vmatprep.subr.bf16.mxu0 0
        %2703 = vmatpush1.bf16.msra.mxu0 %v2625
        %2704 = vmatprep.subr.bf16.mxu0 0
        %2705 = vmatpush1.bf16.msra.mxu0 %v2626
        %2706 = vmatprep.subr.bf16.mxu0 0
        %2707 = vmatpush1.bf16.msra.mxu0 %v2627
        %2708 = vmatprep.mubr.bf16.mxu0 %v2417
        %2709 = vmatmul.mubr.bf16.gmra.mrb[0].mxu0 %v2416
        %v2710 = vpop.f32.mrb[0].mxu0
        %v2711 = vadd.f32 0.0, %v2710
        %v2712 = vpop.f32.mrb[0].mxu0
        %v2713 = vpop.f32.mrb[0].mxu0
        %v2714 = vadd.f32 0.0, %v2713
        %v2715 = vpop.f32.mrb[0].mxu0
        %2716 = vdwg.mxu0
        %2717 = vmatprep.subr.bf16.mxu0 0
        %2718 = vmatpush1.bf16.msra.mxu0 %v2628
        %2719 = vmatprep.subr.bf16.mxu0 0
        %2720 = vmatpush1.bf16.msra.mxu0 %v2629
        %2721 = vmatprep.subr.bf16.mxu0 0
        %2722 = vmatpush1.bf16.msra.mxu0 %v2630
        %2723 = vmatprep.subr.bf16.mxu0 0
        %2724 = vmatpush1.bf16.msra.mxu0 %v2631
        %2725 = vmatprep.subr.bf16.mxu0 0
        %2726 = vmatpush1.bf16.msra.mxu0 %v2632
        %2727 = vmatprep.subr.bf16.mxu0 0
        %2728 = vmatpush1.bf16.msra.mxu0 %v2633
        %2729 = vmatprep.subr.bf16.mxu0 0
        %2730 = vmatpush1.bf16.msra.mxu0 %v2634
        %2731 = vmatprep.subr.bf16.mxu0 0
        %2732 = vmatpush1.bf16.msra.mxu0 %v2635
        %2733 = vmatprep.subr.bf16.mxu0 0
        %2734 = vmatpush1.bf16.msra.mxu0 %v2636
        %2735 = vmatprep.subr.bf16.mxu0 0
        %2736 = vmatpush1.bf16.msra.mxu0 %v2637
        %2737 = vmatprep.subr.bf16.mxu0 0
        %2738 = vmatpush1.bf16.msra.mxu0 %v2638
        %2739 = vmatprep.subr.bf16.mxu0 0
        %2740 = vmatpush1.bf16.msra.mxu0 %v2639
        %2741 = vmatprep.subr.bf16.mxu0 0
        %2742 = vmatpush1.bf16.msra.mxu0 %v2640
        %2743 = vmatprep.subr.bf16.mxu0 0
        %2744 = vmatpush1.bf16.msra.mxu0 %v2641
        %2745 = vmatprep.subr.bf16.mxu0 0
        %2746 = vmatpush1.bf16.msra.mxu0 %v2642
        %2747 = vmatprep.subr.bf16.mxu0 0
        %2748 = vmatpush1.bf16.msra.mxu0 %v2643
        %2749 = vmatprep.mubr.bf16.mxu0 %v2419
        %2750 = vmatmul.mubr.bf16.gmra.mrb[0].mxu0 %v2418
        %v2751 = vpop.f32.mrb[0].mxu0
        %v2752 = vadd.f32 %v2711, %v2751
        %v2753 = vpop.f32.mrb[0].mxu0
        %v2754 = vpop.f32.mrb[0].mxu0
        %v2755 = vadd.f32 %v2714, %v2754
        %v2756 = vpop.f32.mrb[0].mxu0
        %2757 = vdwg.mxu0
        %v2758 = vadd.f32 %v2246, %v2752
        %v2759 = vadd.f32 %v2249, %v2755
        %v2760 = vld [vmem:[%s345 + $0x30] sm:$0xff]
        %v2761 = vld [vmem:[%s345 + $0x38] sm:$0xff]
        %v2762 = vld [vmem:[%s345 + $0x70] sm:$0xff]
        %v2763 = vld [vmem:[%s345 + $0x78] sm:$0xff]
        %v2764 = vld [vmem:[%s345 + $0xb0] sm:$0xff]
        %v2765 = vld [vmem:[%s345 + $0xb8] sm:$0xff]
        %v2766 = vld [vmem:[%s345 + $0xf0] sm:$0xff]
        %v2767 = vld [vmem:[%s345 + $0xf8] sm:$0xff]
        %v2768 = vld [vmem:[%s349 + $0xc] sm:$0xf]
        %v2770 = vlaneseq
        %v2771 = vshrl.u32 %v2770, 7
        %v2772 = vsub.s32 0, %v2771
        %v2773 = vrot.slane %v2768, %v2772
        %v2774 = vlaneseq
        %v2775 = vshrl.u32 %v2774, 7
        %v2776 = vsub.s32 1, %v2775
        %v2777 = vrot.slane %v2768, %v2776
        %v2778 = vlaneseq
        %v2779 = vshrl.u32 %v2778, 7
        %v2780 = vsub.s32 2, %v2779
        %v2781 = vrot.slane %v2768, %v2780
        %v2782 = vlaneseq
        %v2783 = vshrl.u32 %v2782, 7
        %v2784 = vsub.s32 3, %v2783
        %v2785 = vrot.slane %v2768, %v2784
        %v2798 = vunpack.c.l.b16 %v2760
        %v2799 = vunpack.c.h.b16 %v2760
        %v2800 = vunpack.c.l.b16 %v2761
        %v2801 = vunpack.c.h.b16 %v2761
        %v2802 = vunpack.c.l.b16 %v2762
        %v2803 = vunpack.c.h.b16 %v2762
        %v2804 = vunpack.c.l.b16 %v2763
        %v2805 = vunpack.c.h.b16 %v2763
        %v2806 = vunpack.c.l.b16 %v2764
        %v2807 = vunpack.c.h.b16 %v2764
        %v2808 = vunpack.c.l.b16 %v2765
        %v2809 = vunpack.c.h.b16 %v2765
        %v2810 = vunpack.c.l.b16 %v2766
        %v2811 = vunpack.c.h.b16 %v2766
        %v2812 = vunpack.c.l.b16 %v2767
        %v2813 = vunpack.c.h.b16 %v2767
        %v2814 = vpack.c.b16 %v2802, %v2798
        %v2815 = vpack.c.b16 %v2803, %v2799
        %v2816 = vpack.c.b16 %v2804, %v2800
        %v2817 = vpack.c.b16 %v2805, %v2801
        %v2818 = vpack.c.b16 %v2810, %v2806
        %v2819 = vpack.c.b16 %v2811, %v2807
        %v2820 = vpack.c.b16 %v2812, %v2808
        %v2821 = vpack.c.b16 %v2813, %v2809
        %2830 = vmatprep.subr.bf16.mxu0 %v2815
        %2831 = vmatpush1.bf16.msra.mxu0 %v2814
        %2832 = vmatprep.subr.bf16.mxu0 %v2819
        %2833 = vmatpush1.bf16.msra.mxu0 %v2818
        %2834 = vmatprep.subr.bf16.mxu0 0
        %2835 = vmatpush1.bf16.msra.mxu0 0
        %2836 = vmatprep.subr.bf16.mxu0 0
        %2837 = vmatpush1.bf16.msra.mxu0 0
        %2838 = vmatprep.subr.bf16.mxu0 0
        %2839 = vmatpush1.bf16.msra.mxu0 0
        %2840 = vmatprep.subr.bf16.mxu0 0
        %2841 = vmatpush1.bf16.msra.mxu0 0
        %2842 = vmatprep.subr.bf16.mxu0 0
        %2843 = vmatpush1.bf16.msra.mxu0 0
        %2844 = vmatprep.subr.bf16.mxu0 0
        %2845 = vmatpush1.bf16.msra.mxu0 0
        %2846 = vmatprep.subr.bf16.mxu0 0
        %2847 = vmatpush1.bf16.msra.mxu0 0
        %2848 = vmatprep.subr.bf16.mxu0 0
        %2849 = vmatpush1.bf16.msra.mxu0 0
        %2850 = vmatprep.subr.bf16.mxu0 0
        %2851 = vmatpush1.bf16.msra.mxu0 0
        %2852 = vmatprep.subr.bf16.mxu0 0
        %2853 = vmatpush1.bf16.msra.mxu0 0
        %2854 = vmatprep.subr.bf16.mxu0 0
        %2855 = vmatpush1.bf16.msra.mxu0 0
        %2856 = vmatprep.subr.bf16.mxu0 0
        %2857 = vmatpush1.bf16.msra.mxu0 0
        %2858 = vmatprep.subr.bf16.mxu0 0
        %2859 = vmatpush1.bf16.msra.mxu0 0
        %2860 = vmatprep.subr.bf16.mxu0 0
        %2861 = vmatpush1.bf16.msra.mxu0 0
        %2862 = vmatprep.mubr.bf16.mxu0 0
        %2863 = vmatmul.mubr.bf16.gmra.mrb[0].mxu0 %v1308
        %v2864 = vpop.f32.mrb[0].mxu0
        %v2865 = vadd.f32 %v2773, %v2864
        %v2866 = vpop.f32.mrb[0].mxu0
        %v2867 = vadd.f32 %v2777, %v2866
        %v2868 = vpop.f32.mrb[0].mxu0
        %v2869 = vadd.f32 %v2773, %v2868
        %v2870 = vpop.f32.mrb[0].mxu0
        %v2871 = vadd.f32 %v2777, %v2870
        %2872 = vdwg.mxu0
        %2873 = vmatprep.subr.bf16.mxu0 %v2817
        %2874 = vmatpush1.bf16.msra.mxu0 %v2816
        %2875 = vmatprep.subr.bf16.mxu0 %v2821
        %2876 = vmatpush1.bf16.msra.mxu0 %v2820
        %2877 = vmatprep.subr.bf16.mxu0 0
        %2878 = vmatpush1.bf16.msra.mxu0 0
        %2879 = vmatprep.subr.bf16.mxu0 0
        %2880 = vmatpush1.bf16.msra.mxu0 0
        %2881 = vmatprep.subr.bf16.mxu0 0
        %2882 = vmatpush1.bf16.msra.mxu0 0
        %2883 = vmatprep.subr.bf16.mxu0 0
        %2884 = vmatpush1.bf16.msra.mxu0 0
        %2885 = vmatprep.subr.bf16.mxu0 0
        %2886 = vmatpush1.bf16.msra.mxu0 0
        %2887 = vmatprep.subr.bf16.mxu0 0
        %2888 = vmatpush1.bf16.msra.mxu0 0
        %2889 = vmatprep.subr.bf16.mxu0 0
        %2890 = vmatpush1.bf16.msra.mxu0 0
        %2891 = vmatprep.subr.bf16.mxu0 0
        %2892 = vmatpush1.bf16.msra.mxu0 0
        %2893 = vmatprep.subr.bf16.mxu0 0
        %2894 = vmatpush1.bf16.msra.mxu0 0
        %2895 = vmatprep.subr.bf16.mxu0 0
        %2896 = vmatpush1.bf16.msra.mxu0 0
        %2897 = vmatprep.subr.bf16.mxu0 0
        %2898 = vmatpush1.bf16.msra.mxu0 0
        %2899 = vmatprep.subr.bf16.mxu0 0
        %2900 = vmatpush1.bf16.msra.mxu0 0
        %2901 = vmatprep.subr.bf16.mxu0 0
        %2902 = vmatpush1.bf16.msra.mxu0 0
        %2903 = vmatprep.subr.bf16.mxu0 0
        %2904 = vmatpush1.bf16.msra.mxu0 0
        %2905 = vmatprep.mubr.bf16.mxu0 0
        %2906 = vmatmul.mubr.bf16.gmra.mrb[0].mxu0 %v1308
        %v2907 = vpop.f32.mrb[0].mxu0
        %v2908 = vadd.f32 %v2781, %v2907
        %v2909 = vpop.f32.mrb[0].mxu0
        %v2910 = vadd.f32 %v2785, %v2909
        %v2911 = vpop.f32.mrb[0].mxu0
        %v2912 = vadd.f32 %v2781, %v2911
        %v2913 = vpop.f32.mrb[0].mxu0
        %v2914 = vadd.f32 %v2785, %v2913
        %2915 = vdwg.mxu0
        %v2916 = vmax.f32 %v2865, 0.0
        %v2917 = vmax.f32 %v2867, 0.0
        %v2918 = vmax.f32 %v2908, 0.0
        %v2919 = vmax.f32 %v2910, 0.0
        %v2920 = vmax.f32 %v2869, 0.0
        %v2921 = vmax.f32 %v2871, 0.0
        %v2922 = vmax.f32 %v2912, 0.0
        %v2923 = vmax.f32 %v2914, 0.0
        %v2924 = vpack.c.bf16 %v2920, %v2916
        %v2925 = vpack.c.bf16 %v2921, %v2917
        %v2926 = vpack.c.bf16 %v2922, %v2918
        %v2927 = vpack.c.bf16 %v2923, %v2919
        %v2928 = vld [vmem:[%s354 + $0x300] sm:$0xf]
        %v2929 = vld [vmem:[%s354 + $0x304] sm:$0xf]
        %v2930 = vld [vmem:[%s354 + $0x308] sm:$0xf]
        %v2931 = vld [vmem:[%s354 + $0x30c] sm:$0xf]
        %v2932 = vld [vmem:[%s354 + $0x310] sm:$0xf]
        %v2933 = vld [vmem:[%s354 + $0x314] sm:$0xf]
        %v2934 = vld [vmem:[%s354 + $0x318] sm:$0xf]
        %v2935 = vld [vmem:[%s354 + $0x31c] sm:$0xf]
        %v2936 = vld [vmem:[%s354 + $0x320] sm:$0xf]
        %v2937 = vld [vmem:[%s354 + $0x324] sm:$0xf]
        %v2938 = vld [vmem:[%s354 + $0x328] sm:$0xf]
        %v2939 = vld [vmem:[%s354 + $0x32c] sm:$0xf]
        %v2940 = vld [vmem:[%s354 + $0x330] sm:$0xf]
        %v2941 = vld [vmem:[%s354 + $0x334] sm:$0xf]
        %v2942 = vld [vmem:[%s354 + $0x338] sm:$0xf]
        %v2943 = vld [vmem:[%s354 + $0x33c] sm:$0xf]
        %v2944 = vld [vmem:[%s354 + $0x340] sm:$0xf]
        %v2945 = vld [vmem:[%s354 + $0x344] sm:$0xf]
        %v2946 = vld [vmem:[%s354 + $0x348] sm:$0xf]
        %v2947 = vld [vmem:[%s354 + $0x34c] sm:$0xf]
        %v2948 = vld [vmem:[%s354 + $0x350] sm:$0xf]
        %v2949 = vld [vmem:[%s354 + $0x354] sm:$0xf]
        %v2950 = vld [vmem:[%s354 + $0x358] sm:$0xf]
        %v2951 = vld [vmem:[%s354 + $0x35c] sm:$0xf]
        %v2952 = vld [vmem:[%s354 + $0x360] sm:$0xf]
        %v2953 = vld [vmem:[%s354 + $0x364] sm:$0xf]
        %v2954 = vld [vmem:[%s354 + $0x368] sm:$0xf]
        %v2955 = vld [vmem:[%s354 + $0x36c] sm:$0xf]
        %v2956 = vld [vmem:[%s354 + $0x370] sm:$0xf]
        %v2957 = vld [vmem:[%s354 + $0x374] sm:$0xf]
        %v2958 = vld [vmem:[%s354 + $0x378] sm:$0xf]
        %v2959 = vld [vmem:[%s354 + $0x37c] sm:$0xf]
        %v2960 = vld [vmem:[%s354 + $0x380] sm:$0xf]
        %v2961 = vld [vmem:[%s354 + $0x384] sm:$0xf]
        %v2962 = vld [vmem:[%s354 + $0x388] sm:$0xf]
        %v2963 = vld [vmem:[%s354 + $0x38c] sm:$0xf]
        %v2964 = vld [vmem:[%s354 + $0x390] sm:$0xf]
        %v2965 = vld [vmem:[%s354 + $0x394] sm:$0xf]
        %v2966 = vld [vmem:[%s354 + $0x398] sm:$0xf]
        %v2967 = vld [vmem:[%s354 + $0x39c] sm:$0xf]
        %v2968 = vld [vmem:[%s354 + $0x3a0] sm:$0xf]
        %v2969 = vld [vmem:[%s354 + $0x3a4] sm:$0xf]
        %v2970 = vld [vmem:[%s354 + $0x3a8] sm:$0xf]
        %v2971 = vld [vmem:[%s354 + $0x3ac] sm:$0xf]
        %v2972 = vld [vmem:[%s354 + $0x3b0] sm:$0xf]
        %v2973 = vld [vmem:[%s354 + $0x3b4] sm:$0xf]
        %v2974 = vld [vmem:[%s354 + $0x3b8] sm:$0xf]
        %v2975 = vld [vmem:[%s354 + $0x3bc] sm:$0xf]
        %v2976 = vld [vmem:[%s354 + $0x3c0] sm:$0xf]
        %v2977 = vld [vmem:[%s354 + $0x3c4] sm:$0xf]
        %v2978 = vld [vmem:[%s354 + $0x3c8] sm:$0xf]
        %v2979 = vld [vmem:[%s354 + $0x3cc] sm:$0xf]
        %v2980 = vld [vmem:[%s354 + $0x3d0] sm:$0xf]
        %v2981 = vld [vmem:[%s354 + $0x3d4] sm:$0xf]
        %v2982 = vld [vmem:[%s354 + $0x3d8] sm:$0xf]
        %v2983 = vld [vmem:[%s354 + $0x3dc] sm:$0xf]
        %v2984 = vld [vmem:[%s354 + $0x3e0] sm:$0xf]
        %v2985 = vld [vmem:[%s354 + $0x3e4] sm:$0xf]
        %v2986 = vld [vmem:[%s354 + $0x3e8] sm:$0xf]
        %v2987 = vld [vmem:[%s354 + $0x3ec] sm:$0xf]
        %v2988 = vld [vmem:[%s354 + $0x3f0] sm:$0xf]
        %v2989 = vld [vmem:[%s354 + $0x3f4] sm:$0xf]
        %v2990 = vld [vmem:[%s354 + $0x3f8] sm:$0xf]
        %v2991 = vld [vmem:[%s354 + $0x3fc] sm:$0xf]
        %v3056 = vunpack.c.l.b16 %v2928
        %v3057 = vunpack.c.l.b16 %v2929
        %v3058 = vunpack.c.l.b16 %v2930
        %v3059 = vunpack.c.l.b16 %v2931
        %v3060 = vunpack.c.l.b16 %v2932
        %v3061 = vunpack.c.l.b16 %v2933
        %v3062 = vunpack.c.l.b16 %v2934
        %v3063 = vunpack.c.l.b16 %v2935
        %v3064 = vunpack.c.l.b16 %v2936
        %v3065 = vunpack.c.l.b16 %v2937
        %v3066 = vunpack.c.l.b16 %v2938
        %v3067 = vunpack.c.l.b16 %v2939
        %v3068 = vunpack.c.l.b16 %v2940
        %v3069 = vunpack.c.l.b16 %v2941
        %v3070 = vunpack.c.l.b16 %v2942
        %v3071 = vunpack.c.l.b16 %v2943
        %v3072 = vunpack.c.l.b16 %v2944
        %v3073 = vunpack.c.l.b16 %v2945
        %v3074 = vunpack.c.l.b16 %v2946
        %v3075 = vunpack.c.l.b16 %v2947
        %v3076 = vunpack.c.l.b16 %v2948
        %v3077 = vunpack.c.l.b16 %v2949
        %v3078 = vunpack.c.l.b16 %v2950
        %v3079 = vunpack.c.l.b16 %v2951
        %v3080 = vunpack.c.l.b16 %v2952
        %v3081 = vunpack.c.l.b16 %v2953
        %v3082 = vunpack.c.l.b16 %v2954
        %v3083 = vunpack.c.l.b16 %v2955
        %v3084 = vunpack.c.l.b16 %v2956
        %v3085 = vunpack.c.l.b16 %v2957
        %v3086 = vunpack.c.l.b16 %v2958
        %v3087 = vunpack.c.l.b16 %v2959
        %v3088 = vunpack.c.l.b16 %v2960
        %v3089 = vunpack.c.l.b16 %v2961
        %v3090 = vunpack.c.l.b16 %v2962
        %v3091 = vunpack.c.l.b16 %v2963
        %v3092 = vunpack.c.l.b16 %v2964
        %v3093 = vunpack.c.l.b16 %v2965
        %v3094 = vunpack.c.l.b16 %v2966
        %v3095 = vunpack.c.l.b16 %v2967
        %v3096 = vunpack.c.l.b16 %v2968
        %v3097 = vunpack.c.l.b16 %v2969
        %v3098 = vunpack.c.l.b16 %v2970
        %v3099 = vunpack.c.l.b16 %v2971
        %v3100 = vunpack.c.l.b16 %v2972
        %v3101 = vunpack.c.l.b16 %v2973
        %v3102 = vunpack.c.l.b16 %v2974
        %v3103 = vunpack.c.l.b16 %v2975
        %v3104 = vunpack.c.l.b16 %v2976
        %v3105 = vunpack.c.l.b16 %v2977
        %v3106 = vunpack.c.l.b16 %v2978
        %v3107 = vunpack.c.l.b16 %v2979
        %v3108 = vunpack.c.l.b16 %v2980
        %v3109 = vunpack.c.l.b16 %v2981
        %v3110 = vunpack.c.l.b16 %v2982
        %v3111 = vunpack.c.l.b16 %v2983
        %v3112 = vunpack.c.l.b16 %v2984
        %v3113 = vunpack.c.l.b16 %v2985
        %v3114 = vunpack.c.l.b16 %v2986
        %v3115 = vunpack.c.l.b16 %v2987
        %v3116 = vunpack.c.l.b16 %v2988
        %v3117 = vunpack.c.l.b16 %v2989
        %v3118 = vunpack.c.l.b16 %v2990
        %v3119 = vunpack.c.l.b16 %v2991
        %v3120 = vpack.c.b16 %v3057, %v3056
        %v3121 = vpack.c.b16 %v3059, %v3058
        %v3122 = vpack.c.b16 %v3061, %v3060
        %v3123 = vpack.c.b16 %v3063, %v3062
        %v3124 = vpack.c.b16 %v3065, %v3064
        %v3125 = vpack.c.b16 %v3067, %v3066
        %v3126 = vpack.c.b16 %v3069, %v3068
        %v3127 = vpack.c.b16 %v3071, %v3070
        %v3128 = vpack.c.b16 %v3073, %v3072
        %v3129 = vpack.c.b16 %v3075, %v3074
        %v3130 = vpack.c.b16 %v3077, %v3076
        %v3131 = vpack.c.b16 %v3079, %v3078
        %v3132 = vpack.c.b16 %v3081, %v3080
        %v3133 = vpack.c.b16 %v3083, %v3082
        %v3134 = vpack.c.b16 %v3085, %v3084
        %v3135 = vpack.c.b16 %v3087, %v3086
        %v3136 = vpack.c.b16 %v3089, %v3088
        %v3137 = vpack.c.b16 %v3091, %v3090
        %v3138 = vpack.c.b16 %v3093, %v3092
        %v3139 = vpack.c.b16 %v3095, %v3094
        %v3140 = vpack.c.b16 %v3097, %v3096
        %v3141 = vpack.c.b16 %v3099, %v3098
        %v3142 = vpack.c.b16 %v3101, %v3100
        %v3143 = vpack.c.b16 %v3103, %v3102
        %v3144 = vpack.c.b16 %v3105, %v3104
        %v3145 = vpack.c.b16 %v3107, %v3106
        %v3146 = vpack.c.b16 %v3109, %v3108
        %v3147 = vpack.c.b16 %v3111, %v3110
        %v3148 = vpack.c.b16 %v3113, %v3112
        %v3149 = vpack.c.b16 %v3115, %v3114
        %v3150 = vpack.c.b16 %v3117, %v3116
        %v3151 = vpack.c.b16 %v3119, %v3118
        %3184 = vmatprep.subr.bf16.mxu0 0
        %3185 = vmatpush1.bf16.msra.mxu0 %v3120
        %3186 = vmatprep.subr.bf16.mxu0 0
        %3187 = vmatpush1.bf16.msra.mxu0 %v3121
        %3188 = vmatprep.subr.bf16.mxu0 0
        %3189 = vmatpush1.bf16.msra.mxu0 %v3122
        %3190 = vmatprep.subr.bf16.mxu0 0
        %3191 = vmatpush1.bf16.msra.mxu0 %v3123
        %3192 = vmatprep.subr.bf16.mxu0 0
        %3193 = vmatpush1.bf16.msra.mxu0 %v3124
        %3194 = vmatprep.subr.bf16.mxu0 0
        %3195 = vmatpush1.bf16.msra.mxu0 %v3125
        %3196 = vmatprep.subr.bf16.mxu0 0
        %3197 = vmatpush1.bf16.msra.mxu0 %v3126
        %3198 = vmatprep.subr.bf16.mxu0 0
        %3199 = vmatpush1.bf16.msra.mxu0 %v3127
        %3200 = vmatprep.subr.bf16.mxu0 0
        %3201 = vmatpush1.bf16.msra.mxu0 %v3128
        %3202 = vmatprep.subr.bf16.mxu0 0
        %3203 = vmatpush1.bf16.msra.mxu0 %v3129
        %3204 = vmatprep.subr.bf16.mxu0 0
        %3205 = vmatpush1.bf16.msra.mxu0 %v3130
        %3206 = vmatprep.subr.bf16.mxu0 0
        %3207 = vmatpush1.bf16.msra.mxu0 %v3131
        %3208 = vmatprep.subr.bf16.mxu0 0
        %3209 = vmatpush1.bf16.msra.mxu0 %v3132
        %3210 = vmatprep.subr.bf16.mxu0 0
        %3211 = vmatpush1.bf16.msra.mxu0 %v3133
        %3212 = vmatprep.subr.bf16.mxu0 0
        %3213 = vmatpush1.bf16.msra.mxu0 %v3134
        %3214 = vmatprep.subr.bf16.mxu0 0
        %3215 = vmatpush1.bf16.msra.mxu0 %v3135
        %3216 = vmatprep.mubr.bf16.mxu0 %v2925
        %3217 = vmatmul.mubr.bf16.gmra.mrb[0].mxu0 %v2924
        %v3218 = vpop.f32.mrb[0].mxu0
        %v3219 = vadd.f32 0.0, %v3218
        %v3220 = vpop.f32.mrb[0].mxu0
        %v3221 = vpop.f32.mrb[0].mxu0
        %v3222 = vadd.f32 0.0, %v3221
        %v3223 = vpop.f32.mrb[0].mxu0
        %3224 = vdwg.mxu0
        %3225 = vmatprep.subr.bf16.mxu0 0
        %3226 = vmatpush1.bf16.msra.mxu0 %v3136
        %3227 = vmatprep.subr.bf16.mxu0 0
        %3228 = vmatpush1.bf16.msra.mxu0 %v3137
        %3229 = vmatprep.subr.bf16.mxu0 0
        %3230 = vmatpush1.bf16.msra.mxu0 %v3138
        %3231 = vmatprep.subr.bf16.mxu0 0
        %3232 = vmatpush1.bf16.msra.mxu0 %v3139
        %3233 = vmatprep.subr.bf16.mxu0 0
        %3234 = vmatpush1.bf16.msra.mxu0 %v3140
        %3235 = vmatprep.subr.bf16.mxu0 0
        %3236 = vmatpush1.bf16.msra.mxu0 %v3141
        %3237 = vmatprep.subr.bf16.mxu0 0
        %3238 = vmatpush1.bf16.msra.mxu0 %v3142
        %3239 = vmatprep.subr.bf16.mxu0 0
        %3240 = vmatpush1.bf16.msra.mxu0 %v3143
        %3241 = vmatprep.subr.bf16.mxu0 0
        %3242 = vmatpush1.bf16.msra.mxu0 %v3144
        %3243 = vmatprep.subr.bf16.mxu0 0
        %3244 = vmatpush1.bf16.msra.mxu0 %v3145
        %3245 = vmatprep.subr.bf16.mxu0 0
        %3246 = vmatpush1.bf16.msra.mxu0 %v3146
        %3247 = vmatprep.subr.bf16.mxu0 0
        %3248 = vmatpush1.bf16.msra.mxu0 %v3147
        %3249 = vmatprep.subr.bf16.mxu0 0
        %3250 = vmatpush1.bf16.msra.mxu0 %v3148
        %3251 = vmatprep.subr.bf16.mxu0 0
        %3252 = vmatpush1.bf16.msra.mxu0 %v3149
        %3253 = vmatprep.subr.bf16.mxu0 0
        %3254 = vmatpush1.bf16.msra.mxu0 %v3150
        %3255 = vmatprep.subr.bf16.mxu0 0
        %3256 = vmatpush1.bf16.msra.mxu0 %v3151
        %3257 = vmatprep.mubr.bf16.mxu0 %v2927
        %3258 = vmatmul.mubr.bf16.gmra.mrb[0].mxu0 %v2926
        %v3259 = vpop.f32.mrb[0].mxu0
        %v3260 = vadd.f32 %v3219, %v3259
        %v3261 = vpop.f32.mrb[0].mxu0
        %v3262 = vpop.f32.mrb[0].mxu0
        %v3263 = vadd.f32 %v3222, %v3262
        %v3264 = vpop.f32.mrb[0].mxu0
        %3265 = vdwg.mxu0
        %v3266 = vadd.f32 %v2758, %v3260
        %v3267 = vadd.f32 %v2759, %v3263
        %v3268 = vlaneseq
        %v3269 = vshrl.u32 %v3268, 7
        %v3270 = vsub.s32 2, %v3269
        %v3271 = vrot.slane %v371, %v3270
        %v3272 = vadd.f32 %v3266, %v3271
        %v3273 = vadd.f32 %v3267, %v3271
        %v3274 = vadd.f32 %v1234, %v3272
        %v3275 = vadd.f32 %v1235, %v3273
        %v3276 = vsel %vm393, %v3274, 0.0
        %3277 = vadd.xlane.f32.xlu0 %v3276
        %v3278 = vpop.xlane.xlu0 %3277
        %v3279 = vsel %vm393, %v3275, 0.0
        %3280 = vadd.xlane.f32.xlu0 %v3279
        %v3281 = vpop.xlane.xlu0 %3280
        %v3282 = vmul.f32 %v3278, %v1203
        %v3283 = vmul.f32 %v3281, %v1203
        %v3284 = vsub.f32 %v3274, %v3282
        %v3285 = vsub.f32 %v3275, %v3283
        %v3286 = vmul.f32 %v3284, %v3284
        %v3287 = vmul.f32 %v3285, %v3285
        %v3288 = vsel %vm393, %v3286, 0.0
        %3289 = vadd.xlane.f32.xlu0 %v3288
        %v3290 = vpop.xlane.xlu0 %3289
        %v3291 = vsel %vm393, %v3287, 0.0
        %3292 = vadd.xlane.f32.xlu0 %v3291
        %v3293 = vpop.xlane.xlu0 %3292
        %v3294 = vmul.f32 %v3290, %v1203
        %v3295 = vmul.f32 %v3293, %v1203
        %v3296 = vadd.f32 %v3294, 1e-05
        %v3297 = vadd.f32 %v3295, 1e-05
        %v3298 = vrsqrt.pop %v3296
        %v3299 = vrsqrt.pop %v3297
        %v3300 = vmul.f32 %v3284, %v3298
        %v3301 = vmul.f32 %v3285, %v3299
        %v3302 = vlaneseq
        %v3303 = vshrl.u32 %v3302, 7
        %v3304 = vsub.s32 5, %v3303
        %v3305 = vrot.slane %v371, %v3304
        %v3306 = vmul.f32 %v3300, %v3305
        %v3307 = vmul.f32 %v3301, %v3305
        %v3308 = vlaneseq
        %v3309 = vshrl.u32 %v3308, 7
        %v3310 = vsub.s32 6, %v3309
        %v3311 = vrot.slane %v371, %v3310
        %v3312 = vadd.f32 %v3306, %v3311
        %v3313 = vadd.f32 %v3307, %v3311
        %3314 = vst.msk [vmem:[#allocation2] sm:$0xff] %vm393, %v3312
        %3315 = vst.msk [vmem:[#allocation2 + $0x8] sm:$0xff] %vm393, %v3313
        %p3316 = scmp.eq.s32.totalorder %s19, 1
        // Predicated region
        $region53: #{transformer_encoder_pallas.1} parent=47 // pred_check
          %p3317 = pneg %p3316
        $region54: #{transformer_encoder_pallas.1} parent=47 // pred_check_branch
          %3319 = sbr.rel (%p3317) target = $region56
        $region55: #{transformer_encoder_pallas.1} parent=47 // pred_region
          %3320 = vst.msk [vmem:[#allocation3] sm:$0xff] %vm393, %v3312
          %3321 = vst.msk [vmem:[#allocation3 + $0x8] sm:$0xff] %vm393, %v3313
        $region56: #{transformer_encoder_pallas.1} parent=47 // pred_fallthru
          _
        // Predicated region
        $region57: #{transformer_encoder_pallas.1} parent=47 // pred_check
          %p3322 = pneg %p209
        $region58: #{transformer_encoder_pallas.1} parent=47 // pred_check_branch
          %3324 = sbr.rel (%p3322) target = $region60
        $region59: #{transformer_encoder_pallas.1} parent=47 // pred_region
          %s3326 = ssub.s32 256, 256
          %3327 = vsyncadd [#allocation4], %s3326
          %s3328 = sshll.u32 [#allocation3], 4
          %s3329 = int_to_ptr.vmem [resolvable:$true] %s3328
          %3334 = dma.vmem_to_hbm [thread:$0]  %s3329, 256, %s7, [#allocation4], 128, 128, 8
        $region60: #{transformer_encoder_pallas.1} parent=47 // pred_fallthru
          _
        // Predicated region
        $region61: #{transformer_encoder_pallas.1} parent=47 // pred_check
          %p3335 = pneg %p209
        $region62: #{transformer_encoder_pallas.1} parent=47 // pred_check_branch
          %3337 = sbr.rel (%p3335) target = $region64
        $region63: #{transformer_encoder_pallas.1} parent=47 // pred_region
          %3338 = dma.done [#allocation4], 256
        $region64: #{transformer_encoder_pallas.1} parent=47 // pred_fallthru
          _
      $region48: #{transformer_encoder_pallas.1} parent=5 // pred_fallthru
        _
      %p3339 = scmp.le.s32.totalorder 2, %s14
      // Predicated region
      $region65: #{transformer_encoder_pallas.1} parent=5 // pred_check
        %p3340 = pneg %p3339
      $region66: #{transformer_encoder_pallas.1} parent=5 // pred_check_branch
        %3342 = sbr.rel (%p3340) target = $region68
      $region67: #{transformer_encoder_pallas.1} parent=5 // pred_region
        %s3343 = ssub.s32 %s14, 2
      $region68: #{transformer_encoder_pallas.1} parent=5 // pred_fallthru
        _
    $region6: #{transformer_encoder_pallas.1} parent=1 // loop_footer
      %s18 = sadd.s32 1, %s14
    $region7: #{transformer_encoder_pallas.1} parent=1 // loop_footer_branch
      %13 = sbr.rel target = $region3
    $region8: #{transformer_encoder_pallas.1} parent=1 // loop_exit
      _
    %3344 = vsyncpa [#allocation4], 1
    %s3345 = scalar_lea.sflag [#allocation4], 1
    %3346 = vsyncpa %s3345, 1

</llo_original>
